<compile_context>
chip_gen: v5e
topology: v5e:2x2
jax: 0.10.0
libtpu: 0.0.40
codegen_flags: <defaults>
</compile_context>

<pallas_src>
import functools

import jax
import jax.numpy as jnp
from jax.experimental import pallas as pl
from jax.experimental.pallas import tpu as pltpu


def _round_up(n, m):
    return ((n + m - 1) // m) * m


def _sigmoid_tanh(z):
    # sigmoid(z) == 0.5 * (tanh(0.5 * z) + 1): a single EUP tanh instead of
    # exp + divide.  Mathematically identical; keeps the divide off the VALU.
    return 0.5 * (jnp.tanh(0.5 * z) + 1.0)


def _mlp_kernel(nr_layers, x_ref, *refs):
    """Fused MLP: nr_layers x (pre-normalized linear + SiLU), then linear + sigmoid.

    refs layout: [w0, b0, w1, b1, ..., w_{L-1}, b_{L-1}, wf, bf, out_ref]
    Weights arrive already weight-normalized, padded and cast to the compute
    dtype; biases are f32; all matmuls accumulate in f32 on the MXU.
    """
    out_ref = refs[-1]
    wf_ref, bf_ref = refs[-3], refs[-2]

    h = x_ref[...]                                    # compute dtype (bf16 / f32)
    for i in range(nr_layers):
        w = refs[2 * i][...]                          # (d_in_pad, d_out_pad)
        b = refs[2 * i + 1][...]                      # (1, d_out_pad), f32
        z = jnp.dot(h, w, preferred_element_type=jnp.float32) + b
        # SiLU epilogue; cast back to the compute dtype here so the inter-layer
        # temporaries stay half-width in the bf16 path.
        h = (z * _sigmoid_tanh(z)).astype(w.dtype)

    z = jnp.dot(h, wf_ref[...], preferred_element_type=jnp.float32) + bf_ref[...]
    out_ref[...] = _sigmoid_tanh(z).astype(out_ref.dtype)


def prepare_params(params, *, nr_layers, compute_dtype=jnp.bfloat16):
    """Weight-norm + 128-padding + dtype cast, hoisted out of the per-call path.

    For frozen weights call this once (optionally under jit) and pass the result
    to fully_connected_arch_core(..., prepared=...).
    """
    def _pad2(a, rows, cols):
        return jnp.pad(a, ((0, rows - a.shape[0]), (0, cols - a.shape[1])))

    in_features = params["ws"][0].shape[0]
    out_features = params["wf"].shape[1]
    in_pad = _round_up(in_features, 128)
    out_pad = _round_up(out_features, 128)

    ws, bs = [], []
    d_in_pad = in_pad
    for i in range(nr_layers):
        w = params["ws"][i].astype(jnp.float32)       # (d_in, d_out)
        g = params["gs"][i].astype(jnp.float32)       # (1, d_out)
        b = params["bs"][i].astype(jnp.float32)       # (1, d_out)
        norm = jnp.sqrt(jnp.sum(w * w, axis=0, keepdims=True))
        w_n = w * (g / norm)                          # torch weight_norm formula
        d_out_pad = _round_up(w.shape[1], 128)
        ws.append(_pad2(w_n, d_in_pad, d_out_pad).astype(compute_dtype))
        bs.append(_pad2(b, 1, d_out_pad))             # bias stays f32
        d_in_pad = d_out_pad

    wf = _pad2(params["wf"].astype(jnp.float32), d_in_pad, out_pad).astype(compute_dtype)
    bf = _pad2(params["bf"].astype(jnp.float32), 1, out_pad)
    return dict(ws=ws, bs=bs, wf=wf, bf=bf,
                in_features=in_features, out_features=out_features,
                in_pad=in_pad, out_pad=out_pad,
                compute_dtype=jnp.dtype(compute_dtype))


def _num_tensorcores_per_chip():
    try:
        kind = jax.devices()[0].device_kind.lower()
    except Exception:
        return 1
    return 2 if "v7" in kind else 1                   # v7x: 2 TCs per chip


def _const_spec(arr, single_buffer):
    """BlockSpec for a grid-invariant operand (same block for every grid step)."""
    idx = lambda i, _n=arr.ndim: (0,) * _n
    if single_buffer and hasattr(pl, "Buffered"):
        try:
            # Fetched once, never re-fetched -> single VMEM buffer is enough.
            return pl.BlockSpec(arr.shape, idx, pipeline_mode=pl.Buffered(1))
        except TypeError:
            pass
    return pl.BlockSpec(arr.shape, idx)


def fully_connected_arch_core(x, params=None, *, nr_layers,
                              compute_dtype=jnp.bfloat16, tile_b=None,
                              prepared=None):
    """params: dict with 'ws' (list of (d_in, d_out)), 'gs', 'bs', 'wf', 'bf'."""
    if prepared is None:
        prepared = prepare_params(params, nr_layers=nr_layers,
                                  compute_dtype=compute_dtype)
    compute_dtype = prepared["compute_dtype"]

    orig_dtype = x.dtype
    B, in_features = x.shape
    assert in_features == prepared["in_features"]
    in_pad, out_pad = prepared["in_pad"], prepared["out_pad"]
    out_features = prepared["out_features"]

    # ---------------------------------------------------------------------
    # Batch tiling: one big tile on single-TC chips (v5e/v6e); >=2 balanced
    # tiles on v7x so the "parallel" axis shards across its 2 TensorCores.
    # tile_b is a multiple of the packed-sublane count for the compute dtype.
    # ---------------------------------------------------------------------
    itemsize = jnp.dtype(compute_dtype).itemsize
    sub = {4: 8, 2: 16, 1: 32}.get(itemsize, 8)
    n_tc = _num_tensorcores_per_chip()
    if tile_b is None:
        max_tile = 1024
        if n_tc >= 2 and B > sub:
            tile_b = min(max_tile, _round_up(pl.cdiv(B, n_tc), sub))
        else:
            tile_b = min(max_tile, _round_up(B, sub))
    tile_b = max(_round_up(int(tile_b), sub), sub)
    B_pad = _round_up(B, tile_b)

    x_pad = jnp.pad(x.astype(compute_dtype),
                    ((0, B_pad - B), (0, in_pad - in_features)))

    param_args = []
    for li in range(nr_layers):
        param_args += [prepared["ws"][li], prepared["bs"][li]]
    param_args += [prepared["wf"], prepared["bf"]]

    # ---------------------------------------------------------------------
    # VMEM budget: params (pipeline-buffered) + x/out tiles + the unrolled
    # per-layer f32 temporaries, with margin.  Ceiling leaves headroom under
    # the physical VMEM (128 MiB on v5e/v6e, 64 MiB per TC on v7x).
    # ---------------------------------------------------------------------
    param_bytes = sum(int(a.size) * a.dtype.itemsize for a in param_args)
    max_w = max([in_pad, out_pad] + [w.shape[1] for w in prepared["ws"]])
    act_bytes = (nr_layers + 3) * tile_b * max_w * 4          # f32 z/h temporaries
    io_bytes = 2 * tile_b * (in_pad + max_w + out_pad) * 4    # x/out tiles (padded est.)
    need = 2 * param_bytes + act_bytes + io_bytes + (4 << 20)
    try:
        phys = int(pltpu.get_tpu_info().vmem_capacity_bytes)
    except Exception:
        phys = 64 << 20
    ceiling = max(32 << 20, phys - (16 << 20))
    vmem_limit = int(min(max(need, 32 << 20), ceiling))

    kernel = functools.partial(_mlp_kernel, nr_layers)

    def _call(single_buffer_params):
        in_specs = [pl.BlockSpec((tile_b, in_pad), lambda i: (i, 0))]
        in_specs += [_const_spec(a, single_buffer_params) for a in param_args]
        return pl.pallas_call(
            kernel,
            out_shape=jax.ShapeDtypeStruct((B_pad, out_pad), orig_dtype),
            grid_spec=pltpu.PrefetchScalarGridSpec(
                num_scalar_prefetch=0,
                grid=(B_pad // tile_b,),
                in_specs=in_specs,
                out_specs=pl.BlockSpec((tile_b, out_pad), lambda i: (i, 0)),
            ),
            compiler_params=pltpu.CompilerParams(
                dimension_semantics=("parallel",),
                vmem_limit_bytes=vmem_limit,
            ),
        )(x_pad, *param_args)

    try:
        out = _call(True)
    except Exception:
        # Fallback if pipeline_mode=pl.Buffered(1) is not supported by this
        # jax build: default double-buffered params (still correct, more VMEM).
        out = _call(False)

    return out[:B, :out_features].astype(orig_dtype)


def init_params(key, in_features, layer_size, out_features, nr_layers):
    """Deterministic synthetic parameters (shapes match the PyTorch module)."""
    ws, gs, bs = [], [], []
    d_in = in_features
    keys = jax.random.split(key, 2 * nr_layers + 2)
    for i in range(nr_layers):
        # Stored pre-transposed: (d_in, layer_size)
        w = jax.random.normal(keys[2 * i], (d_in, layer_size), jnp.float32) * 0.1
        b = jax.random.normal(keys[2 * i + 1], (1, layer_size), jnp.float32) * 0.01
        g = jnp.ones((1, layer_size), jnp.float32)   # weight_norm gain
        ws.append(w); gs.append(g); bs.append(b)
        d_in = layer_size
    wf = jax.random.normal(keys[-2], (layer_size, out_features), jnp.float32) * 0.1
    bf = jax.random.normal(keys[-1], (1, out_features), jnp.float32) * 0.01
    return {"ws": ws, "gs": gs, "bs": bs, "wf": wf, "bf": bf}


def reference_forward(x, params, nr_layers):
    h = x.astype(jnp.float32)
    for i in range(nr_layers):
        w, g, b = params["ws"][i], params["gs"][i], params["bs"][i]
        norm = jnp.sqrt(jnp.sum(w * w, axis=0, keepdims=True))
        z = h @ (w * (g / norm)) + b
        h = z * jax.nn.sigmoid(z)
    z = h @ params["wf"] + params["bf"]
    return jax.nn.sigmoid(z)


if __name__ == "__main__":
    # Small shapes consistent with the module (real defaults are 512/512/512/6).
    IN_FEATURES = 32
    LAYER_SIZE = 64
    OUT_FEATURES = 16
    NR_LAYERS = 6
    BATCH = 256

    key = jax.random.PRNGKey(0)
    kx, kp = jax.random.split(key)
    x = jax.random.normal(kx, (BATCH, IN_FEATURES), jnp.float32)
    params = init_params(kp, IN_FEATURES, LAYER_SIZE, OUT_FEATURES, NR_LAYERS)

    ref = reference_forward(x, params, NR_LAYERS)

    # Default bf16 matmul operands (f32 accumulation) — MXU-peak path.
    prepared_bf16 = prepare_params(params, nr_layers=NR_LAYERS,
                                   compute_dtype=jnp.bfloat16)
    out_bf16 = fully_connected_arch_core(x, nr_layers=NR_LAYERS,
                                         prepared=prepared_bf16)
    out_bf16 = jax.block_until_ready(out_bf16)
    assert out_bf16.shape == (BATCH, OUT_FEATURES)
    assert bool(jnp.all(jnp.isfinite(out_bf16)))
    assert jnp.allclose(out_bf16, ref, atol=5e-2), "bf16 path diverged from reference"

    # f32 matmul operands: tight match against the reference.
    prepared_f32 = prepare_params(params, nr_layers=NR_LAYERS,
                                  compute_dtype=jnp.float32)
    out_f32 = fully_connected_arch_core(x, nr_layers=NR_LAYERS,
                                        prepared=prepared_f32)
    out_f32 = jax.block_until_ready(out_f32)
    assert out_f32.shape == (BATCH, OUT_FEATURES)
    assert jnp.allclose(out_f32, ref, atol=1e-4, rtol=1e-4), "f32 mismatch vs reference"

    print("KERNEL_OK")
</pallas_src>

<mosaic_0001>
module attributes {stable_mosaic.version = 11 : i64} {
  func.func @_mlp_kernel(%arg0: i32, %arg1: memref<256x128xbf16, #tpu.memory_space<vmem>>, %arg2: memref<128x128xbf16, #tpu.memory_space<vmem>>, %arg3: memref<1x128xf32, #tpu.memory_space<vmem>>, %arg4: memref<128x128xbf16, #tpu.memory_space<vmem>>, %arg5: memref<1x128xf32, #tpu.memory_space<vmem>>, %arg6: memref<128x128xbf16, #tpu.memory_space<vmem>>, %arg7: memref<1x128xf32, #tpu.memory_space<vmem>>, %arg8: memref<128x128xbf16, #tpu.memory_space<vmem>>, %arg9: memref<1x128xf32, #tpu.memory_space<vmem>>, %arg10: memref<128x128xbf16, #tpu.memory_space<vmem>>, %arg11: memref<1x128xf32, #tpu.memory_space<vmem>>, %arg12: memref<128x128xbf16, #tpu.memory_space<vmem>>, %arg13: memref<1x128xf32, #tpu.memory_space<vmem>>, %arg14: memref<128x128xbf16, #tpu.memory_space<vmem>>, %arg15: memref<1x128xf32, #tpu.memory_space<vmem>>, %arg16: memref<256x128xf32, #tpu.memory_space<vmem>>) attributes {dimension_semantics = [#tpu.dimension_semantics<parallel>], iteration_bounds = array<i64: 1>, scalar_prefetch = 0 : i64, scratch_operands = 0 : i64, tpu.core_type = #tpu.core_type<tc>, window_params = [{transform_indices = @transform_0, window_bounds = array<i64: 256, 128>}, {pipeline_mode = #tpu.pipeline_mode<synchronous>, transform_indices = @transform_1, window_bounds = array<i64: 128, 128>}, {pipeline_mode = #tpu.pipeline_mode<synchronous>, transform_indices = @transform_2, window_bounds = array<i64: 1, 128>}, {pipeline_mode = #tpu.pipeline_mode<synchronous>, transform_indices = @transform_3, window_bounds = array<i64: 128, 128>}, {pipeline_mode = #tpu.pipeline_mode<synchronous>, transform_indices = @transform_4, window_bounds = array<i64: 1, 128>}, {pipeline_mode = #tpu.pipeline_mode<synchronous>, transform_indices = @transform_5, window_bounds = array<i64: 128, 128>}, {pipeline_mode = #tpu.pipeline_mode<synchronous>, transform_indices = @transform_6, window_bounds = array<i64: 1, 128>}, {pipeline_mode = #tpu.pipeline_mode<synchronous>, transform_indices = @transform_7, window_bounds = array<i64: 128, 128>}, {pipeline_mode = #tpu.pipeline_mode<synchronous>, transform_indices = @transform_8, window_bounds = array<i64: 1, 128>}, {pipeline_mode = #tpu.pipeline_mode<synchronous>, transform_indices = @transform_9, window_bounds = array<i64: 128, 128>}, {pipeline_mode = #tpu.pipeline_mode<synchronous>, transform_indices = @transform_10, window_bounds = array<i64: 1, 128>}, {pipeline_mode = #tpu.pipeline_mode<synchronous>, transform_indices = @transform_11, window_bounds = array<i64: 128, 128>}, {pipeline_mode = #tpu.pipeline_mode<synchronous>, transform_indices = @transform_12, window_bounds = array<i64: 1, 128>}, {pipeline_mode = #tpu.pipeline_mode<synchronous>, transform_indices = @transform_13, window_bounds = array<i64: 128, 128>}, {pipeline_mode = #tpu.pipeline_mode<synchronous>, transform_indices = @transform_14, window_bounds = array<i64: 1, 128>}, {transform_indices = @transform_15, window_bounds = array<i64: 256, 128>}]} {
    %c0 = arith.constant 0 : index
    %c0_0 = arith.constant 0 : index
    %0 = vector.load %arg1[%c0, %c0_0] : memref<256x128xbf16, #tpu.memory_space<vmem>>, vector<256x128xbf16>
    %c0_1 = arith.constant 0 : index
    %c0_2 = arith.constant 0 : index
    %1 = vector.load %arg2[%c0_1, %c0_2] : memref<128x128xbf16, #tpu.memory_space<vmem>>, vector<128x128xbf16>
    %c0_3 = arith.constant 0 : index
    %c0_4 = arith.constant 0 : index
    %2 = vector.load %arg3[%c0_3, %c0_4] : memref<1x128xf32, #tpu.memory_space<vmem>>, vector<1x128xf32>
    %cst = arith.constant dense<0.000000e+00> : vector<256x128xf32>
    %3 = tpu.matmul %0, %1, %cst {dimension_numbers = #tpu.dot_dimension_numbers<[1], [0], [0], [1], [0, 0, 1, 1], [], []>} : vector<256x128xbf16>, vector<128x128xbf16>, vector<256x128xf32> -> vector<256x128xf32>
    %4 = vector.broadcast %2 : vector<1x128xf32> to vector<256x128xf32>
    %5 = arith.addf %3, %4 : vector<256x128xf32>
    %cst_5 = arith.constant 5.000000e-01 : f32
    %6 = vector.broadcast %cst_5 : f32 to vector<256x128xf32>
    %7 = arith.mulf %6, %5 : vector<256x128xf32>
    %8 = math.tanh %7 : vector<256x128xf32>
    %cst_6 = arith.constant 1.000000e+00 : f32
    %9 = vector.broadcast %cst_6 : f32 to vector<256x128xf32>
    %10 = arith.addf %8, %9 : vector<256x128xf32>
    %cst_7 = arith.constant 5.000000e-01 : f32
    %11 = vector.broadcast %cst_7 : f32 to vector<256x128xf32>
    %12 = arith.mulf %11, %10 : vector<256x128xf32>
    %13 = arith.mulf %5, %12 : vector<256x128xf32>
    %14 = arith.truncf %13 : vector<256x128xf32> to vector<256x128xbf16>
    %c0_8 = arith.constant 0 : index
    %c0_9 = arith.constant 0 : index
    %15 = vector.load %arg4[%c0_8, %c0_9] : memref<128x128xbf16, #tpu.memory_space<vmem>>, vector<128x128xbf16>
    %c0_10 = arith.constant 0 : index
    %c0_11 = arith.constant 0 : index
    %16 = vector.load %arg5[%c0_10, %c0_11] : memref<1x128xf32, #tpu.memory_space<vmem>>, vector<1x128xf32>
    %cst_12 = arith.constant dense<0.000000e+00> : vector<256x128xf32>
    %17 = tpu.matmul %14, %15, %cst_12 {dimension_numbers = #tpu.dot_dimension_numbers<[1], [0], [0], [1], [0, 0, 1, 1], [], []>} : vector<256x128xbf16>, vector<128x128xbf16>, vector<256x128xf32> -> vector<256x128xf32>
    %18 = vector.broadcast %16 : vector<1x128xf32> to vector<256x128xf32>
    %19 = arith.addf %17, %18 : vector<256x128xf32>
    %cst_13 = arith.constant 5.000000e-01 : f32
    %20 = vector.broadcast %cst_13 : f32 to vector<256x128xf32>
    %21 = arith.mulf %20, %19 : vector<256x128xf32>
    %22 = math.tanh %21 : vector<256x128xf32>
    %cst_14 = arith.constant 1.000000e+00 : f32
    %23 = vector.broadcast %cst_14 : f32 to vector<256x128xf32>
    %24 = arith.addf %22, %23 : vector<256x128xf32>
    %cst_15 = arith.constant 5.000000e-01 : f32
    %25 = vector.broadcast %cst_15 : f32 to vector<256x128xf32>
    %26 = arith.mulf %25, %24 : vector<256x128xf32>
    %27 = arith.mulf %19, %26 : vector<256x128xf32>
    %28 = arith.truncf %27 : vector<256x128xf32> to vector<256x128xbf16>
    %c0_16 = arith.constant 0 : index
    %c0_17 = arith.constant 0 : index
    %29 = vector.load %arg6[%c0_16, %c0_17] : memref<128x128xbf16, #tpu.memory_space<vmem>>, vector<128x128xbf16>
    %c0_18 = arith.constant 0 : index
    %c0_19 = arith.constant 0 : index
    %30 = vector.load %arg7[%c0_18, %c0_19] : memref<1x128xf32, #tpu.memory_space<vmem>>, vector<1x128xf32>
    %cst_20 = arith.constant dense<0.000000e+00> : vector<256x128xf32>
    %31 = tpu.matmul %28, %29, %cst_20 {dimension_numbers = #tpu.dot_dimension_numbers<[1], [0], [0], [1], [0, 0, 1, 1], [], []>} : vector<256x128xbf16>, vector<128x128xbf16>, vector<256x128xf32> -> vector<256x128xf32>
    %32 = vector.broadcast %30 : vector<1x128xf32> to vector<256x128xf32>
    %33 = arith.addf %31, %32 : vector<256x128xf32>
    %cst_21 = arith.constant 5.000000e-01 : f32
    %34 = vector.broadcast %cst_21 : f32 to vector<256x128xf32>
    %35 = arith.mulf %34, %33 : vector<256x128xf32>
    %36 = math.tanh %35 : vector<256x128xf32>
    %cst_22 = arith.constant 1.000000e+00 : f32
    %37 = vector.broadcast %cst_22 : f32 to vector<256x128xf32>
    %38 = arith.addf %36, %37 : vector<256x128xf32>
    %cst_23 = arith.constant 5.000000e-01 : f32
    %39 = vector.broadcast %cst_23 : f32 to vector<256x128xf32>
    %40 = arith.mulf %39, %38 : vector<256x128xf32>
    %41 = arith.mulf %33, %40 : vector<256x128xf32>
    %42 = arith.truncf %41 : vector<256x128xf32> to vector<256x128xbf16>
    %c0_24 = arith.constant 0 : index
    %c0_25 = arith.constant 0 : index
    %43 = vector.load %arg8[%c0_24, %c0_25] : memref<128x128xbf16, #tpu.memory_space<vmem>>, vector<128x128xbf16>
    %c0_26 = arith.constant 0 : index
    %c0_27 = arith.constant 0 : index
    %44 = vector.load %arg9[%c0_26, %c0_27] : memref<1x128xf32, #tpu.memory_space<vmem>>, vector<1x128xf32>
    %cst_28 = arith.constant dense<0.000000e+00> : vector<256x128xf32>
    %45 = tpu.matmul %42, %43, %cst_28 {dimension_numbers = #tpu.dot_dimension_numbers<[1], [0], [0], [1], [0, 0, 1, 1], [], []>} : vector<256x128xbf16>, vector<128x128xbf16>, vector<256x128xf32> -> vector<256x128xf32>
    %46 = vector.broadcast %44 : vector<1x128xf32> to vector<256x128xf32>
    %47 = arith.addf %45, %46 : vector<256x128xf32>
    %cst_29 = arith.constant 5.000000e-01 : f32
    %48 = vector.broadcast %cst_29 : f32 to vector<256x128xf32>
    %49 = arith.mulf %48, %47 : vector<256x128xf32>
    %50 = math.tanh %49 : vector<256x128xf32>
    %cst_30 = arith.constant 1.000000e+00 : f32
    %51 = vector.broadcast %cst_30 : f32 to vector<256x128xf32>
    %52 = arith.addf %50, %51 : vector<256x128xf32>
    %cst_31 = arith.constant 5.000000e-01 : f32
    %53 = vector.broadcast %cst_31 : f32 to vector<256x128xf32>
    %54 = arith.mulf %53, %52 : vector<256x128xf32>
    %55 = arith.mulf %47, %54 : vector<256x128xf32>
    %56 = arith.truncf %55 : vector<256x128xf32> to vector<256x128xbf16>
    %c0_32 = arith.constant 0 : index
    %c0_33 = arith.constant 0 : index
    %57 = vector.load %arg10[%c0_32, %c0_33] : memref<128x128xbf16, #tpu.memory_space<vmem>>, vector<128x128xbf16>
    %c0_34 = arith.constant 0 : index
    %c0_35 = arith.constant 0 : index
    %58 = vector.load %arg11[%c0_34, %c0_35] : memref<1x128xf32, #tpu.memory_space<vmem>>, vector<1x128xf32>
    %cst_36 = arith.constant dense<0.000000e+00> : vector<256x128xf32>
    %59 = tpu.matmul %56, %57, %cst_36 {dimension_numbers = #tpu.dot_dimension_numbers<[1], [0], [0], [1], [0, 0, 1, 1], [], []>} : vector<256x128xbf16>, vector<128x128xbf16>, vector<256x128xf32> -> vector<256x128xf32>
    %60 = vector.broadcast %58 : vector<1x128xf32> to vector<256x128xf32>
    %61 = arith.addf %59, %60 : vector<256x128xf32>
    %cst_37 = arith.constant 5.000000e-01 : f32
    %62 = vector.broadcast %cst_37 : f32 to vector<256x128xf32>
    %63 = arith.mulf %62, %61 : vector<256x128xf32>
    %64 = math.tanh %63 : vector<256x128xf32>
    %cst_38 = arith.constant 1.000000e+00 : f32
    %65 = vector.broadcast %cst_38 : f32 to vector<256x128xf32>
    %66 = arith.addf %64, %65 : vector<256x128xf32>
    %cst_39 = arith.constant 5.000000e-01 : f32
    %67 = vector.broadcast %cst_39 : f32 to vector<256x128xf32>
    %68 = arith.mulf %67, %66 : vector<256x128xf32>
    %69 = arith.mulf %61, %68 : vector<256x128xf32>
    %70 = arith.truncf %69 : vector<256x128xf32> to vector<256x128xbf16>
    %c0_40 = arith.constant 0 : index
    %c0_41 = arith.constant 0 : index
    %71 = vector.load %arg12[%c0_40, %c0_41] : memref<128x128xbf16, #tpu.memory_space<vmem>>, vector<128x128xbf16>
    %c0_42 = arith.constant 0 : index
    %c0_43 = arith.constant 0 : index
    %72 = vector.load %arg13[%c0_42, %c0_43] : memref<1x128xf32, #tpu.memory_space<vmem>>, vector<1x128xf32>
    %cst_44 = arith.constant dense<0.000000e+00> : vector<256x128xf32>
    %73 = tpu.matmul %70, %71, %cst_44 {dimension_numbers = #tpu.dot_dimension_numbers<[1], [0], [0], [1], [0, 0, 1, 1], [], []>} : vector<256x128xbf16>, vector<128x128xbf16>, vector<256x128xf32> -> vector<256x128xf32>
    %74 = vector.broadcast %72 : vector<1x128xf32> to vector<256x128xf32>
    %75 = arith.addf %73, %74 : vector<256x128xf32>
    %cst_45 = arith.constant 5.000000e-01 : f32
    %76 = vector.broadcast %cst_45 : f32 to vector<256x128xf32>
    %77 = arith.mulf %76, %75 : vector<256x128xf32>
    %78 = math.tanh %77 : vector<256x128xf32>
    %cst_46 = arith.constant 1.000000e+00 : f32
    %79 = vector.broadcast %cst_46 : f32 to vector<256x128xf32>
    %80 = arith.addf %78, %79 : vector<256x128xf32>
    %cst_47 = arith.constant 5.000000e-01 : f32
    %81 = vector.broadcast %cst_47 : f32 to vector<256x128xf32>
    %82 = arith.mulf %81, %80 : vector<256x128xf32>
    %83 = arith.mulf %75, %82 : vector<256x128xf32>
    %84 = arith.truncf %83 : vector<256x128xf32> to vector<256x128xbf16>
    %c0_48 = arith.constant 0 : index
    %c0_49 = arith.constant 0 : index
    %85 = vector.load %arg14[%c0_48, %c0_49] : memref<128x128xbf16, #tpu.memory_space<vmem>>, vector<128x128xbf16>
    %cst_50 = arith.constant dense<0.000000e+00> : vector<256x128xf32>
    %86 = tpu.matmul %84, %85, %cst_50 {dimension_numbers = #tpu.dot_dimension_numbers<[1], [0], [0], [1], [0, 0, 1, 1], [], []>} : vector<256x128xbf16>, vector<128x128xbf16>, vector<256x128xf32> -> vector<256x128xf32>
    %c0_51 = arith.constant 0 : index
    %c0_52 = arith.constant 0 : index
    %87 = vector.load %arg15[%c0_51, %c0_52] : memref<1x128xf32, #tpu.memory_space<vmem>>, vector<1x128xf32>
    %88 = vector.broadcast %87 : vector<1x128xf32> to vector<256x128xf32>
    %89 = arith.addf %86, %88 : vector<256x128xf32>
    %cst_53 = arith.constant 5.000000e-01 : f32
    %90 = vector.broadcast %cst_53 : f32 to vector<256x128xf32>
    %91 = arith.mulf %90, %89 : vector<256x128xf32>
    %92 = math.tanh %91 : vector<256x128xf32>
    %cst_54 = arith.constant 1.000000e+00 : f32
    %93 = vector.broadcast %cst_54 : f32 to vector<256x128xf32>
    %94 = arith.addf %92, %93 : vector<256x128xf32>
    %cst_55 = arith.constant 5.000000e-01 : f32
    %95 = vector.broadcast %cst_55 : f32 to vector<256x128xf32>
    %96 = arith.mulf %95, %94 : vector<256x128xf32>
    %c0_56 = arith.constant 0 : index
    %c0_57 = arith.constant 0 : index
    %97 = vector.load %arg16[%c0_56, %c0_57] : memref<256x128xf32, #tpu.memory_space<vmem>>, vector<256x128xf32>
    tpu.vector_store %arg16[%c0_56, %c0_57], %96 {strides = array<i32>} : memref<256x128xf32, #tpu.memory_space<vmem>>, vector<256x128xf32>,
    return
  }
  func.func @transform_0(%arg0: i32) -> (i32, i32) {
    %c0_i32 = arith.constant 0 : i32
    %c0_i32_0 = arith.constant 0 : i32
    return %arg0, %c0_i32 : i32, i32
  }
  func.func @transform_1(%arg0: i32) -> (i32, i32) {
    %c0_i32 = arith.constant 0 : i32
    %c0_i32_0 = arith.constant 0 : i32
    %c0_i32_1 = arith.constant 0 : i32
    return %c0_i32, %c0_i32_0 : i32, i32
  }
  func.func @transform_2(%arg0: i32) -> (i32, i32) {
    %c0_i32 = arith.constant 0 : i32
    %c0_i32_0 = arith.constant 0 : i32
    %c0_i32_1 = arith.constant 0 : i32
    return %c0_i32, %c0_i32_0 : i32, i32
  }
  func.func @transform_3(%arg0: i32) -> (i32, i32) {
    %c0_i32 = arith.constant 0 : i32
    %c0_i32_0 = arith.constant 0 : i32
    %c0_i32_1 = arith.constant 0 : i32
    return %c0_i32, %c0_i32_0 : i32, i32
  }
  func.func @transform_4(%arg0: i32) -> (i32, i32) {
    %c0_i32 = arith.constant 0 : i32
    %c0_i32_0 = arith.constant 0 : i32
    %c0_i32_1 = arith.constant 0 : i32
    return %c0_i32, %c0_i32_0 : i32, i32
  }
  func.func @transform_5(%arg0: i32) -> (i32, i32) {
    %c0_i32 = arith.constant 0 : i32
    %c0_i32_0 = arith.constant 0 : i32
    %c0_i32_1 = arith.constant 0 : i32
    return %c0_i32, %c0_i32_0 : i32, i32
  }
  func.func @transform_6(%arg0: i32) -> (i32, i32) {
    %c0_i32 = arith.constant 0 : i32
    %c0_i32_0 = arith.constant 0 : i32
    %c0_i32_1 = arith.constant 0 : i32
    return %c0_i32, %c0_i32_0 : i32, i32
  }
  func.func @transform_7(%arg0: i32) -> (i32, i32) {
    %c0_i32 = arith.constant 0 : i32
    %c0_i32_0 = arith.constant 0 : i32
    %c0_i32_1 = arith.constant 0 : i32
    return %c0_i32, %c0_i32_0 : i32, i32
  }
  func.func @transform_8(%arg0: i32) -> (i32, i32) {
    %c0_i32 = arith.constant 0 : i32
    %c0_i32_0 = arith.constant 0 : i32
    %c0_i32_1 = arith.constant 0 : i32
    return %c0_i32, %c0_i32_0 : i32, i32
  }
  func.func @transform_9(%arg0: i32) -> (i32, i32) {
    %c0_i32 = arith.constant 0 : i32
    %c0_i32_0 = arith.constant 0 : i32
    %c0_i32_1 = arith.constant 0 : i32
    return %c0_i32, %c0_i32_0 : i32, i32
  }
  func.func @transform_10(%arg0: i32) -> (i32, i32) {
    %c0_i32 = arith.constant 0 : i32
    %c0_i32_0 = arith.constant 0 : i32
    %c0_i32_1 = arith.constant 0 : i32
    return %c0_i32, %c0_i32_0 : i32, i32
  }
  func.func @transform_11(%arg0: i32) -> (i32, i32) {
    %c0_i32 = arith.constant 0 : i32
    %c0_i32_0 = arith.constant 0 : i32
    %c0_i32_1 = arith.constant 0 : i32
    return %c0_i32, %c0_i32_0 : i32, i32
  }
  func.func @transform_12(%arg0: i32) -> (i32, i32) {
    %c0_i32 = arith.constant 0 : i32
    %c0_i32_0 = arith.constant 0 : i32
    %c0_i32_1 = arith.constant 0 : i32
    return %c0_i32, %c0_i32_0 : i32, i32
  }
  func.func @transform_13(%arg0: i32) -> (i32, i32) {
    %c0_i32 = arith.constant 0 : i32
    %c0_i32_0 = arith.constant 0 : i32
    %c0_i32_1 = arith.constant 0 : i32
    return %c0_i32, %c0_i32_0 : i32, i32
  }
  func.func @transform_14(%arg0: i32) -> (i32, i32) {
    %c0_i32 = arith.constant 0 : i32
    %c0_i32_0 = arith.constant 0 : i32
    %c0_i32_1 = arith.constant 0 : i32
    return %c0_i32, %c0_i32_0 : i32, i32
  }
  func.func @transform_15(%arg0: i32) -> (i32, i32) {
    %c0_i32 = arith.constant 0 : i32
    %c0_i32_0 = arith.constant 0 : i32
    return %arg0, %c0_i32 : i32, i32
  }
}

module attributes {stable_mosaic.version = 11 : i64} {
  func.func @_mlp_kernel(%arg0: i32, %arg1: memref<256x128xbf16, #tpu.memory_space<vmem>>, %arg2: memref<128x128xbf16, #tpu.memory_space<vmem>>, %arg3: memref<1x128xf32, #tpu.memory_space<vmem>>, %arg4: memref<128x128xbf16, #tpu.memory_space<vmem>>, %arg5: memref<1x128xf32, #tpu.memory_space<vmem>>, %arg6: memref<128x128xbf16, #tpu.memory_space<vmem>>, %arg7: memref<1x128xf32, #tpu.memory_space<vmem>>, %arg8: memref<128x128xbf16, #tpu.memory_space<vmem>>, %arg9: memref<1x128xf32, #tpu.memory_space<vmem>>, %arg10: memref<128x128xbf16, #tpu.memory_space<vmem>>, %arg11: memref<1x128xf32, #tpu.memory_space<vmem>>, %arg12: memref<128x128xbf16, #tpu.memory_space<vmem>>, %arg13: memref<1x128xf32, #tpu.memory_space<vmem>>, %arg14: memref<128x128xbf16, #tpu.memory_space<vmem>>, %arg15: memref<1x128xf32, #tpu.memory_space<vmem>>, %arg16: memref<256x128xf32, #tpu.memory_space<vmem>>) attributes {dimension_semantics = [#tpu.dimension_semantics<parallel>], iteration_bounds = array<i64: 1>, scalar_prefetch = 0 : i64, scratch_operands = 0 : i64, tpu.core_type = #tpu.core_type<tc>, window_params = [{transform_indices = @transform_0, window_bounds = array<i64: 256, 128>}, {pipeline_mode = #tpu.pipeline_mode<synchronous>, transform_indices = @transform_1, window_bounds = array<i64: 128, 128>}, {pipeline_mode = #tpu.pipeline_mode<synchronous>, transform_indices = @transform_2, window_bounds = array<i64: 1, 128>}, {pipeline_mode = #tpu.pipeline_mode<synchronous>, transform_indices = @transform_3, window_bounds = array<i64: 128, 128>}, {pipeline_mode = #tpu.pipeline_mode<synchronous>, transform_indices = @transform_4, window_bounds = array<i64: 1, 128>}, {pipeline_mode = #tpu.pipeline_mode<synchronous>, transform_indices = @transform_5, window_bounds = array<i64: 128, 128>}, {pipeline_mode = #tpu.pipeline_mode<synchronous>, transform_indices = @transform_6, window_bounds = array<i64: 1, 128>}, {pipeline_mode = #tpu.pipeline_mode<synchronous>, transform_indices = @transform_7, window_bounds = array<i64: 128, 128>}, {pipeline_mode = #tpu.pipeline_mode<synchronous>, transform_indices = @transform_8, window_bounds = array<i64: 1, 128>}, {pipeline_mode = #tpu.pipeline_mode<synchronous>, transform_indices = @transform_9, window_bounds = array<i64: 128, 128>}, {pipeline_mode = #tpu.pipeline_mode<synchronous>, transform_indices = @transform_10, window_bounds = array<i64: 1, 128>}, {pipeline_mode = #tpu.pipeline_mode<synchronous>, transform_indices = @transform_11, window_bounds = array<i64: 128, 128>}, {pipeline_mode = #tpu.pipeline_mode<synchronous>, transform_indices = @transform_12, window_bounds = array<i64: 1, 128>}, {pipeline_mode = #tpu.pipeline_mode<synchronous>, transform_indices = @transform_13, window_bounds = array<i64: 128, 128>}, {pipeline_mode = #tpu.pipeline_mode<synchronous>, transform_indices = @transform_14, window_bounds = array<i64: 1, 128>}, {transform_indices = @transform_15, window_bounds = array<i64: 256, 128>}]} {
    %c0 = arith.constant 0 : index
    %c0_0 = arith.constant 0 : index
    %0 = vector.load %arg1[%c0, %c0_0] : memref<256x128xbf16, #tpu.memory_space<vmem>>, vector<256x128xbf16>
    %c0_1 = arith.constant 0 : index
    %c0_2 = arith.constant 0 : index
    %1 = vector.load %arg2[%c0_1, %c0_2] : memref<128x128xbf16, #tpu.memory_space<vmem>>, vector<128x128xbf16>
    %c0_3 = arith.constant 0 : index
    %c0_4 = arith.constant 0 : index
    %2 = vector.load %arg3[%c0_3, %c0_4] : memref<1x128xf32, #tpu.memory_space<vmem>>, vector<1x128xf32>
    %cst = arith.constant dense<0.000000e+00> : vector<256x128xf32>
    %3 = tpu.matmul %0, %1, %cst {dimension_numbers = #tpu.dot_dimension_numbers<[1], [0], [0], [1], [0, 0, 1, 1], [], []>} : vector<256x128xbf16>, vector<128x128xbf16>, vector<256x128xf32> -> vector<256x128xf32>
    %4 = vector.broadcast %2 : vector<1x128xf32> to vector<256x128xf32>
    %5 = arith.addf %3, %4 : vector<256x128xf32>
    %cst_5 = arith.constant 5.000000e-01 : f32
    %6 = vector.broadcast %cst_5 : f32 to vector<256x128xf32>
    %7 = arith.mulf %6, %5 : vector<256x128xf32>
    %8 = math.tanh %7 : vector<256x128xf32>
    %cst_6 = arith.constant 1.000000e+00 : f32
    %9 = vector.broadcast %cst_6 : f32 to vector<256x128xf32>
    %10 = arith.addf %8, %9 : vector<256x128xf32>
    %cst_7 = arith.constant 5.000000e-01 : f32
    %11 = vector.broadcast %cst_7 : f32 to vector<256x128xf32>
    %12 = arith.mulf %11, %10 : vector<256x128xf32>
    %13 = arith.mulf %5, %12 : vector<256x128xf32>
    %14 = arith.truncf %13 : vector<256x128xf32> to vector<256x128xbf16>
    %c0_8 = arith.constant 0 : index
    %c0_9 = arith.constant 0 : index
    %15 = vector.load %arg4[%c0_8, %c0_9] : memref<128x128xbf16, #tpu.memory_space<vmem>>, vector<128x128xbf16>
    %c0_10 = arith.constant 0 : index
    %c0_11 = arith.constant 0 : index
    %16 = vector.load %arg5[%c0_10, %c0_11] : memref<1x128xf32, #tpu.memory_space<vmem>>, vector<1x128xf32>
    %cst_12 = arith.constant dense<0.000000e+00> : vector<256x128xf32>
    %17 = tpu.matmul %14, %15, %cst_12 {dimension_numbers = #tpu.dot_dimension_numbers<[1], [0], [0], [1], [0, 0, 1, 1], [], []>} : vector<256x128xbf16>, vector<128x128xbf16>, vector<256x128xf32> -> vector<256x128xf32>
    %18 = vector.broadcast %16 : vector<1x128xf32> to vector<256x128xf32>
    %19 = arith.addf %17, %18 : vector<256x128xf32>
    %cst_13 = arith.constant 5.000000e-01 : f32
    %20 = vector.broadcast %cst_13 : f32 to vector<256x128xf32>
    %21 = arith.mulf %20, %19 : vector<256x128xf32>
    %22 = math.tanh %21 : vector<256x128xf32>
    %cst_14 = arith.constant 1.000000e+00 : f32
    %23 = vector.broadcast %cst_14 : f32 to vector<256x128xf32>
    %24 = arith.addf %22, %23 : vector<256x128xf32>
    %cst_15 = arith.constant 5.000000e-01 : f32
    %25 = vector.broadcast %cst_15 : f32 to vector<256x128xf32>
    %26 = arith.mulf %25, %24 : vector<256x128xf32>
    %27 = arith.mulf %19, %26 : vector<256x128xf32>
    %28 = arith.truncf %27 : vector<256x128xf32> to vector<256x128xbf16>
    %c0_16 = arith.constant 0 : index
    %c0_17 = arith.constant 0 : index
    %29 = vector.load %arg6[%c0_16, %c0_17] : memref<128x128xbf16, #tpu.memory_space<vmem>>, vector<128x128xbf16>
    %c0_18 = arith.constant 0 : index
    %c0_19 = arith.constant 0 : index
    %30 = vector.load %arg7[%c0_18, %c0_19] : memref<1x128xf32, #tpu.memory_space<vmem>>, vector<1x128xf32>
    %cst_20 = arith.constant dense<0.000000e+00> : vector<256x128xf32>
    %31 = tpu.matmul %28, %29, %cst_20 {dimension_numbers = #tpu.dot_dimension_numbers<[1], [0], [0], [1], [0, 0, 1, 1], [], []>} : vector<256x128xbf16>, vector<128x128xbf16>, vector<256x128xf32> -> vector<256x128xf32>
    %32 = vector.broadcast %30 : vector<1x128xf32> to vector<256x128xf32>
    %33 = arith.addf %31, %32 : vector<256x128xf32>
    %cst_21 = arith.constant 5.000000e-01 : f32
    %34 = vector.broadcast %cst_21 : f32 to vector<256x128xf32>
    %35 = arith.mulf %34, %33 : vector<256x128xf32>
    %36 = math.tanh %35 : vector<256x128xf32>
    %cst_22 = arith.constant 1.000000e+00 : f32
    %37 = vector.broadcast %cst_22 : f32 to vector<256x128xf32>
    %38 = arith.addf %36, %37 : vector<256x128xf32>
    %cst_23 = arith.constant 5.000000e-01 : f32
    %39 = vector.broadcast %cst_23 : f32 to vector<256x128xf32>
    %40 = arith.mulf %39, %38 : vector<256x128xf32>
    %41 = arith.mulf %33, %40 : vector<256x128xf32>
    %42 = arith.truncf %41 : vector<256x128xf32> to vector<256x128xbf16>
    %c0_24 = arith.constant 0 : index
    %c0_25 = arith.constant 0 : index
    %43 = vector.load %arg8[%c0_24, %c0_25] : memref<128x128xbf16, #tpu.memory_space<vmem>>, vector<128x128xbf16>
    %c0_26 = arith.constant 0 : index
    %c0_27 = arith.constant 0 : index
    %44 = vector.load %arg9[%c0_26, %c0_27] : memref<1x128xf32, #tpu.memory_space<vmem>>, vector<1x128xf32>
    %cst_28 = arith.constant dense<0.000000e+00> : vector<256x128xf32>
    %45 = tpu.matmul %42, %43, %cst_28 {dimension_numbers = #tpu.dot_dimension_numbers<[1], [0], [0], [1], [0, 0, 1, 1], [], []>} : vector<256x128xbf16>, vector<128x128xbf16>, vector<256x128xf32> -> vector<256x128xf32>
    %46 = vector.broadcast %44 : vector<1x128xf32> to vector<256x128xf32>
    %47 = arith.addf %45, %46 : vector<256x128xf32>
    %cst_29 = arith.constant 5.000000e-01 : f32
    %48 = vector.broadcast %cst_29 : f32 to vector<256x128xf32>
    %49 = arith.mulf %48, %47 : vector<256x128xf32>
    %50 = math.tanh %49 : vector<256x128xf32>
    %cst_30 = arith.constant 1.000000e+00 : f32
    %51 = vector.broadcast %cst_30 : f32 to vector<256x128xf32>
    %52 = arith.addf %50, %51 : vector<256x128xf32>
    %cst_31 = arith.constant 5.000000e-01 : f32
    %53 = vector.broadcast %cst_31 : f32 to vector<256x128xf32>
    %54 = arith.mulf %53, %52 : vector<256x128xf32>
    %55 = arith.mulf %47, %54 : vector<256x128xf32>
    %56 = arith.truncf %55 : vector<256x128xf32> to vector<256x128xbf16>
    %c0_32 = arith.constant 0 : index
    %c0_33 = arith.constant 0 : index
    %57 = vector.load %arg10[%c0_32, %c0_33] : memref<128x128xbf16, #tpu.memory_space<vmem>>, vector<128x128xbf16>
    %c0_34 = arith.constant 0 : index
    %c0_35 = arith.constant 0 : index
    %58 = vector.load %arg11[%c0_34, %c0_35] : memref<1x128xf32, #tpu.memory_space<vmem>>, vector<1x128xf32>
    %cst_36 = arith.constant dense<0.000000e+00> : vector<256x128xf32>
    %59 = tpu.matmul %56, %57, %cst_36 {dimension_numbers = #tpu.dot_dimension_numbers<[1], [0], [0], [1], [0, 0, 1, 1], [], []>} : vector<256x128xbf16>, vector<128x128xbf16>, vector<256x128xf32> -> vector<256x128xf32>
    %60 = vector.broadcast %58 : vector<1x128xf32> to vector<256x128xf32>
    %61 = arith.addf %59, %60 : vector<256x128xf32>
    %cst_37 = arith.constant 5.000000e-01 : f32
    %62 = vector.broadcast %cst_37 : f32 to vector<256x128xf32>
    %63 = arith.mulf %62, %61 : vector<256x128xf32>
    %64 = math.tanh %63 : vector<256x128xf32>
    %cst_38 = arith.constant 1.000000e+00 : f32
    %65 = vector.broadcast %cst_38 : f32 to vector<256x128xf32>
    %66 = arith.addf %64, %65 : vector<256x128xf32>
    %cst_39 = arith.constant 5.000000e-01 : f32
    %67 = vector.broadcast %cst_39 : f32 to vector<256x128xf32>
    %68 = arith.mulf %67, %66 : vector<256x128xf32>
    %69 = arith.mulf %61, %68 : vector<256x128xf32>
    %70 = arith.truncf %69 : vector<256x128xf32> to vector<256x128xbf16>
    %c0_40 = arith.constant 0 : index
    %c0_41 = arith.constant 0 : index
    %71 = vector.load %arg12[%c0_40, %c0_41] : memref<128x128xbf16, #tpu.memory_space<vmem>>, vector<128x128xbf16>
    %c0_42 = arith.constant 0 : index
    %c0_43 = arith.constant 0 : index
    %72 = vector.load %arg13[%c0_42, %c0_43] : memref<1x128xf32, #tpu.memory_space<vmem>>, vector<1x128xf32>
    %cst_44 = arith.constant dense<0.000000e+00> : vector<256x128xf32>
    %73 = tpu.matmul %70, %71, %cst_44 {dimension_numbers = #tpu.dot_dimension_numbers<[1], [0], [0], [1], [0, 0, 1, 1], [], []>} : vector<256x128xbf16>, vector<128x128xbf16>, vector<256x128xf32> -> vector<256x128xf32>
    %74 = vector.broadcast %72 : vector<1x128xf32> to vector<256x128xf32>
    %75 = arith.addf %73, %74 : vector<256x128xf32>
    %cst_45 = arith.constant 5.000000e-01 : f32
    %76 = vector.broadcast %cst_45 : f32 to vector<256x128xf32>
    %77 = arith.mulf %76, %75 : vector<256x128xf32>
    %78 = math.tanh %77 : vector<256x128xf32>
    %cst_46 = arith.constant 1.000000e+00 : f32
    %79 = vector.broadcast %cst_46 : f32 to vector<256x128xf32>
    %80 = arith.addf %78, %79 : vector<256x128xf32>
    %cst_47 = arith.constant 5.000000e-01 : f32
    %81 = vector.broadcast %cst_47 : f32 to vector<256x128xf32>
    %82 = arith.mulf %81, %80 : vector<256x128xf32>
    %83 = arith.mulf %75, %82 : vector<256x128xf32>
    %84 = arith.truncf %83 : vector<256x128xf32> to vector<256x128xbf16>
    %c0_48 = arith.constant 0 : index
    %c0_49 = arith.constant 0 : index
    %85 = vector.load %arg14[%c0_48, %c0_49] : memref<128x128xbf16, #tpu.memory_space<vmem>>, vector<128x128xbf16>
    %cst_50 = arith.constant dense<0.000000e+00> : vector<256x128xf32>
    %86 = tpu.matmul %84, %85, %cst_50 {dimension_numbers = #tpu.dot_dimension_numbers<[1], [0], [0], [1], [0, 0, 1, 1], [], []>} : vector<256x128xbf16>, vector<128x128xbf16>, vector<256x128xf32> -> vector<256x128xf32>
    %c0_51 = arith.constant 0 : index
    %c0_52 = arith.constant 0 : index
    %87 = vector.load %arg15[%c0_51, %c0_52] : memref<1x128xf32, #tpu.memory_space<vmem>>, vector<1x128xf32>
    %88 = vector.broadcast %87 : vector<1x128xf32> to vector<256x128xf32>
    %89 = arith.addf %86, %88 : vector<256x128xf32>
    %cst_53 = arith.constant 5.000000e-01 : f32
    %90 = vector.broadcast %cst_53 : f32 to vector<256x128xf32>
    %91 = arith.mulf %90, %89 : vector<256x128xf32>
    %92 = math.tanh %91 : vector<256x128xf32>
    %cst_54 = arith.constant 1.000000e+00 : f32
    %93 = vector.broadcast %cst_54 : f32 to vector<256x128xf32>
    %94 = arith.addf %92, %93 : vector<256x128xf32>
    %cst_55 = arith.constant 5.000000e-01 : f32
    %95 = vector.broadcast %cst_55 : f32 to vector<256x128xf32>
    %96 = arith.mulf %95, %94 : vector<256x128xf32>
    %c0_56 = arith.constant 0 : index
    %c0_57 = arith.constant 0 : index
    %97 = vector.load %arg16[%c0_56, %c0_57] : memref<256x128xf32, #tpu.memory_space<vmem>>, vector<256x128xf32>
    tpu.vector_store %arg16[%c0_56, %c0_57], %96 {strides = array<i32>} : memref<256x128xf32, #tpu.memory_space<vmem>>, vector<256x128xf32>,
    return
  }
  func.func @transform_0(%arg0: i32) -> (i32, i32) {
    %c0_i32 = arith.constant 0 : i32
    %c0_i32_0 = arith.constant 0 : i32
    return %arg0, %c0_i32 : i32, i32
  }
  func.func @transform_1(%arg0: i32) -> (i32, i32) {
    %c0_i32 = arith.constant 0 : i32
    %c0_i32_0 = arith.constant 0 : i32
    %c0_i32_1 = arith.constant 0 : i32
    return %c0_i32, %c0_i32_0 : i32, i32
  }
  func.func @transform_2(%arg0: i32) -> (i32, i32) {
    %c0_i32 = arith.constant 0 : i32
    %c0_i32_0 = arith.constant 0 : i32
    %c0_i32_1 = arith.constant 0 : i32
    return %c0_i32, %c0_i32_0 : i32, i32
  }
  func.func @transform_3(%arg0: i32) -> (i32, i32) {
    %c0_i32 = arith.constant 0 : i32
    %c0_i32_0 = arith.constant 0 : i32
    %c0_i32_1 = arith.constant 0 : i32
    return %c0_i32, %c0_i32_0 : i32, i32
  }
  func.func @transform_4(%arg0: i32) -> (i32, i32) {
    %c0_i32 = arith.constant 0 : i32
    %c0_i32_0 = arith.constant 0 : i32
    %c0_i32_1 = arith.constant 0 : i32
    return %c0_i32, %c0_i32_0 : i32, i32
  }
  func.func @transform_5(%arg0: i32) -> (i32, i32) {
    %c0_i32 = arith.constant 0 : i32
    %c0_i32_0 = arith.constant 0 : i32
    %c0_i32_1 = arith.constant 0 : i32
    return %c0_i32, %c0_i32_0 : i32, i32
  }
  func.func @transform_6(%arg0: i32) -> (i32, i32) {
    %c0_i32 = arith.constant 0 : i32
    %c0_i32_0 = arith.constant 0 : i32
    %c0_i32_1 = arith.constant 0 : i32
    return %c0_i32, %c0_i32_0 : i32, i32
  }
  func.func @transform_7(%arg0: i32) -> (i32, i32) {
    %c0_i32 = arith.constant 0 : i32
    %c0_i32_0 = arith.constant 0 : i32
    %c0_i32_1 = arith.constant 0 : i32
    return %c0_i32, %c0_i32_0 : i32, i32
  }
  func.func @transform_8(%arg0: i32) -> (i32, i32) {
    %c0_i32 = arith.constant 0 : i32
    %c0_i32_0 = arith.constant 0 : i32
    %c0_i32_1 = arith.constant 0 : i32
    return %c0_i32, %c0_i32_0 : i32, i32
  }
  func.func @transform_9(%arg0: i32) -> (i32, i32) {
    %c0_i32 = arith.constant 0 : i32
    %c0_i32_0 = arith.constant 0 : i32
    %c0_i32_1 = arith.constant 0 : i32
    return %c0_i32, %c0_i32_0 : i32, i32
  }
  func.func @transform_10(%arg0: i32) -> (i32, i32) {
    %c0_i32 = arith.constant 0 : i32
    %c0_i32_0 = arith.constant 0 : i32
    %c0_i32_1 = arith.constant 0 : i32
    return %c0_i32, %c0_i32_0 : i32, i32
  }
  func.func @transform_11(%arg0: i32) -> (i32, i32) {
    %c0_i32 = arith.constant 0 : i32
    %c0_i32_0 = arith.constant 0 : i32
    %c0_i32_1 = arith.constant 0 : i32
    return %c0_i32, %c0_i32_0 : i32, i32
  }
  func.func @transform_12(%arg0: i32) -> (i32, i32) {
    %c0_i32 = arith.constant 0 : i32
    %c0_i32_0 = arith.constant 0 : i32
    %c0_i32_1 = arith.constant 0 : i32
    return %c0_i32, %c0_i32_0 : i32, i32
  }
  func.func @transform_13(%arg0: i32) -> (i32, i32) {
    %c0_i32 = arith.constant 0 : i32
    %c0_i32_0 = arith.constant 0 : i32
    %c0_i32_1 = arith.constant 0 : i32
    return %c0_i32, %c0_i32_0 : i32, i32
  }
  func.func @transform_14(%arg0: i32) -> (i32, i32) {
    %c0_i32 = arith.constant 0 : i32
    %c0_i32_0 = arith.constant 0 : i32
    %c0_i32_1 = arith.constant 0 : i32
    return %c0_i32, %c0_i32_0 : i32, i32
  }
  func.func @transform_15(%arg0: i32) -> (i32, i32) {
    %c0_i32 = arith.constant 0 : i32
    %c0_i32_0 = arith.constant 0 : i32
    return %arg0, %c0_i32 : i32, i32
  }
}

</mosaic_0001>

<llo_original>
// kernel: tpu_custom_call.1
$region0: #{tpu_custom_call.1}
  #allocation0 [shape = 'u32[]', space=smem, size = 0x4, offset = 0x4, fixed_abs, tag = 'smem constant byte address 0x4 - core index']
  #allocation1 [shape = 'u32[72,128]{1,0:T(1,128)}', space=vmem, size = 0x9000, scoped, tag = 'internal scratch']
  %s0 = inlined_call_operand.hbm [shape: bf16[256,128], index: 0, kind: input, shape index: {}]
  %s1 = inlined_call_operand.hbm [shape: bf16[128,128], index: 1, kind: input, shape index: {}]
  %s2 = inlined_call_operand.vmem [shape: f32[1,128], index: 2, kind: input, shape index: {}]
  %s3 = inlined_call_operand.hbm [shape: bf16[128,128], index: 3, kind: input, shape index: {}]
  %s4 = inlined_call_operand.vmem [shape: f32[1,128], index: 4, kind: input, shape index: {}]
  %s5 = inlined_call_operand.hbm [shape: bf16[128,128], index: 5, kind: input, shape index: {}]
  %s6 = inlined_call_operand.vmem [shape: f32[1,128], index: 6, kind: input, shape index: {}]
  %s7 = inlined_call_operand.hbm [shape: bf16[128,128], index: 7, kind: input, shape index: {}]
  %s8 = inlined_call_operand.vmem [shape: f32[1,128], index: 8, kind: input, shape index: {}]
  %s9 = inlined_call_operand.hbm [shape: bf16[128,128], index: 9, kind: input, shape index: {}]
  %s10 = inlined_call_operand.vmem [shape: f32[1,128], index: 10, kind: input, shape index: {}]
  %s11 = inlined_call_operand.hbm [shape: bf16[128,128], index: 11, kind: input, shape index: {}]
  %s12 = inlined_call_operand.vmem [shape: f32[1,128], index: 12, kind: input, shape index: {}]
  %s13 = inlined_call_operand.hbm [shape: bf16[128,128], index: 13, kind: input, shape index: {}]
  %s14 = inlined_call_operand.vmem [shape: f32[1,128], index: 14, kind: input, shape index: {}]
  %s15 = inlined_call_operand.hbm [shape: f32[256,128], index: 15, kind: output, shape index: {}]
  %s16 = sld [smem:[#allocation0]]
  $region102: #{tpu_custom_call.1} parent=0
    _
  %s18 = ssub.s32 1, %s16
  %s19 = scalar_select 0, %s18, %s16
  $region1: #{tpu_custom_call.1} parent=0
    #allocation2 [shape = 'u8[65536]{0}', space=vmem, size = 0x10000, scoped, tag = 'input window, operand 0, single buffered']
    #allocation3 [shape = 's32[1]{0}', space=sflag, size = 0x4, scoped, tag = 'scoped memory for tpu_custom_call.1']
    #allocation4 [shape = 's32[1]{0}', space=sflag, size = 0x4, scoped, tag = 'scoped memory for tpu_custom_call.1']
    #allocation5 [shape = 'u8[32768]{0}', space=vmem, size = 0x8000, scoped, tag = 'input window, operand 1, single buffered']
    #allocation6 [shape = 's32[1]{0}', space=sflag, size = 0x4, scoped, tag = 'scoped memory for tpu_custom_call.1']
    #allocation7 [shape = 'u8[32768]{0}', space=vmem, size = 0x8000, scoped, tag = 'input window, operand 3, single buffered']
    #allocation8 [shape = 'u8[32768]{0}', space=vmem, size = 0x8000, scoped, tag = 'input window, operand 5, single buffered']
    #allocation9 [shape = 's32[1]{0}', space=sflag, size = 0x4, scoped, tag = 'scoped memory for tpu_custom_call.1']
    #allocation10 [shape = 'u8[32768]{0}', space=vmem, size = 0x8000, scoped, tag = 'input window, operand 7, single buffered']
    #allocation11 [shape = 'u8[32768]{0}', space=vmem, size = 0x8000, scoped, tag = 'input window, operand 9, single buffered']
    #allocation12 [shape = 's32[1]{0}', space=sflag, size = 0x4, scoped, tag = 'scoped memory for tpu_custom_call.1']
    #allocation13 [shape = 'u8[32768]{0}', space=vmem, size = 0x8000, scoped, tag = 'input window, operand 11, single buffered']
    #allocation14 [shape = 'u8[32768]{0}', space=vmem, size = 0x8000, scoped, tag = 'input window, operand 13, single buffered']
    #allocation15 [shape = 's32[1]{0}', space=sflag, size = 0x4, scoped, tag = 'scoped memory for tpu_custom_call.1']
    #allocation16 [shape = 'u8[131072]{0}', space=vmem, size = 0x20000, scoped, tag = 'output window, operand 0, single buffered']
    %20 = vsyncpa [#allocation3], 0
    %21 = vsyncpa [#allocation6], 0
    %22 = vsyncpa [#allocation9], 0
    %23 = vsyncpa [#allocation12], 0
    %24 = vsyncpa [#allocation15], 0
    %25 = vsyncpa [#allocation4], 0
    // Predicated region
    $region2: #{tpu_custom_call.1} parent=1 // pred_check
      _
    $region3: #{tpu_custom_call.1} parent=1 // pred_check_branch
      %27 = sbr.rel (0) target = $region5
    $region4: #{tpu_custom_call.1} parent=1 // pred_region
      %29 = vsyncadd [#allocation3], 0
      %s30 = sshll.u32 %s0, 4
      %s31 = int_to_ptr.hbm [resolvable:$true] %s30
      %s32 = sshll.u32 [#allocation2], 4
      %s33 = int_to_ptr.vmem [resolvable:$true] %s32
      %38 = dma.hbm_to_vmem [thread:$0]  %s31, 2048, %s33, [#allocation3], 64, 64, 4
    $region5: #{tpu_custom_call.1} parent=1 // pred_fallthru
      _
    // Predicated region
    $region6: #{tpu_custom_call.1} parent=1 // pred_check
      _
    $region7: #{tpu_custom_call.1} parent=1 // pred_check_branch
      %40 = sbr.rel (0) target = $region9
    $region8: #{tpu_custom_call.1} parent=1 // pred_region
      %42 = vsyncadd [#allocation6], 0
      %s43 = sshll.u32 %s1, 4
      %s44 = int_to_ptr.hbm [resolvable:$true] %s43
      %s45 = sshll.u32 [#allocation5], 4
      %s46 = int_to_ptr.vmem [resolvable:$true] %s45
      %51 = dma.hbm_to_vmem [thread:$0]  %s44, 1024, %s46, [#allocation6], 64, 64, 4
    $region9: #{tpu_custom_call.1} parent=1 // pred_fallthru
      _
    // Predicated region
    $region10: #{tpu_custom_call.1} parent=1 // pred_check
      _
    $region11: #{tpu_custom_call.1} parent=1 // pred_check_branch
      %53 = sbr.rel (0) target = $region13
    $region12: #{tpu_custom_call.1} parent=1 // pred_region
      _
    $region13: #{tpu_custom_call.1} parent=1 // pred_fallthru
      _
    // Predicated region
    $region14: #{tpu_custom_call.1} parent=1 // pred_check
      _
    $region15: #{tpu_custom_call.1} parent=1 // pred_check_branch
      %55 = sbr.rel (0) target = $region17
    $region16: #{tpu_custom_call.1} parent=1 // pred_region
      %57 = vsyncadd [#allocation6], 0
      %s58 = sshll.u32 %s3, 4
      %s59 = int_to_ptr.hbm [resolvable:$true] %s58
      %s60 = sshll.u32 [#allocation7], 4
      %s61 = int_to_ptr.vmem [resolvable:$true] %s60
      %66 = dma.hbm_to_vmem [thread:$0]  %s59, 1024, %s61, [#allocation6], 64, 64, 4
    $region17: #{tpu_custom_call.1} parent=1 // pred_fallthru
      _
    // Predicated region
    $region18: #{tpu_custom_call.1} parent=1 // pred_check
      _
    $region19: #{tpu_custom_call.1} parent=1 // pred_check_branch
      %68 = sbr.rel (0) target = $region21
    $region20: #{tpu_custom_call.1} parent=1 // pred_region
      _
    $region21: #{tpu_custom_call.1} parent=1 // pred_fallthru
      _
    // Predicated region
    $region22: #{tpu_custom_call.1} parent=1 // pred_check
      _
    $region23: #{tpu_custom_call.1} parent=1 // pred_check_branch
      %70 = sbr.rel (0) target = $region25
    $region24: #{tpu_custom_call.1} parent=1 // pred_region
      %72 = vsyncadd [#allocation9], 0
      %s73 = sshll.u32 %s5, 4
      %s74 = int_to_ptr.hbm [resolvable:$true] %s73
      %s75 = sshll.u32 [#allocation8], 4
      %s76 = int_to_ptr.vmem [resolvable:$true] %s75
      %81 = dma.hbm_to_vmem [thread:$0]  %s74, 1024, %s76, [#allocation9], 64, 64, 4
    $region25: #{tpu_custom_call.1} parent=1 // pred_fallthru
      _
    // Predicated region
    $region26: #{tpu_custom_call.1} parent=1 // pred_check
      _
    $region27: #{tpu_custom_call.1} parent=1 // pred_check_branch
      %83 = sbr.rel (0) target = $region29
    $region28: #{tpu_custom_call.1} parent=1 // pred_region
      _
    $region29: #{tpu_custom_call.1} parent=1 // pred_fallthru
      _
    // Predicated region
    $region30: #{tpu_custom_call.1} parent=1 // pred_check
      _
    $region31: #{tpu_custom_call.1} parent=1 // pred_check_branch
      %85 = sbr.rel (0) target = $region33
    $region32: #{tpu_custom_call.1} parent=1 // pred_region
      %87 = vsyncadd [#allocation9], 0
      %s88 = sshll.u32 %s7, 4
      %s89 = int_to_ptr.hbm [resolvable:$true] %s88
      %s90 = sshll.u32 [#allocation10], 4
      %s91 = int_to_ptr.vmem [resolvable:$true] %s90
      %96 = dma.hbm_to_vmem [thread:$0]  %s89, 1024, %s91, [#allocation9], 64, 64, 4
    $region33: #{tpu_custom_call.1} parent=1 // pred_fallthru
      _
    // Predicated region
    $region34: #{tpu_custom_call.1} parent=1 // pred_check
      _
    $region35: #{tpu_custom_call.1} parent=1 // pred_check_branch
      %98 = sbr.rel (0) target = $region37
    $region36: #{tpu_custom_call.1} parent=1 // pred_region
      _
    $region37: #{tpu_custom_call.1} parent=1 // pred_fallthru
      _
    // Predicated region
    $region38: #{tpu_custom_call.1} parent=1 // pred_check
      _
    $region39: #{tpu_custom_call.1} parent=1 // pred_check_branch
      %100 = sbr.rel (0) target = $region41
    $region40: #{tpu_custom_call.1} parent=1 // pred_region
      %102 = vsyncadd [#allocation12], 0
      %s103 = sshll.u32 %s9, 4
      %s104 = int_to_ptr.hbm [resolvable:$true] %s103
      %s105 = sshll.u32 [#allocation11], 4
      %s106 = int_to_ptr.vmem [resolvable:$true] %s105
      %111 = dma.hbm_to_vmem [thread:$0]  %s104, 1024, %s106, [#allocation12], 64, 64, 4
    $region41: #{tpu_custom_call.1} parent=1 // pred_fallthru
      _
    // Predicated region
    $region42: #{tpu_custom_call.1} parent=1 // pred_check
      _
    $region43: #{tpu_custom_call.1} parent=1 // pred_check_branch
      %113 = sbr.rel (0) target = $region45
    $region44: #{tpu_custom_call.1} parent=1 // pred_region
      _
    $region45: #{tpu_custom_call.1} parent=1 // pred_fallthru
      _
    // Predicated region
    $region46: #{tpu_custom_call.1} parent=1 // pred_check
      _
    $region47: #{tpu_custom_call.1} parent=1 // pred_check_branch
      %115 = sbr.rel (0) target = $region49
    $region48: #{tpu_custom_call.1} parent=1 // pred_region
      %117 = vsyncadd [#allocation12], 0
      %s118 = sshll.u32 %s11, 4
      %s119 = int_to_ptr.hbm [resolvable:$true] %s118
      %s120 = sshll.u32 [#allocation13], 4
      %s121 = int_to_ptr.vmem [resolvable:$true] %s120
      %126 = dma.hbm_to_vmem [thread:$0]  %s119, 1024, %s121, [#allocation12], 64, 64, 4
    $region49: #{tpu_custom_call.1} parent=1 // pred_fallthru
      _
    // Predicated region
    $region50: #{tpu_custom_call.1} parent=1 // pred_check
      _
    $region51: #{tpu_custom_call.1} parent=1 // pred_check_branch
      %128 = sbr.rel (0) target = $region53
    $region52: #{tpu_custom_call.1} parent=1 // pred_region
      _
    $region53: #{tpu_custom_call.1} parent=1 // pred_fallthru
      _
    // Predicated region
    $region54: #{tpu_custom_call.1} parent=1 // pred_check
      _
    $region55: #{tpu_custom_call.1} parent=1 // pred_check_branch
      %130 = sbr.rel (0) target = $region57
    $region56: #{tpu_custom_call.1} parent=1 // pred_region
      %132 = vsyncadd [#allocation15], 0
      %s133 = sshll.u32 %s13, 4
      %s134 = int_to_ptr.hbm [resolvable:$true] %s133
      %s135 = sshll.u32 [#allocation14], 4
      %s136 = int_to_ptr.vmem [resolvable:$true] %s135
      %141 = dma.hbm_to_vmem [thread:$0]  %s134, 1024, %s136, [#allocation15], 64, 64, 4
    $region57: #{tpu_custom_call.1} parent=1 // pred_fallthru
      _
    // Predicated region
    $region58: #{tpu_custom_call.1} parent=1 // pred_check
      _
    $region59: #{tpu_custom_call.1} parent=1 // pred_check_branch
      %143 = sbr.rel (0) target = $region61
    $region60: #{tpu_custom_call.1} parent=1 // pred_region
      _
    $region61: #{tpu_custom_call.1} parent=1 // pred_fallthru
      _
    // Predicated region
    $region62: #{tpu_custom_call.1} parent=1 // pred_check
      _
    $region63: #{tpu_custom_call.1} parent=1 // pred_check_branch
      %145 = sbr.rel (0) target = $region65
    $region64: #{tpu_custom_call.1} parent=1 // pred_region
      %147 = dma.done [#allocation3], 2048
    $region65: #{tpu_custom_call.1} parent=1 // pred_fallthru
      _
    // Predicated region
    $region66: #{tpu_custom_call.1} parent=1 // pred_check
      _
    $region67: #{tpu_custom_call.1} parent=1 // pred_check_branch
      %149 = sbr.rel (0) target = $region69
    $region68: #{tpu_custom_call.1} parent=1 // pred_region
      %151 = dma.done [#allocation6], 1024
    $region69: #{tpu_custom_call.1} parent=1 // pred_fallthru
      _
    // Predicated region
    $region70: #{tpu_custom_call.1} parent=1 // pred_check
      _
    $region71: #{tpu_custom_call.1} parent=1 // pred_check_branch
      %153 = sbr.rel (0) target = $region73
    $region72: #{tpu_custom_call.1} parent=1 // pred_region
      %155 = dma.done [#allocation6], 1024
    $region73: #{tpu_custom_call.1} parent=1 // pred_fallthru
      _
    // Predicated region
    $region74: #{tpu_custom_call.1} parent=1 // pred_check
      _
    $region75: #{tpu_custom_call.1} parent=1 // pred_check_branch
      %157 = sbr.rel (0) target = $region77
    $region76: #{tpu_custom_call.1} parent=1 // pred_region
      %159 = dma.done [#allocation9], 1024
    $region77: #{tpu_custom_call.1} parent=1 // pred_fallthru
      _
    // Predicated region
    $region78: #{tpu_custom_call.1} parent=1 // pred_check
      _
    $region79: #{tpu_custom_call.1} parent=1 // pred_check_branch
      %161 = sbr.rel (0) target = $region81
    $region80: #{tpu_custom_call.1} parent=1 // pred_region
      %163 = dma.done [#allocation9], 1024
    $region81: #{tpu_custom_call.1} parent=1 // pred_fallthru
      _
    // Predicated region
    $region82: #{tpu_custom_call.1} parent=1 // pred_check
      _
    $region83: #{tpu_custom_call.1} parent=1 // pred_check_branch
      %165 = sbr.rel (0) target = $region85
    $region84: #{tpu_custom_call.1} parent=1 // pred_region
      %167 = dma.done [#allocation12], 1024
    $region85: #{tpu_custom_call.1} parent=1 // pred_fallthru
      _
    // Predicated region
    $region86: #{tpu_custom_call.1} parent=1 // pred_check
      _
    $region87: #{tpu_custom_call.1} parent=1 // pred_check_branch
      %169 = sbr.rel (0) target = $region89
    $region88: #{tpu_custom_call.1} parent=1 // pred_region
      %171 = dma.done [#allocation12], 1024
    $region89: #{tpu_custom_call.1} parent=1 // pred_fallthru
      _
    // Predicated region
    $region90: #{tpu_custom_call.1} parent=1 // pred_check
      _
    $region91: #{tpu_custom_call.1} parent=1 // pred_check_branch
      %173 = sbr.rel (0) target = $region93
    $region92: #{tpu_custom_call.1} parent=1 // pred_region
      %175 = dma.done [#allocation15], 1024
    $region93: #{tpu_custom_call.1} parent=1 // pred_fallthru
      _
    %v176 = vld [vmem:[#allocation2] sm:$0xf]
    %v177 = vld [vmem:[#allocation2 + $0x4] sm:$0xf]
    %v178 = vld [vmem:[#allocation2 + $0x8] sm:$0xf]
    %v179 = vld [vmem:[#allocation2 + $0xc] sm:$0xf]
    %v180 = vld [vmem:[#allocation2 + $0x10] sm:$0xf]
    %v181 = vld [vmem:[#allocation2 + $0x14] sm:$0xf]
    %v182 = vld [vmem:[#allocation2 + $0x18] sm:$0xf]
    %v183 = vld [vmem:[#allocation2 + $0x1c] sm:$0xf]
    %v184 = vld [vmem:[#allocation2 + $0x20] sm:$0xf]
    %v185 = vld [vmem:[#allocation2 + $0x24] sm:$0xf]
    %v186 = vld [vmem:[#allocation2 + $0x28] sm:$0xf]
    %v187 = vld [vmem:[#allocation2 + $0x2c] sm:$0xf]
    %v188 = vld [vmem:[#allocation2 + $0x30] sm:$0xf]
    %v189 = vld [vmem:[#allocation2 + $0x34] sm:$0xf]
    %v190 = vld [vmem:[#allocation2 + $0x38] sm:$0xf]
    %v191 = vld [vmem:[#allocation2 + $0x3c] sm:$0xf]
    %v192 = vld [vmem:[#allocation2 + $0x40] sm:$0xf]
    %v193 = vld [vmem:[#allocation2 + $0x44] sm:$0xf]
    %v194 = vld [vmem:[#allocation2 + $0x48] sm:$0xf]
    %v195 = vld [vmem:[#allocation2 + $0x4c] sm:$0xf]
    %v196 = vld [vmem:[#allocation2 + $0x50] sm:$0xf]
    %v197 = vld [vmem:[#allocation2 + $0x54] sm:$0xf]
    %v198 = vld [vmem:[#allocation2 + $0x58] sm:$0xf]
    %v199 = vld [vmem:[#allocation2 + $0x5c] sm:$0xf]
    %v200 = vld [vmem:[#allocation2 + $0x60] sm:$0xf]
    %v201 = vld [vmem:[#allocation2 + $0x64] sm:$0xf]
    %v202 = vld [vmem:[#allocation2 + $0x68] sm:$0xf]
    %v203 = vld [vmem:[#allocation2 + $0x6c] sm:$0xf]
    %v204 = vld [vmem:[#allocation2 + $0x70] sm:$0xf]
    %v205 = vld [vmem:[#allocation2 + $0x74] sm:$0xf]
    %v206 = vld [vmem:[#allocation2 + $0x78] sm:$0xf]
    %v207 = vld [vmem:[#allocation2 + $0x7c] sm:$0xf]
    %v208 = vld [vmem:[#allocation5] sm:$0xf]
    %v209 = vld [vmem:[#allocation5 + $0x4] sm:$0xf]
    %v210 = vld [vmem:[#allocation5 + $0x8] sm:$0xf]
    %v211 = vld [vmem:[#allocation5 + $0xc] sm:$0xf]
    %v212 = vld [vmem:[#allocation5 + $0x10] sm:$0xf]
    %v213 = vld [vmem:[#allocation5 + $0x14] sm:$0xf]
    %v214 = vld [vmem:[#allocation5 + $0x18] sm:$0xf]
    %v215 = vld [vmem:[#allocation5 + $0x1c] sm:$0xf]
    %v216 = vld [vmem:[#allocation5 + $0x20] sm:$0xf]
    %v217 = vld [vmem:[#allocation5 + $0x24] sm:$0xf]
    %v218 = vld [vmem:[#allocation5 + $0x28] sm:$0xf]
    %v219 = vld [vmem:[#allocation5 + $0x2c] sm:$0xf]
    %v220 = vld [vmem:[#allocation5 + $0x30] sm:$0xf]
    %v221 = vld [vmem:[#allocation5 + $0x34] sm:$0xf]
    %v222 = vld [vmem:[#allocation5 + $0x38] sm:$0xf]
    %v223 = vld [vmem:[#allocation5 + $0x3c] sm:$0xf]
    %v224 = vld [vmem:[%s2] sm:$0x1]
    %v226 = vperm.slane %v224, 0
    %v260 = vunpack.c.l.b16 %v176
    %v261 = vunpack.c.l.b16 %v177
    %v262 = vunpack.c.l.b16 %v178
    %v263 = vunpack.c.l.b16 %v179
    %v264 = vunpack.c.l.b16 %v180
    %v265 = vunpack.c.l.b16 %v181
    %v266 = vunpack.c.l.b16 %v182
    %v267 = vunpack.c.l.b16 %v183
    %v268 = vunpack.c.l.b16 %v184
    %v269 = vunpack.c.l.b16 %v185
    %v270 = vunpack.c.l.b16 %v186
    %v271 = vunpack.c.l.b16 %v187
    %v272 = vunpack.c.l.b16 %v188
    %v273 = vunpack.c.l.b16 %v189
    %v274 = vunpack.c.l.b16 %v190
    %v275 = vunpack.c.l.b16 %v191
    %v276 = vunpack.c.l.b16 %v192
    %v277 = vunpack.c.l.b16 %v193
    %v278 = vunpack.c.l.b16 %v194
    %v279 = vunpack.c.l.b16 %v195
    %v280 = vunpack.c.l.b16 %v196
    %v281 = vunpack.c.l.b16 %v197
    %v282 = vunpack.c.l.b16 %v198
    %v283 = vunpack.c.l.b16 %v199
    %v284 = vunpack.c.l.b16 %v200
    %v285 = vunpack.c.l.b16 %v201
    %v286 = vunpack.c.l.b16 %v202
    %v287 = vunpack.c.l.b16 %v203
    %v288 = vunpack.c.l.b16 %v204
    %v289 = vunpack.c.l.b16 %v205
    %v290 = vunpack.c.l.b16 %v206
    %v291 = vunpack.c.l.b16 %v207
    %v292 = vpack.c.b16 %v261, %v260
    %v293 = vpack.c.b16 %v263, %v262
    %v294 = vpack.c.b16 %v265, %v264
    %v295 = vpack.c.b16 %v267, %v266
    %v296 = vpack.c.b16 %v269, %v268
    %v297 = vpack.c.b16 %v271, %v270
    %v298 = vpack.c.b16 %v273, %v272
    %v299 = vpack.c.b16 %v275, %v274
    %v300 = vpack.c.b16 %v277, %v276
    %v301 = vpack.c.b16 %v279, %v278
    %v302 = vpack.c.b16 %v281, %v280
    %v303 = vpack.c.b16 %v283, %v282
    %v304 = vpack.c.b16 %v285, %v284
    %v305 = vpack.c.b16 %v287, %v286
    %v306 = vpack.c.b16 %v289, %v288
    %v307 = vpack.c.b16 %v291, %v290
    %v340 = vunpack.c.l.b16 %v208
    %v341 = vunpack.c.l.b16 %v209
    %v342 = vunpack.c.l.b16 %v210
    %v343 = vunpack.c.l.b16 %v211
    %v344 = vunpack.c.l.b16 %v212
    %v345 = vunpack.c.l.b16 %v213
    %v346 = vunpack.c.l.b16 %v214
    %v347 = vunpack.c.l.b16 %v215
    %v348 = vunpack.c.l.b16 %v216
    %v349 = vunpack.c.l.b16 %v217
    %v350 = vunpack.c.l.b16 %v218
    %v351 = vunpack.c.l.b16 %v219
    %v352 = vunpack.c.l.b16 %v220
    %v353 = vunpack.c.l.b16 %v221
    %v354 = vunpack.c.l.b16 %v222
    %v355 = vunpack.c.l.b16 %v223
    %v356 = vpack.c.b16 %v341, %v340
    %v357 = vpack.c.b16 %v343, %v342
    %v358 = vpack.c.b16 %v345, %v344
    %v359 = vpack.c.b16 %v347, %v346
    %v360 = vpack.c.b16 %v349, %v348
    %v361 = vpack.c.b16 %v351, %v350
    %v362 = vpack.c.b16 %v353, %v352
    %v363 = vpack.c.b16 %v355, %v354
    %372 = vmatpush.bf16.msra.mxu0 %v363
    %373 = vmatpush.bf16.msra.mxu0 %v362
    %374 = vmatpush.bf16.msra.mxu0 %v361
    %375 = vmatpush.bf16.msra.mxu0 %v360
    %376 = vmatpush.bf16.msra.mxu0 %v359
    %377 = vmatpush.bf16.msra.mxu0 %v358
    %378 = vmatpush.bf16.msra.mxu0 %v357
    %379 = vmatpush.bf16.msra.mxu0 %v356
    %380 = vmatmul.bf16.gmra.mxu0 %v292
    %v381 = vpop.f32.mrf.mxu0
    %v382 = vadd.f32 %v226, %v381
    %v383 = vpop.f32.mrf.mxu0
    %v384 = vadd.f32 %v226, %v383
    %385 = vmatmul.bf16.gmra.mxu0 %v293
    %v386 = vpop.f32.mrf.mxu0
    %v387 = vadd.f32 %v226, %v386
    %v388 = vpop.f32.mrf.mxu0
    %v389 = vadd.f32 %v226, %v388
    %390 = vmatmul.bf16.gmra.mxu0 %v294
    %v391 = vpop.f32.mrf.mxu0
    %v392 = vadd.f32 %v226, %v391
    %v393 = vpop.f32.mrf.mxu0
    %v394 = vadd.f32 %v226, %v393
    %395 = vmatmul.bf16.gmra.mxu0 %v295
    %v396 = vpop.f32.mrf.mxu0
    %v397 = vadd.f32 %v226, %v396
    %v398 = vpop.f32.mrf.mxu0
    %v399 = vadd.f32 %v226, %v398
    %400 = vmatmul.bf16.gmra.mxu0 %v296
    %v401 = vpop.f32.mrf.mxu0
    %v402 = vadd.f32 %v226, %v401
    %v403 = vpop.f32.mrf.mxu0
    %v404 = vadd.f32 %v226, %v403
    %405 = vmatmul.bf16.gmra.mxu0 %v297
    %v406 = vpop.f32.mrf.mxu0
    %v407 = vadd.f32 %v226, %v406
    %v408 = vpop.f32.mrf.mxu0
    %v409 = vadd.f32 %v226, %v408
    %410 = vmatmul.bf16.gmra.mxu0 %v298
    %v411 = vpop.f32.mrf.mxu0
    %v412 = vadd.f32 %v226, %v411
    %v413 = vpop.f32.mrf.mxu0
    %v414 = vadd.f32 %v226, %v413
    %415 = vmatmul.bf16.gmra.mxu0 %v299
    %v416 = vpop.f32.mrf.mxu0
    %v417 = vadd.f32 %v226, %v416
    %v418 = vpop.f32.mrf.mxu0
    %v419 = vadd.f32 %v226, %v418
    %420 = vmatmul.bf16.gmra.mxu0 %v300
    %v421 = vpop.f32.mrf.mxu0
    %v422 = vadd.f32 %v226, %v421
    %v423 = vpop.f32.mrf.mxu0
    %v424 = vadd.f32 %v226, %v423
    %425 = vmatmul.bf16.gmra.mxu0 %v301
    %v426 = vpop.f32.mrf.mxu0
    %v427 = vadd.f32 %v226, %v426
    %v428 = vpop.f32.mrf.mxu0
    %v429 = vadd.f32 %v226, %v428
    %430 = vmatmul.bf16.gmra.mxu0 %v302
    %v431 = vpop.f32.mrf.mxu0
    %v432 = vadd.f32 %v226, %v431
    %v433 = vpop.f32.mrf.mxu0
    %v434 = vadd.f32 %v226, %v433
    %435 = vmatmul.bf16.gmra.mxu0 %v303
    %v436 = vpop.f32.mrf.mxu0
    %v437 = vadd.f32 %v226, %v436
    %v438 = vpop.f32.mrf.mxu0
    %v439 = vadd.f32 %v226, %v438
    %440 = vmatmul.bf16.gmra.mxu0 %v304
    %v441 = vpop.f32.mrf.mxu0
    %v442 = vadd.f32 %v226, %v441
    %v443 = vpop.f32.mrf.mxu0
    %v444 = vadd.f32 %v226, %v443
    %445 = vmatmul.bf16.gmra.mxu0 %v305
    %v446 = vpop.f32.mrf.mxu0
    %v447 = vadd.f32 %v226, %v446
    %v448 = vpop.f32.mrf.mxu0
    %v449 = vadd.f32 %v226, %v448
    %450 = vmatmul.bf16.gmra.mxu0 %v306
    %v451 = vpop.f32.mrf.mxu0
    %v452 = vadd.f32 %v226, %v451
    %v453 = vpop.f32.mrf.mxu0
    %v454 = vadd.f32 %v226, %v453
    %455 = vmatmul.bf16.gmra.mxu0 %v307
    %v456 = vpop.f32.mrf.mxu0
    %v457 = vadd.f32 %v226, %v456
    %v458 = vpop.f32.mrf.mxu0
    %v459 = vadd.f32 %v226, %v458
    %460 = vdwg.mxu0
    %v461 = vmul.f32 %v382, 0.5
    %v462 = vmul.f32 %v384, 0.5
    %v463 = vmul.f32 %v387, 0.5
    %v464 = vmul.f32 %v389, 0.5
    %v465 = vmul.f32 %v392, 0.5
    %v466 = vmul.f32 %v394, 0.5
    %v467 = vmul.f32 %v397, 0.5
    %v468 = vmul.f32 %v399, 0.5
    %v469 = vmul.f32 %v402, 0.5
    %v470 = vmul.f32 %v404, 0.5
    %v471 = vmul.f32 %v407, 0.5
    %v472 = vmul.f32 %v409, 0.5
    %v473 = vmul.f32 %v412, 0.5
    %v474 = vmul.f32 %v414, 0.5
    %v475 = vmul.f32 %v417, 0.5
    %v476 = vmul.f32 %v419, 0.5
    %v477 = vmul.f32 %v422, 0.5
    %v478 = vmul.f32 %v424, 0.5
    %v479 = vmul.f32 %v427, 0.5
    %v480 = vmul.f32 %v429, 0.5
    %v481 = vmul.f32 %v432, 0.5
    %v482 = vmul.f32 %v434, 0.5
    %v483 = vmul.f32 %v437, 0.5
    %v484 = vmul.f32 %v439, 0.5
    %v485 = vmul.f32 %v442, 0.5
    %v486 = vmul.f32 %v444, 0.5
    %v487 = vmul.f32 %v447, 0.5
    %v488 = vmul.f32 %v449, 0.5
    %v489 = vmul.f32 %v452, 0.5
    %v490 = vmul.f32 %v454, 0.5
    %v491 = vmul.f32 %v457, 0.5
    %v492 = vmul.f32 %v459, 0.5
    %v493 = vtanh.pop %v461
    %v494 = vtanh.pop %v462
    %v495 = vtanh.pop %v463
    %v496 = vtanh.pop %v464
    %v497 = vtanh.pop %v465
    %v498 = vtanh.pop %v466
    %v499 = vtanh.pop %v467
    %v500 = vtanh.pop %v468
    %v501 = vtanh.pop %v469
    %v502 = vtanh.pop %v470
    %v503 = vtanh.pop %v471
    %v504 = vtanh.pop %v472
    %v505 = vtanh.pop %v473
    %v506 = vtanh.pop %v474
    %v507 = vtanh.pop %v475
    %v508 = vtanh.pop %v476
    %v509 = vtanh.pop %v477
    %v510 = vtanh.pop %v478
    %v511 = vtanh.pop %v479
    %v512 = vtanh.pop %v480
    %v513 = vtanh.pop %v481
    %v514 = vtanh.pop %v482
    %v515 = vtanh.pop %v483
    %v516 = vtanh.pop %v484
    %v517 = vtanh.pop %v485
    %v518 = vtanh.pop %v486
    %v519 = vtanh.pop %v487
    %v520 = vtanh.pop %v488
    %v521 = vtanh.pop %v489
    %v522 = vtanh.pop %v490
    %v523 = vtanh.pop %v491
    %v524 = vtanh.pop %v492
    %v525 = vadd.f32 %v493, 1.0
    %v526 = vadd.f32 %v494, 1.0
    %v527 = vadd.f32 %v495, 1.0
    %v528 = vadd.f32 %v496, 1.0
    %v529 = vadd.f32 %v497, 1.0
    %v530 = vadd.f32 %v498, 1.0
    %v531 = vadd.f32 %v499, 1.0
    %v532 = vadd.f32 %v500, 1.0
    %v533 = vadd.f32 %v501, 1.0
    %v534 = vadd.f32 %v502, 1.0
    %v535 = vadd.f32 %v503, 1.0
    %v536 = vadd.f32 %v504, 1.0
    %v537 = vadd.f32 %v505, 1.0
    %v538 = vadd.f32 %v506, 1.0
    %v539 = vadd.f32 %v507, 1.0
    %v540 = vadd.f32 %v508, 1.0
    %v541 = vadd.f32 %v509, 1.0
    %v542 = vadd.f32 %v510, 1.0
    %v543 = vadd.f32 %v511, 1.0
    %v544 = vadd.f32 %v512, 1.0
    %v545 = vadd.f32 %v513, 1.0
    %v546 = vadd.f32 %v514, 1.0
    %v547 = vadd.f32 %v515, 1.0
    %v548 = vadd.f32 %v516, 1.0
    %v549 = vadd.f32 %v517, 1.0
    %v550 = vadd.f32 %v518, 1.0
    %v551 = vadd.f32 %v519, 1.0
    %v552 = vadd.f32 %v520, 1.0
    %v553 = vadd.f32 %v521, 1.0
    %v554 = vadd.f32 %v522, 1.0
    %v555 = vadd.f32 %v523, 1.0
    %v556 = vadd.f32 %v524, 1.0
    %v557 = vmul.f32 %v525, 0.5
    %v558 = vmul.f32 %v526, 0.5
    %v559 = vmul.f32 %v527, 0.5
    %v560 = vmul.f32 %v528, 0.5
    %v561 = vmul.f32 %v529, 0.5
    %v562 = vmul.f32 %v530, 0.5
    %v563 = vmul.f32 %v531, 0.5
    %v564 = vmul.f32 %v532, 0.5
    %v565 = vmul.f32 %v533, 0.5
    %v566 = vmul.f32 %v534, 0.5
    %v567 = vmul.f32 %v535, 0.5
    %v568 = vmul.f32 %v536, 0.5
    %v569 = vmul.f32 %v537, 0.5
    %v570 = vmul.f32 %v538, 0.5
    %v571 = vmul.f32 %v539, 0.5
    %v572 = vmul.f32 %v540, 0.5
    %v573 = vmul.f32 %v541, 0.5
    %v574 = vmul.f32 %v542, 0.5
    %v575 = vmul.f32 %v543, 0.5
    %v576 = vmul.f32 %v544, 0.5
    %v577 = vmul.f32 %v545, 0.5
    %v578 = vmul.f32 %v546, 0.5
    %v579 = vmul.f32 %v547, 0.5
    %v580 = vmul.f32 %v548, 0.5
    %v581 = vmul.f32 %v549, 0.5
    %v582 = vmul.f32 %v550, 0.5
    %v583 = vmul.f32 %v551, 0.5
    %v584 = vmul.f32 %v552, 0.5
    %v585 = vmul.f32 %v553, 0.5
    %v586 = vmul.f32 %v554, 0.5
    %v587 = vmul.f32 %v555, 0.5
    %v588 = vmul.f32 %v556, 0.5
    %v589 = vmul.f32 %v382, %v557
    %v590 = vmul.f32 %v384, %v558
    %v591 = vmul.f32 %v387, %v559
    %v592 = vmul.f32 %v389, %v560
    %v593 = vmul.f32 %v392, %v561
    %v594 = vmul.f32 %v394, %v562
    %v595 = vmul.f32 %v397, %v563
    %v596 = vmul.f32 %v399, %v564
    %v597 = vmul.f32 %v402, %v565
    %v598 = vmul.f32 %v404, %v566
    %v599 = vmul.f32 %v407, %v567
    %v600 = vmul.f32 %v409, %v568
    %v601 = vmul.f32 %v412, %v569
    %v602 = vmul.f32 %v414, %v570
    %v603 = vmul.f32 %v417, %v571
    %v604 = vmul.f32 %v419, %v572
    %v605 = vmul.f32 %v422, %v573
    %v606 = vmul.f32 %v424, %v574
    %v607 = vmul.f32 %v427, %v575
    %v608 = vmul.f32 %v429, %v576
    %v609 = vmul.f32 %v432, %v577
    %v610 = vmul.f32 %v434, %v578
    %v611 = vmul.f32 %v437, %v579
    %v612 = vmul.f32 %v439, %v580
    %v613 = vmul.f32 %v442, %v581
    %v614 = vmul.f32 %v444, %v582
    %v615 = vmul.f32 %v447, %v583
    %v616 = vmul.f32 %v449, %v584
    %v617 = vmul.f32 %v452, %v585
    %v618 = vmul.f32 %v454, %v586
    %v619 = vmul.f32 %v457, %v587
    %v620 = vmul.f32 %v459, %v588
    %v621 = vpack.c.bf16 %v590, %v589
    %v622 = vpack.c.bf16 %v592, %v591
    %v623 = vpack.c.bf16 %v594, %v593
    %v624 = vpack.c.bf16 %v596, %v595
    %v625 = vpack.c.bf16 %v598, %v597
    %v626 = vpack.c.bf16 %v600, %v599
    %v627 = vpack.c.bf16 %v602, %v601
    %v628 = vpack.c.bf16 %v604, %v603
    %v629 = vpack.c.bf16 %v606, %v605
    %v630 = vpack.c.bf16 %v608, %v607
    %v631 = vpack.c.bf16 %v610, %v609
    %v632 = vpack.c.bf16 %v612, %v611
    %v633 = vpack.c.bf16 %v614, %v613
    %v634 = vpack.c.bf16 %v616, %v615
    %v635 = vpack.c.bf16 %v618, %v617
    %v636 = vpack.c.bf16 %v620, %v619
    %v637 = vld [vmem:[#allocation7] sm:$0xf]
    %v638 = vld [vmem:[#allocation7 + $0x4] sm:$0xf]
    %v639 = vld [vmem:[#allocation7 + $0x8] sm:$0xf]
    %v640 = vld [vmem:[#allocation7 + $0xc] sm:$0xf]
    %v641 = vld [vmem:[#allocation7 + $0x10] sm:$0xf]
    %v642 = vld [vmem:[#allocation7 + $0x14] sm:$0xf]
    %v643 = vld [vmem:[#allocation7 + $0x18] sm:$0xf]
    %v644 = vld [vmem:[#allocation7 + $0x1c] sm:$0xf]
    %v645 = vld [vmem:[#allocation7 + $0x20] sm:$0xf]
    %v646 = vld [vmem:[#allocation7 + $0x24] sm:$0xf]
    %v647 = vld [vmem:[#allocation7 + $0x28] sm:$0xf]
    %v648 = vld [vmem:[#allocation7 + $0x2c] sm:$0xf]
    %v649 = vld [vmem:[#allocation7 + $0x30] sm:$0xf]
    %v650 = vld [vmem:[#allocation7 + $0x34] sm:$0xf]
    %v651 = vld [vmem:[#allocation7 + $0x38] sm:$0xf]
    %v652 = vld [vmem:[#allocation7 + $0x3c] sm:$0xf]
    %v653 = vld [vmem:[%s4] sm:$0x1]
    %v655 = vperm.slane %v653, 0
    %v673 = vunpack.c.l.b16 %v637
    %v674 = vunpack.c.l.b16 %v638
    %v675 = vunpack.c.l.b16 %v639
    %v676 = vunpack.c.l.b16 %v640
    %v677 = vunpack.c.l.b16 %v641
    %v678 = vunpack.c.l.b16 %v642
    %v679 = vunpack.c.l.b16 %v643
    %v680 = vunpack.c.l.b16 %v644
    %v681 = vunpack.c.l.b16 %v645
    %v682 = vunpack.c.l.b16 %v646
    %v683 = vunpack.c.l.b16 %v647
    %v684 = vunpack.c.l.b16 %v648
    %v685 = vunpack.c.l.b16 %v649
    %v686 = vunpack.c.l.b16 %v650
    %v687 = vunpack.c.l.b16 %v651
    %v688 = vunpack.c.l.b16 %v652
    %v689 = vpack.c.b16 %v674, %v673
    %v690 = vpack.c.b16 %v676, %v675
    %v691 = vpack.c.b16 %v678, %v677
    %v692 = vpack.c.b16 %v680, %v679
    %v693 = vpack.c.b16 %v682, %v681
    %v694 = vpack.c.b16 %v684, %v683
    %v695 = vpack.c.b16 %v686, %v685
    %v696 = vpack.c.b16 %v688, %v687
    %705 = vmatpush.bf16.msra.mxu0 %v696
    %706 = vmatpush.bf16.msra.mxu0 %v695
    %707 = vmatpush.bf16.msra.mxu0 %v694
    %708 = vmatpush.bf16.msra.mxu0 %v693
    %709 = vmatpush.bf16.msra.mxu0 %v692
    %710 = vmatpush.bf16.msra.mxu0 %v691
    %711 = vmatpush.bf16.msra.mxu0 %v690
    %712 = vmatpush.bf16.msra.mxu0 %v689
    %713 = vmatmul.bf16.gmra.mxu0 %v621
    %v714 = vpop.f32.mrf.mxu0
    %v715 = vadd.f32 %v655, %v714
    %v716 = vpop.f32.mrf.mxu0
    %v717 = vadd.f32 %v655, %v716
    %718 = vmatmul.bf16.gmra.mxu0 %v622
    %v719 = vpop.f32.mrf.mxu0
    %v720 = vadd.f32 %v655, %v719
    %v721 = vpop.f32.mrf.mxu0
    %v722 = vadd.f32 %v655, %v721
    %723 = vmatmul.bf16.gmra.mxu0 %v623
    %v724 = vpop.f32.mrf.mxu0
    %v725 = vadd.f32 %v655, %v724
    %v726 = vpop.f32.mrf.mxu0
    %v727 = vadd.f32 %v655, %v726
    %728 = vmatmul.bf16.gmra.mxu0 %v624
    %v729 = vpop.f32.mrf.mxu0
    %v730 = vadd.f32 %v655, %v729
    %v731 = vpop.f32.mrf.mxu0
    %v732 = vadd.f32 %v655, %v731
    %733 = vmatmul.bf16.gmra.mxu0 %v625
    %v734 = vpop.f32.mrf.mxu0
    %v735 = vadd.f32 %v655, %v734
    %v736 = vpop.f32.mrf.mxu0
    %v737 = vadd.f32 %v655, %v736
    %738 = vmatmul.bf16.gmra.mxu0 %v626
    %v739 = vpop.f32.mrf.mxu0
    %v740 = vadd.f32 %v655, %v739
    %v741 = vpop.f32.mrf.mxu0
    %v742 = vadd.f32 %v655, %v741
    %743 = vmatmul.bf16.gmra.mxu0 %v627
    %v744 = vpop.f32.mrf.mxu0
    %v745 = vadd.f32 %v655, %v744
    %v746 = vpop.f32.mrf.mxu0
    %v747 = vadd.f32 %v655, %v746
    %748 = vmatmul.bf16.gmra.mxu0 %v628
    %v749 = vpop.f32.mrf.mxu0
    %v750 = vadd.f32 %v655, %v749
    %v751 = vpop.f32.mrf.mxu0
    %v752 = vadd.f32 %v655, %v751
    %753 = vmatmul.bf16.gmra.mxu0 %v629
    %v754 = vpop.f32.mrf.mxu0
    %v755 = vadd.f32 %v655, %v754
    %v756 = vpop.f32.mrf.mxu0
    %v757 = vadd.f32 %v655, %v756
    %758 = vmatmul.bf16.gmra.mxu0 %v630
    %v759 = vpop.f32.mrf.mxu0
    %v760 = vadd.f32 %v655, %v759
    %v761 = vpop.f32.mrf.mxu0
    %v762 = vadd.f32 %v655, %v761
    %763 = vmatmul.bf16.gmra.mxu0 %v631
    %v764 = vpop.f32.mrf.mxu0
    %v765 = vadd.f32 %v655, %v764
    %v766 = vpop.f32.mrf.mxu0
    %v767 = vadd.f32 %v655, %v766
    %768 = vmatmul.bf16.gmra.mxu0 %v632
    %v769 = vpop.f32.mrf.mxu0
    %v770 = vadd.f32 %v655, %v769
    %v771 = vpop.f32.mrf.mxu0
    %v772 = vadd.f32 %v655, %v771
    %773 = vmatmul.bf16.gmra.mxu0 %v633
    %v774 = vpop.f32.mrf.mxu0
    %v775 = vadd.f32 %v655, %v774
    %v776 = vpop.f32.mrf.mxu0
    %v777 = vadd.f32 %v655, %v776
    %778 = vmatmul.bf16.gmra.mxu0 %v634
    %v779 = vpop.f32.mrf.mxu0
    %v780 = vadd.f32 %v655, %v779
    %v781 = vpop.f32.mrf.mxu0
    %v782 = vadd.f32 %v655, %v781
    %783 = vmatmul.bf16.gmra.mxu0 %v635
    %v784 = vpop.f32.mrf.mxu0
    %v785 = vadd.f32 %v655, %v784
    %v786 = vpop.f32.mrf.mxu0
    %v787 = vadd.f32 %v655, %v786
    %788 = vmatmul.bf16.gmra.mxu0 %v636
    %v789 = vpop.f32.mrf.mxu0
    %v790 = vadd.f32 %v655, %v789
    %v791 = vpop.f32.mrf.mxu0
    %v792 = vadd.f32 %v655, %v791
    %793 = vdwg.mxu0
    %v794 = vmul.f32 %v715, 0.5
    %v795 = vmul.f32 %v717, 0.5
    %v796 = vmul.f32 %v720, 0.5
    %v797 = vmul.f32 %v722, 0.5
    %v798 = vmul.f32 %v725, 0.5
    %v799 = vmul.f32 %v727, 0.5
    %v800 = vmul.f32 %v730, 0.5
    %v801 = vmul.f32 %v732, 0.5
    %v802 = vmul.f32 %v735, 0.5
    %v803 = vmul.f32 %v737, 0.5
    %v804 = vmul.f32 %v740, 0.5
    %v805 = vmul.f32 %v742, 0.5
    %v806 = vmul.f32 %v745, 0.5
    %v807 = vmul.f32 %v747, 0.5
    %v808 = vmul.f32 %v750, 0.5
    %v809 = vmul.f32 %v752, 0.5
    %v810 = vmul.f32 %v755, 0.5
    %v811 = vmul.f32 %v757, 0.5
    %v812 = vmul.f32 %v760, 0.5
    %v813 = vmul.f32 %v762, 0.5
    %v814 = vmul.f32 %v765, 0.5
    %v815 = vmul.f32 %v767, 0.5
    %v816 = vmul.f32 %v770, 0.5
    %v817 = vmul.f32 %v772, 0.5
    %v818 = vmul.f32 %v775, 0.5
    %v819 = vmul.f32 %v777, 0.5
    %v820 = vmul.f32 %v780, 0.5
    %v821 = vmul.f32 %v782, 0.5
    %v822 = vmul.f32 %v785, 0.5
    %v823 = vmul.f32 %v787, 0.5
    %v824 = vmul.f32 %v790, 0.5
    %v825 = vmul.f32 %v792, 0.5
    %v826 = vtanh.pop %v794
    %v827 = vtanh.pop %v795
    %v828 = vtanh.pop %v796
    %v829 = vtanh.pop %v797
    %v830 = vtanh.pop %v798
    %v831 = vtanh.pop %v799
    %v832 = vtanh.pop %v800
    %v833 = vtanh.pop %v801
    %v834 = vtanh.pop %v802
    %v835 = vtanh.pop %v803
    %v836 = vtanh.pop %v804
    %v837 = vtanh.pop %v805
    %v838 = vtanh.pop %v806
    %v839 = vtanh.pop %v807
    %v840 = vtanh.pop %v808
    %v841 = vtanh.pop %v809
    %v842 = vtanh.pop %v810
    %v843 = vtanh.pop %v811
    %v844 = vtanh.pop %v812
    %v845 = vtanh.pop %v813
    %v846 = vtanh.pop %v814
    %v847 = vtanh.pop %v815
    %v848 = vtanh.pop %v816
    %v849 = vtanh.pop %v817
    %v850 = vtanh.pop %v818
    %v851 = vtanh.pop %v819
    %v852 = vtanh.pop %v820
    %v853 = vtanh.pop %v821
    %v854 = vtanh.pop %v822
    %v855 = vtanh.pop %v823
    %v856 = vtanh.pop %v824
    %v857 = vtanh.pop %v825
    %v858 = vadd.f32 %v826, 1.0
    %v859 = vadd.f32 %v827, 1.0
    %v860 = vadd.f32 %v828, 1.0
    %v861 = vadd.f32 %v829, 1.0
    %v862 = vadd.f32 %v830, 1.0
    %v863 = vadd.f32 %v831, 1.0
    %v864 = vadd.f32 %v832, 1.0
    %v865 = vadd.f32 %v833, 1.0
    %v866 = vadd.f32 %v834, 1.0
    %v867 = vadd.f32 %v835, 1.0
    %v868 = vadd.f32 %v836, 1.0
    %v869 = vadd.f32 %v837, 1.0
    %v870 = vadd.f32 %v838, 1.0
    %v871 = vadd.f32 %v839, 1.0
    %v872 = vadd.f32 %v840, 1.0
    %v873 = vadd.f32 %v841, 1.0
    %v874 = vadd.f32 %v842, 1.0
    %v875 = vadd.f32 %v843, 1.0
    %v876 = vadd.f32 %v844, 1.0
    %v877 = vadd.f32 %v845, 1.0
    %v878 = vadd.f32 %v846, 1.0
    %v879 = vadd.f32 %v847, 1.0
    %v880 = vadd.f32 %v848, 1.0
    %v881 = vadd.f32 %v849, 1.0
    %v882 = vadd.f32 %v850, 1.0
    %v883 = vadd.f32 %v851, 1.0
    %v884 = vadd.f32 %v852, 1.0
    %v885 = vadd.f32 %v853, 1.0
    %v886 = vadd.f32 %v854, 1.0
    %v887 = vadd.f32 %v855, 1.0
    %v888 = vadd.f32 %v856, 1.0
    %v889 = vadd.f32 %v857, 1.0
    %v890 = vmul.f32 %v858, 0.5
    %v891 = vmul.f32 %v859, 0.5
    %v892 = vmul.f32 %v860, 0.5
    %v893 = vmul.f32 %v861, 0.5
    %v894 = vmul.f32 %v862, 0.5
    %v895 = vmul.f32 %v863, 0.5
    %v896 = vmul.f32 %v864, 0.5
    %v897 = vmul.f32 %v865, 0.5
    %v898 = vmul.f32 %v866, 0.5
    %v899 = vmul.f32 %v867, 0.5
    %v900 = vmul.f32 %v868, 0.5
    %v901 = vmul.f32 %v869, 0.5
    %v902 = vmul.f32 %v870, 0.5
    %v903 = vmul.f32 %v871, 0.5
    %v904 = vmul.f32 %v872, 0.5
    %v905 = vmul.f32 %v873, 0.5
    %v906 = vmul.f32 %v874, 0.5
    %v907 = vmul.f32 %v875, 0.5
    %v908 = vmul.f32 %v876, 0.5
    %v909 = vmul.f32 %v877, 0.5
    %v910 = vmul.f32 %v878, 0.5
    %v911 = vmul.f32 %v879, 0.5
    %v912 = vmul.f32 %v880, 0.5
    %v913 = vmul.f32 %v881, 0.5
    %v914 = vmul.f32 %v882, 0.5
    %v915 = vmul.f32 %v883, 0.5
    %v916 = vmul.f32 %v884, 0.5
    %v917 = vmul.f32 %v885, 0.5
    %v918 = vmul.f32 %v886, 0.5
    %v919 = vmul.f32 %v887, 0.5
    %v920 = vmul.f32 %v888, 0.5
    %v921 = vmul.f32 %v889, 0.5
    %v922 = vmul.f32 %v715, %v890
    %v923 = vmul.f32 %v717, %v891
    %v924 = vmul.f32 %v720, %v892
    %v925 = vmul.f32 %v722, %v893
    %v926 = vmul.f32 %v725, %v894
    %v927 = vmul.f32 %v727, %v895
    %v928 = vmul.f32 %v730, %v896
    %v929 = vmul.f32 %v732, %v897
    %v930 = vmul.f32 %v735, %v898
    %v931 = vmul.f32 %v737, %v899
    %v932 = vmul.f32 %v740, %v900
    %v933 = vmul.f32 %v742, %v901
    %v934 = vmul.f32 %v745, %v902
    %v935 = vmul.f32 %v747, %v903
    %v936 = vmul.f32 %v750, %v904
    %v937 = vmul.f32 %v752, %v905
    %v938 = vmul.f32 %v755, %v906
    %v939 = vmul.f32 %v757, %v907
    %v940 = vmul.f32 %v760, %v908
    %v941 = vmul.f32 %v762, %v909
    %v942 = vmul.f32 %v765, %v910
    %v943 = vmul.f32 %v767, %v911
    %v944 = vmul.f32 %v770, %v912
    %v945 = vmul.f32 %v772, %v913
    %v946 = vmul.f32 %v775, %v914
    %v947 = vmul.f32 %v777, %v915
    %v948 = vmul.f32 %v780, %v916
    %v949 = vmul.f32 %v782, %v917
    %v950 = vmul.f32 %v785, %v918
    %v951 = vmul.f32 %v787, %v919
    %v952 = vmul.f32 %v790, %v920
    %v953 = vmul.f32 %v792, %v921
    %v954 = vpack.c.bf16 %v923, %v922
    %v955 = vpack.c.bf16 %v925, %v924
    %v956 = vpack.c.bf16 %v927, %v926
    %v957 = vpack.c.bf16 %v929, %v928
    %v958 = vpack.c.bf16 %v931, %v930
    %v959 = vpack.c.bf16 %v933, %v932
    %v960 = vpack.c.bf16 %v935, %v934
    %v961 = vpack.c.bf16 %v937, %v936
    %v962 = vpack.c.bf16 %v939, %v938
    %v963 = vpack.c.bf16 %v941, %v940
    %v964 = vpack.c.bf16 %v943, %v942
    %v965 = vpack.c.bf16 %v945, %v944
    %v966 = vpack.c.bf16 %v947, %v946
    %v967 = vpack.c.bf16 %v949, %v948
    %v968 = vpack.c.bf16 %v951, %v950
    %v969 = vpack.c.bf16 %v953, %v952
    %v970 = vld [vmem:[#allocation8] sm:$0xf]
    %v971 = vld [vmem:[#allocation8 + $0x4] sm:$0xf]
    %v972 = vld [vmem:[#allocation8 + $0x8] sm:$0xf]
    %v973 = vld [vmem:[#allocation8 + $0xc] sm:$0xf]
    %v974 = vld [vmem:[#allocation8 + $0x10] sm:$0xf]
    %v975 = vld [vmem:[#allocation8 + $0x14] sm:$0xf]
    %v976 = vld [vmem:[#allocation8 + $0x18] sm:$0xf]
    %v977 = vld [vmem:[#allocation8 + $0x1c] sm:$0xf]
    %v978 = vld [vmem:[#allocation8 + $0x20] sm:$0xf]
    %v979 = vld [vmem:[#allocation8 + $0x24] sm:$0xf]
    %v980 = vld [vmem:[#allocation8 + $0x28] sm:$0xf]
    %v981 = vld [vmem:[#allocation8 + $0x2c] sm:$0xf]
    %v982 = vld [vmem:[#allocation8 + $0x30] sm:$0xf]
    %v983 = vld [vmem:[#allocation8 + $0x34] sm:$0xf]
    %v984 = vld [vmem:[#allocation8 + $0x38] sm:$0xf]
    %v985 = vld [vmem:[#allocation8 + $0x3c] sm:$0xf]
    %v986 = vld [vmem:[%s6] sm:$0x1]
    %v988 = vperm.slane %v986, 0
    %v1006 = vunpack.c.l.b16 %v970
    %v1007 = vunpack.c.l.b16 %v971
    %v1008 = vunpack.c.l.b16 %v972
    %v1009 = vunpack.c.l.b16 %v973
    %v1010 = vunpack.c.l.b16 %v974
    %v1011 = vunpack.c.l.b16 %v975
    %v1012 = vunpack.c.l.b16 %v976
    %v1013 = vunpack.c.l.b16 %v977
    %v1014 = vunpack.c.l.b16 %v978
    %v1015 = vunpack.c.l.b16 %v979
    %v1016 = vunpack.c.l.b16 %v980
    %v1017 = vunpack.c.l.b16 %v981
    %v1018 = vunpack.c.l.b16 %v982
    %v1019 = vunpack.c.l.b16 %v983
    %v1020 = vunpack.c.l.b16 %v984
    %v1021 = vunpack.c.l.b16 %v985
    %v1022 = vpack.c.b16 %v1007, %v1006
    %v1023 = vpack.c.b16 %v1009, %v1008
    %v1024 = vpack.c.b16 %v1011, %v1010
    %v1025 = vpack.c.b16 %v1013, %v1012
    %v1026 = vpack.c.b16 %v1015, %v1014
    %v1027 = vpack.c.b16 %v1017, %v1016
    %v1028 = vpack.c.b16 %v1019, %v1018
    %v1029 = vpack.c.b16 %v1021, %v1020
    %1038 = vmatpush.bf16.msra.mxu0 %v1029
    %1039 = vmatpush.bf16.msra.mxu0 %v1028
    %1040 = vmatpush.bf16.msra.mxu0 %v1027
    %1041 = vmatpush.bf16.msra.mxu0 %v1026
    %1042 = vmatpush.bf16.msra.mxu0 %v1025
    %1043 = vmatpush.bf16.msra.mxu0 %v1024
    %1044 = vmatpush.bf16.msra.mxu0 %v1023
    %1045 = vmatpush.bf16.msra.mxu0 %v1022
    %1046 = vmatmul.bf16.gmra.mxu0 %v954
    %v1047 = vpop.f32.mrf.mxu0
    %v1048 = vadd.f32 %v988, %v1047
    %v1049 = vpop.f32.mrf.mxu0
    %v1050 = vadd.f32 %v988, %v1049
    %1051 = vmatmul.bf16.gmra.mxu0 %v955
    %v1052 = vpop.f32.mrf.mxu0
    %v1053 = vadd.f32 %v988, %v1052
    %v1054 = vpop.f32.mrf.mxu0
    %v1055 = vadd.f32 %v988, %v1054
    %1056 = vmatmul.bf16.gmra.mxu0 %v956
    %v1057 = vpop.f32.mrf.mxu0
    %v1058 = vadd.f32 %v988, %v1057
    %v1059 = vpop.f32.mrf.mxu0
    %v1060 = vadd.f32 %v988, %v1059
    %1061 = vmatmul.bf16.gmra.mxu0 %v957
    %v1062 = vpop.f32.mrf.mxu0
    %v1063 = vadd.f32 %v988, %v1062
    %v1064 = vpop.f32.mrf.mxu0
    %v1065 = vadd.f32 %v988, %v1064
    %1066 = vmatmul.bf16.gmra.mxu0 %v958
    %v1067 = vpop.f32.mrf.mxu0
    %v1068 = vadd.f32 %v988, %v1067
    %v1069 = vpop.f32.mrf.mxu0
    %v1070 = vadd.f32 %v988, %v1069
    %1071 = vmatmul.bf16.gmra.mxu0 %v959
    %v1072 = vpop.f32.mrf.mxu0
    %v1073 = vadd.f32 %v988, %v1072
    %v1074 = vpop.f32.mrf.mxu0
    %v1075 = vadd.f32 %v988, %v1074
    %1076 = vmatmul.bf16.gmra.mxu0 %v960
    %v1077 = vpop.f32.mrf.mxu0
    %v1078 = vadd.f32 %v988, %v1077
    %v1079 = vpop.f32.mrf.mxu0
    %v1080 = vadd.f32 %v988, %v1079
    %1081 = vmatmul.bf16.gmra.mxu0 %v961
    %v1082 = vpop.f32.mrf.mxu0
    %v1083 = vadd.f32 %v988, %v1082
    %v1084 = vpop.f32.mrf.mxu0
    %v1085 = vadd.f32 %v988, %v1084
    %1086 = vmatmul.bf16.gmra.mxu0 %v962
    %v1087 = vpop.f32.mrf.mxu0
    %v1088 = vadd.f32 %v988, %v1087
    %v1089 = vpop.f32.mrf.mxu0
    %v1090 = vadd.f32 %v988, %v1089
    %1091 = vmatmul.bf16.gmra.mxu0 %v963
    %v1092 = vpop.f32.mrf.mxu0
    %v1093 = vadd.f32 %v988, %v1092
    %v1094 = vpop.f32.mrf.mxu0
    %v1095 = vadd.f32 %v988, %v1094
    %1096 = vmatmul.bf16.gmra.mxu0 %v964
    %v1097 = vpop.f32.mrf.mxu0
    %v1098 = vadd.f32 %v988, %v1097
    %v1099 = vpop.f32.mrf.mxu0
    %v1100 = vadd.f32 %v988, %v1099
    %1101 = vmatmul.bf16.gmra.mxu0 %v965
    %v1102 = vpop.f32.mrf.mxu0
    %v1103 = vadd.f32 %v988, %v1102
    %v1104 = vpop.f32.mrf.mxu0
    %v1105 = vadd.f32 %v988, %v1104
    %1106 = vmatmul.bf16.gmra.mxu0 %v966
    %v1107 = vpop.f32.mrf.mxu0
    %v1108 = vadd.f32 %v988, %v1107
    %v1109 = vpop.f32.mrf.mxu0
    %v1110 = vadd.f32 %v988, %v1109
    %1111 = vmatmul.bf16.gmra.mxu0 %v967
    %v1112 = vpop.f32.mrf.mxu0
    %v1113 = vadd.f32 %v988, %v1112
    %v1114 = vpop.f32.mrf.mxu0
    %v1115 = vadd.f32 %v988, %v1114
    %1116 = vmatmul.bf16.gmra.mxu0 %v968
    %v1117 = vpop.f32.mrf.mxu0
    %v1118 = vadd.f32 %v988, %v1117
    %v1119 = vpop.f32.mrf.mxu0
    %v1120 = vadd.f32 %v988, %v1119
    %1121 = vmatmul.bf16.gmra.mxu0 %v969
    %v1122 = vpop.f32.mrf.mxu0
    %v1123 = vadd.f32 %v988, %v1122
    %v1124 = vpop.f32.mrf.mxu0
    %v1125 = vadd.f32 %v988, %v1124
    %1126 = vdwg.mxu0
    %v1127 = vmul.f32 %v1048, 0.5
    %v1128 = vmul.f32 %v1050, 0.5
    %v1129 = vmul.f32 %v1053, 0.5
    %v1130 = vmul.f32 %v1055, 0.5
    %v1131 = vmul.f32 %v1058, 0.5
    %v1132 = vmul.f32 %v1060, 0.5
    %v1133 = vmul.f32 %v1063, 0.5
    %v1134 = vmul.f32 %v1065, 0.5
    %v1135 = vmul.f32 %v1068, 0.5
    %v1136 = vmul.f32 %v1070, 0.5
    %v1137 = vmul.f32 %v1073, 0.5
    %v1138 = vmul.f32 %v1075, 0.5
    %v1139 = vmul.f32 %v1078, 0.5
    %v1140 = vmul.f32 %v1080, 0.5
    %v1141 = vmul.f32 %v1083, 0.5
    %v1142 = vmul.f32 %v1085, 0.5
    %v1143 = vmul.f32 %v1088, 0.5
    %v1144 = vmul.f32 %v1090, 0.5
    %v1145 = vmul.f32 %v1093, 0.5
    %v1146 = vmul.f32 %v1095, 0.5
    %v1147 = vmul.f32 %v1098, 0.5
    %v1148 = vmul.f32 %v1100, 0.5
    %v1149 = vmul.f32 %v1103, 0.5
    %v1150 = vmul.f32 %v1105, 0.5
    %v1151 = vmul.f32 %v1108, 0.5
    %v1152 = vmul.f32 %v1110, 0.5
    %v1153 = vmul.f32 %v1113, 0.5
    %v1154 = vmul.f32 %v1115, 0.5
    %v1155 = vmul.f32 %v1118, 0.5
    %v1156 = vmul.f32 %v1120, 0.5
    %v1157 = vmul.f32 %v1123, 0.5
    %v1158 = vmul.f32 %v1125, 0.5
    %v1159 = vtanh.pop %v1127
    %v1160 = vtanh.pop %v1128
    %v1161 = vtanh.pop %v1129
    %v1162 = vtanh.pop %v1130
    %v1163 = vtanh.pop %v1131
    %v1164 = vtanh.pop %v1132
    %v1165 = vtanh.pop %v1133
    %v1166 = vtanh.pop %v1134
    %v1167 = vtanh.pop %v1135
    %v1168 = vtanh.pop %v1136
    %v1169 = vtanh.pop %v1137
    %v1170 = vtanh.pop %v1138
    %v1171 = vtanh.pop %v1139
    %v1172 = vtanh.pop %v1140
    %v1173 = vtanh.pop %v1141
    %v1174 = vtanh.pop %v1142
    %v1175 = vtanh.pop %v1143
    %v1176 = vtanh.pop %v1144
    %v1177 = vtanh.pop %v1145
    %v1178 = vtanh.pop %v1146
    %v1179 = vtanh.pop %v1147
    %v1180 = vtanh.pop %v1148
    %v1181 = vtanh.pop %v1149
    %v1182 = vtanh.pop %v1150
    %v1183 = vtanh.pop %v1151
    %v1184 = vtanh.pop %v1152
    %v1185 = vtanh.pop %v1153
    %v1186 = vtanh.pop %v1154
    %v1187 = vtanh.pop %v1155
    %v1188 = vtanh.pop %v1156
    %v1189 = vtanh.pop %v1157
    %v1190 = vtanh.pop %v1158
    %v1191 = vadd.f32 %v1159, 1.0
    %v1192 = vadd.f32 %v1160, 1.0
    %v1193 = vadd.f32 %v1161, 1.0
    %v1194 = vadd.f32 %v1162, 1.0
    %v1195 = vadd.f32 %v1163, 1.0
    %v1196 = vadd.f32 %v1164, 1.0
    %v1197 = vadd.f32 %v1165, 1.0
    %v1198 = vadd.f32 %v1166, 1.0
    %v1199 = vadd.f32 %v1167, 1.0
    %v1200 = vadd.f32 %v1168, 1.0
    %v1201 = vadd.f32 %v1169, 1.0
    %v1202 = vadd.f32 %v1170, 1.0
    %v1203 = vadd.f32 %v1171, 1.0
    %v1204 = vadd.f32 %v1172, 1.0
    %v1205 = vadd.f32 %v1173, 1.0
    %v1206 = vadd.f32 %v1174, 1.0
    %v1207 = vadd.f32 %v1175, 1.0
    %v1208 = vadd.f32 %v1176, 1.0
    %v1209 = vadd.f32 %v1177, 1.0
    %v1210 = vadd.f32 %v1178, 1.0
    %v1211 = vadd.f32 %v1179, 1.0
    %v1212 = vadd.f32 %v1180, 1.0
    %v1213 = vadd.f32 %v1181, 1.0
    %v1214 = vadd.f32 %v1182, 1.0
    %v1215 = vadd.f32 %v1183, 1.0
    %v1216 = vadd.f32 %v1184, 1.0
    %v1217 = vadd.f32 %v1185, 1.0
    %v1218 = vadd.f32 %v1186, 1.0
    %v1219 = vadd.f32 %v1187, 1.0
    %v1220 = vadd.f32 %v1188, 1.0
    %v1221 = vadd.f32 %v1189, 1.0
    %v1222 = vadd.f32 %v1190, 1.0
    %v1223 = vmul.f32 %v1191, 0.5
    %v1224 = vmul.f32 %v1192, 0.5
    %v1225 = vmul.f32 %v1193, 0.5
    %v1226 = vmul.f32 %v1194, 0.5
    %v1227 = vmul.f32 %v1195, 0.5
    %v1228 = vmul.f32 %v1196, 0.5
    %v1229 = vmul.f32 %v1197, 0.5
    %v1230 = vmul.f32 %v1198, 0.5
    %v1231 = vmul.f32 %v1199, 0.5
    %v1232 = vmul.f32 %v1200, 0.5
    %v1233 = vmul.f32 %v1201, 0.5
    %v1234 = vmul.f32 %v1202, 0.5
    %v1235 = vmul.f32 %v1203, 0.5
    %v1236 = vmul.f32 %v1204, 0.5
    %v1237 = vmul.f32 %v1205, 0.5
    %v1238 = vmul.f32 %v1206, 0.5
    %v1239 = vmul.f32 %v1207, 0.5
    %v1240 = vmul.f32 %v1208, 0.5
    %v1241 = vmul.f32 %v1209, 0.5
    %v1242 = vmul.f32 %v1210, 0.5
    %v1243 = vmul.f32 %v1211, 0.5
    %v1244 = vmul.f32 %v1212, 0.5
    %v1245 = vmul.f32 %v1213, 0.5
    %v1246 = vmul.f32 %v1214, 0.5
    %v1247 = vmul.f32 %v1215, 0.5
    %v1248 = vmul.f32 %v1216, 0.5
    %v1249 = vmul.f32 %v1217, 0.5
    %v1250 = vmul.f32 %v1218, 0.5
    %v1251 = vmul.f32 %v1219, 0.5
    %v1252 = vmul.f32 %v1220, 0.5
    %v1253 = vmul.f32 %v1221, 0.5
    %v1254 = vmul.f32 %v1222, 0.5
    %v1255 = vmul.f32 %v1048, %v1223
    %v1256 = vmul.f32 %v1050, %v1224
    %v1257 = vmul.f32 %v1053, %v1225
    %v1258 = vmul.f32 %v1055, %v1226
    %v1259 = vmul.f32 %v1058, %v1227
    %v1260 = vmul.f32 %v1060, %v1228
    %v1261 = vmul.f32 %v1063, %v1229
    %v1262 = vmul.f32 %v1065, %v1230
    %v1263 = vmul.f32 %v1068, %v1231
    %v1264 = vmul.f32 %v1070, %v1232
    %v1265 = vmul.f32 %v1073, %v1233
    %v1266 = vmul.f32 %v1075, %v1234
    %v1267 = vmul.f32 %v1078, %v1235
    %v1268 = vmul.f32 %v1080, %v1236
    %v1269 = vmul.f32 %v1083, %v1237
    %v1270 = vmul.f32 %v1085, %v1238
    %v1271 = vmul.f32 %v1088, %v1239
    %v1272 = vmul.f32 %v1090, %v1240
    %v1273 = vmul.f32 %v1093, %v1241
    %v1274 = vmul.f32 %v1095, %v1242
    %v1275 = vmul.f32 %v1098, %v1243
    %v1276 = vmul.f32 %v1100, %v1244
    %v1277 = vmul.f32 %v1103, %v1245
    %v1278 = vmul.f32 %v1105, %v1246
    %v1279 = vmul.f32 %v1108, %v1247
    %v1280 = vmul.f32 %v1110, %v1248
    %v1281 = vmul.f32 %v1113, %v1249
    %v1282 = vmul.f32 %v1115, %v1250
    %v1283 = vmul.f32 %v1118, %v1251
    %v1284 = vmul.f32 %v1120, %v1252
    %v1285 = vmul.f32 %v1123, %v1253
    %v1286 = vmul.f32 %v1125, %v1254
    %v1287 = vpack.c.bf16 %v1256, %v1255
    %v1288 = vpack.c.bf16 %v1258, %v1257
    %v1289 = vpack.c.bf16 %v1260, %v1259
    %v1290 = vpack.c.bf16 %v1262, %v1261
    %v1291 = vpack.c.bf16 %v1264, %v1263
    %v1292 = vpack.c.bf16 %v1266, %v1265
    %v1293 = vpack.c.bf16 %v1268, %v1267
    %v1294 = vpack.c.bf16 %v1270, %v1269
    %v1295 = vpack.c.bf16 %v1272, %v1271
    %v1296 = vpack.c.bf16 %v1274, %v1273
    %v1297 = vpack.c.bf16 %v1276, %v1275
    %v1298 = vpack.c.bf16 %v1278, %v1277
    %v1299 = vpack.c.bf16 %v1280, %v1279
    %v1300 = vpack.c.bf16 %v1282, %v1281
    %v1301 = vpack.c.bf16 %v1284, %v1283
    %v1302 = vpack.c.bf16 %v1286, %v1285
    %v1303 = vld [vmem:[#allocation10] sm:$0xf]
    %v1304 = vld [vmem:[#allocation10 + $0x4] sm:$0xf]
    %v1305 = vld [vmem:[#allocation10 + $0x8] sm:$0xf]
    %v1306 = vld [vmem:[#allocation10 + $0xc] sm:$0xf]
    %v1307 = vld [vmem:[#allocation10 + $0x10] sm:$0xf]
    %v1308 = vld [vmem:[#allocation10 + $0x14] sm:$0xf]
    %v1309 = vld [vmem:[#allocation10 + $0x18] sm:$0xf]
    %v1310 = vld [vmem:[#allocation10 + $0x1c] sm:$0xf]
    %v1311 = vld [vmem:[#allocation10 + $0x20] sm:$0xf]
    %v1312 = vld [vmem:[#allocation10 + $0x24] sm:$0xf]
    %v1313 = vld [vmem:[#allocation10 + $0x28] sm:$0xf]
    %v1314 = vld [vmem:[#allocation10 + $0x2c] sm:$0xf]
    %v1315 = vld [vmem:[#allocation10 + $0x30] sm:$0xf]
    %v1316 = vld [vmem:[#allocation10 + $0x34] sm:$0xf]
    %v1317 = vld [vmem:[#allocation10 + $0x38] sm:$0xf]
    %v1318 = vld [vmem:[#allocation10 + $0x3c] sm:$0xf]
    %v1319 = vld [vmem:[%s8] sm:$0x1]
    %v1321 = vperm.slane %v1319, 0
    %v1339 = vunpack.c.l.b16 %v1303
    %v1340 = vunpack.c.l.b16 %v1304
    %v1341 = vunpack.c.l.b16 %v1305
    %v1342 = vunpack.c.l.b16 %v1306
    %v1343 = vunpack.c.l.b16 %v1307
    %v1344 = vunpack.c.l.b16 %v1308
    %v1345 = vunpack.c.l.b16 %v1309
    %v1346 = vunpack.c.l.b16 %v1310
    %v1347 = vunpack.c.l.b16 %v1311
    %v1348 = vunpack.c.l.b16 %v1312
    %v1349 = vunpack.c.l.b16 %v1313
    %v1350 = vunpack.c.l.b16 %v1314
    %v1351 = vunpack.c.l.b16 %v1315
    %v1352 = vunpack.c.l.b16 %v1316
    %v1353 = vunpack.c.l.b16 %v1317
    %v1354 = vunpack.c.l.b16 %v1318
    %v1355 = vpack.c.b16 %v1340, %v1339
    %v1356 = vpack.c.b16 %v1342, %v1341
    %v1357 = vpack.c.b16 %v1344, %v1343
    %v1358 = vpack.c.b16 %v1346, %v1345
    %v1359 = vpack.c.b16 %v1348, %v1347
    %v1360 = vpack.c.b16 %v1350, %v1349
    %v1361 = vpack.c.b16 %v1352, %v1351
    %v1362 = vpack.c.b16 %v1354, %v1353
    %1371 = vmatpush.bf16.msra.mxu0 %v1362
    %1372 = vmatpush.bf16.msra.mxu0 %v1361
    %1373 = vmatpush.bf16.msra.mxu0 %v1360
    %1374 = vmatpush.bf16.msra.mxu0 %v1359
    %1375 = vmatpush.bf16.msra.mxu0 %v1358
    %1376 = vmatpush.bf16.msra.mxu0 %v1357
    %1377 = vmatpush.bf16.msra.mxu0 %v1356
    %1378 = vmatpush.bf16.msra.mxu0 %v1355
    %1379 = vmatmul.bf16.gmra.mxu0 %v1287
    %v1380 = vpop.f32.mrf.mxu0
    %v1381 = vadd.f32 %v1321, %v1380
    %v1382 = vpop.f32.mrf.mxu0
    %v1383 = vadd.f32 %v1321, %v1382
    %1384 = vmatmul.bf16.gmra.mxu0 %v1288
    %v1385 = vpop.f32.mrf.mxu0
    %v1386 = vadd.f32 %v1321, %v1385
    %v1387 = vpop.f32.mrf.mxu0
    %v1388 = vadd.f32 %v1321, %v1387
    %1389 = vmatmul.bf16.gmra.mxu0 %v1289
    %v1390 = vpop.f32.mrf.mxu0
    %v1391 = vadd.f32 %v1321, %v1390
    %v1392 = vpop.f32.mrf.mxu0
    %v1393 = vadd.f32 %v1321, %v1392
    %1394 = vmatmul.bf16.gmra.mxu0 %v1290
    %v1395 = vpop.f32.mrf.mxu0
    %v1396 = vadd.f32 %v1321, %v1395
    %v1397 = vpop.f32.mrf.mxu0
    %v1398 = vadd.f32 %v1321, %v1397
    %1399 = vmatmul.bf16.gmra.mxu0 %v1291
    %v1400 = vpop.f32.mrf.mxu0
    %v1401 = vadd.f32 %v1321, %v1400
    %v1402 = vpop.f32.mrf.mxu0
    %v1403 = vadd.f32 %v1321, %v1402
    %1404 = vmatmul.bf16.gmra.mxu0 %v1292
    %v1405 = vpop.f32.mrf.mxu0
    %v1406 = vadd.f32 %v1321, %v1405
    %v1407 = vpop.f32.mrf.mxu0
    %v1408 = vadd.f32 %v1321, %v1407
    %1409 = vmatmul.bf16.gmra.mxu0 %v1293
    %v1410 = vpop.f32.mrf.mxu0
    %v1411 = vadd.f32 %v1321, %v1410
    %v1412 = vpop.f32.mrf.mxu0
    %v1413 = vadd.f32 %v1321, %v1412
    %1414 = vmatmul.bf16.gmra.mxu0 %v1294
    %v1415 = vpop.f32.mrf.mxu0
    %v1416 = vadd.f32 %v1321, %v1415
    %v1417 = vpop.f32.mrf.mxu0
    %v1418 = vadd.f32 %v1321, %v1417
    %1419 = vmatmul.bf16.gmra.mxu0 %v1295
    %v1420 = vpop.f32.mrf.mxu0
    %v1421 = vadd.f32 %v1321, %v1420
    %v1422 = vpop.f32.mrf.mxu0
    %v1423 = vadd.f32 %v1321, %v1422
    %1424 = vmatmul.bf16.gmra.mxu0 %v1296
    %v1425 = vpop.f32.mrf.mxu0
    %v1426 = vadd.f32 %v1321, %v1425
    %v1427 = vpop.f32.mrf.mxu0
    %v1428 = vadd.f32 %v1321, %v1427
    %1429 = vmatmul.bf16.gmra.mxu0 %v1297
    %v1430 = vpop.f32.mrf.mxu0
    %v1431 = vadd.f32 %v1321, %v1430
    %v1432 = vpop.f32.mrf.mxu0
    %v1433 = vadd.f32 %v1321, %v1432
    %1434 = vmatmul.bf16.gmra.mxu0 %v1298
    %v1435 = vpop.f32.mrf.mxu0
    %v1436 = vadd.f32 %v1321, %v1435
    %v1437 = vpop.f32.mrf.mxu0
    %v1438 = vadd.f32 %v1321, %v1437
    %1439 = vmatmul.bf16.gmra.mxu0 %v1299
    %v1440 = vpop.f32.mrf.mxu0
    %v1441 = vadd.f32 %v1321, %v1440
    %v1442 = vpop.f32.mrf.mxu0
    %v1443 = vadd.f32 %v1321, %v1442
    %1444 = vmatmul.bf16.gmra.mxu0 %v1300
    %v1445 = vpop.f32.mrf.mxu0
    %v1446 = vadd.f32 %v1321, %v1445
    %v1447 = vpop.f32.mrf.mxu0
    %v1448 = vadd.f32 %v1321, %v1447
    %1449 = vmatmul.bf16.gmra.mxu0 %v1301
    %v1450 = vpop.f32.mrf.mxu0
    %v1451 = vadd.f32 %v1321, %v1450
    %v1452 = vpop.f32.mrf.mxu0
    %v1453 = vadd.f32 %v1321, %v1452
    %1454 = vmatmul.bf16.gmra.mxu0 %v1302
    %v1455 = vpop.f32.mrf.mxu0
    %v1456 = vadd.f32 %v1321, %v1455
    %v1457 = vpop.f32.mrf.mxu0
    %v1458 = vadd.f32 %v1321, %v1457
    %1459 = vdwg.mxu0
    %v1460 = vmul.f32 %v1381, 0.5
    %v1461 = vmul.f32 %v1383, 0.5
    %v1462 = vmul.f32 %v1386, 0.5
    %v1463 = vmul.f32 %v1388, 0.5
    %v1464 = vmul.f32 %v1391, 0.5
    %v1465 = vmul.f32 %v1393, 0.5
    %v1466 = vmul.f32 %v1396, 0.5
    %v1467 = vmul.f32 %v1398, 0.5
    %v1468 = vmul.f32 %v1401, 0.5
    %v1469 = vmul.f32 %v1403, 0.5
    %v1470 = vmul.f32 %v1406, 0.5
    %v1471 = vmul.f32 %v1408, 0.5
    %v1472 = vmul.f32 %v1411, 0.5
    %v1473 = vmul.f32 %v1413, 0.5
    %v1474 = vmul.f32 %v1416, 0.5
    %v1475 = vmul.f32 %v1418, 0.5
    %v1476 = vmul.f32 %v1421, 0.5
    %v1477 = vmul.f32 %v1423, 0.5
    %v1478 = vmul.f32 %v1426, 0.5
    %v1479 = vmul.f32 %v1428, 0.5
    %v1480 = vmul.f32 %v1431, 0.5
    %v1481 = vmul.f32 %v1433, 0.5
    %v1482 = vmul.f32 %v1436, 0.5
    %v1483 = vmul.f32 %v1438, 0.5
    %v1484 = vmul.f32 %v1441, 0.5
    %v1485 = vmul.f32 %v1443, 0.5
    %v1486 = vmul.f32 %v1446, 0.5
    %v1487 = vmul.f32 %v1448, 0.5
    %v1488 = vmul.f32 %v1451, 0.5
    %v1489 = vmul.f32 %v1453, 0.5
    %v1490 = vmul.f32 %v1456, 0.5
    %v1491 = vmul.f32 %v1458, 0.5
    %v1492 = vtanh.pop %v1460
    %v1493 = vtanh.pop %v1461
    %v1494 = vtanh.pop %v1462
    %v1495 = vtanh.pop %v1463
    %v1496 = vtanh.pop %v1464
    %v1497 = vtanh.pop %v1465
    %v1498 = vtanh.pop %v1466
    %v1499 = vtanh.pop %v1467
    %v1500 = vtanh.pop %v1468
    %v1501 = vtanh.pop %v1469
    %v1502 = vtanh.pop %v1470
    %v1503 = vtanh.pop %v1471
    %v1504 = vtanh.pop %v1472
    %v1505 = vtanh.pop %v1473
    %v1506 = vtanh.pop %v1474
    %v1507 = vtanh.pop %v1475
    %v1508 = vtanh.pop %v1476
    %v1509 = vtanh.pop %v1477
    %v1510 = vtanh.pop %v1478
    %v1511 = vtanh.pop %v1479
    %v1512 = vtanh.pop %v1480
    %v1513 = vtanh.pop %v1481
    %v1514 = vtanh.pop %v1482
    %v1515 = vtanh.pop %v1483
    %v1516 = vtanh.pop %v1484
    %v1517 = vtanh.pop %v1485
    %v1518 = vtanh.pop %v1486
    %v1519 = vtanh.pop %v1487
    %v1520 = vtanh.pop %v1488
    %v1521 = vtanh.pop %v1489
    %v1522 = vtanh.pop %v1490
    %v1523 = vtanh.pop %v1491
    %v1524 = vadd.f32 %v1492, 1.0
    %v1525 = vadd.f32 %v1493, 1.0
    %v1526 = vadd.f32 %v1494, 1.0
    %v1527 = vadd.f32 %v1495, 1.0
    %v1528 = vadd.f32 %v1496, 1.0
    %v1529 = vadd.f32 %v1497, 1.0
    %v1530 = vadd.f32 %v1498, 1.0
    %v1531 = vadd.f32 %v1499, 1.0
    %v1532 = vadd.f32 %v1500, 1.0
    %v1533 = vadd.f32 %v1501, 1.0
    %v1534 = vadd.f32 %v1502, 1.0
    %v1535 = vadd.f32 %v1503, 1.0
    %v1536 = vadd.f32 %v1504, 1.0
    %v1537 = vadd.f32 %v1505, 1.0
    %v1538 = vadd.f32 %v1506, 1.0
    %v1539 = vadd.f32 %v1507, 1.0
    %v1540 = vadd.f32 %v1508, 1.0
    %v1541 = vadd.f32 %v1509, 1.0
    %v1542 = vadd.f32 %v1510, 1.0
    %v1543 = vadd.f32 %v1511, 1.0
    %v1544 = vadd.f32 %v1512, 1.0
    %v1545 = vadd.f32 %v1513, 1.0
    %v1546 = vadd.f32 %v1514, 1.0
    %v1547 = vadd.f32 %v1515, 1.0
    %v1548 = vadd.f32 %v1516, 1.0
    %v1549 = vadd.f32 %v1517, 1.0
    %v1550 = vadd.f32 %v1518, 1.0
    %v1551 = vadd.f32 %v1519, 1.0
    %v1552 = vadd.f32 %v1520, 1.0
    %v1553 = vadd.f32 %v1521, 1.0
    %v1554 = vadd.f32 %v1522, 1.0
    %v1555 = vadd.f32 %v1523, 1.0
    %v1556 = vmul.f32 %v1524, 0.5
    %v1557 = vmul.f32 %v1525, 0.5
    %v1558 = vmul.f32 %v1526, 0.5
    %v1559 = vmul.f32 %v1527, 0.5
    %v1560 = vmul.f32 %v1528, 0.5
    %v1561 = vmul.f32 %v1529, 0.5
    %v1562 = vmul.f32 %v1530, 0.5
    %v1563 = vmul.f32 %v1531, 0.5
    %v1564 = vmul.f32 %v1532, 0.5
    %v1565 = vmul.f32 %v1533, 0.5
    %v1566 = vmul.f32 %v1534, 0.5
    %v1567 = vmul.f32 %v1535, 0.5
    %v1568 = vmul.f32 %v1536, 0.5
    %v1569 = vmul.f32 %v1537, 0.5
    %v1570 = vmul.f32 %v1538, 0.5
    %v1571 = vmul.f32 %v1539, 0.5
    %v1572 = vmul.f32 %v1540, 0.5
    %v1573 = vmul.f32 %v1541, 0.5
    %v1574 = vmul.f32 %v1542, 0.5
    %v1575 = vmul.f32 %v1543, 0.5
    %v1576 = vmul.f32 %v1544, 0.5
    %v1577 = vmul.f32 %v1545, 0.5
    %v1578 = vmul.f32 %v1546, 0.5
    %v1579 = vmul.f32 %v1547, 0.5
    %v1580 = vmul.f32 %v1548, 0.5
    %v1581 = vmul.f32 %v1549, 0.5
    %v1582 = vmul.f32 %v1550, 0.5
    %v1583 = vmul.f32 %v1551, 0.5
    %v1584 = vmul.f32 %v1552, 0.5
    %v1585 = vmul.f32 %v1553, 0.5
    %v1586 = vmul.f32 %v1554, 0.5
    %v1587 = vmul.f32 %v1555, 0.5
    %v1588 = vmul.f32 %v1381, %v1556
    %v1589 = vmul.f32 %v1383, %v1557
    %v1590 = vmul.f32 %v1386, %v1558
    %v1591 = vmul.f32 %v1388, %v1559
    %v1592 = vmul.f32 %v1391, %v1560
    %v1593 = vmul.f32 %v1393, %v1561
    %v1594 = vmul.f32 %v1396, %v1562
    %v1595 = vmul.f32 %v1398, %v1563
    %v1596 = vmul.f32 %v1401, %v1564
    %v1597 = vmul.f32 %v1403, %v1565
    %v1598 = vmul.f32 %v1406, %v1566
    %v1599 = vmul.f32 %v1408, %v1567
    %v1600 = vmul.f32 %v1411, %v1568
    %v1601 = vmul.f32 %v1413, %v1569
    %v1602 = vmul.f32 %v1416, %v1570
    %v1603 = vmul.f32 %v1418, %v1571
    %v1604 = vmul.f32 %v1421, %v1572
    %v1605 = vmul.f32 %v1423, %v1573
    %v1606 = vmul.f32 %v1426, %v1574
    %v1607 = vmul.f32 %v1428, %v1575
    %v1608 = vmul.f32 %v1431, %v1576
    %v1609 = vmul.f32 %v1433, %v1577
    %v1610 = vmul.f32 %v1436, %v1578
    %v1611 = vmul.f32 %v1438, %v1579
    %v1612 = vmul.f32 %v1441, %v1580
    %v1613 = vmul.f32 %v1443, %v1581
    %v1614 = vmul.f32 %v1446, %v1582
    %v1615 = vmul.f32 %v1448, %v1583
    %v1616 = vmul.f32 %v1451, %v1584
    %v1617 = vmul.f32 %v1453, %v1585
    %v1618 = vmul.f32 %v1456, %v1586
    %v1619 = vmul.f32 %v1458, %v1587
    %v1620 = vpack.c.bf16 %v1589, %v1588
    %v1621 = vpack.c.bf16 %v1591, %v1590
    %v1622 = vpack.c.bf16 %v1593, %v1592
    %v1623 = vpack.c.bf16 %v1595, %v1594
    %v1624 = vpack.c.bf16 %v1597, %v1596
    %v1625 = vpack.c.bf16 %v1599, %v1598
    %v1626 = vpack.c.bf16 %v1601, %v1600
    %v1627 = vpack.c.bf16 %v1603, %v1602
    %v1628 = vpack.c.bf16 %v1605, %v1604
    %v1629 = vpack.c.bf16 %v1607, %v1606
    %v1630 = vpack.c.bf16 %v1609, %v1608
    %v1631 = vpack.c.bf16 %v1611, %v1610
    %v1632 = vpack.c.bf16 %v1613, %v1612
    %v1633 = vpack.c.bf16 %v1615, %v1614
    %v1634 = vpack.c.bf16 %v1617, %v1616
    %v1635 = vpack.c.bf16 %v1619, %v1618
    %v1636 = vld [vmem:[#allocation11] sm:$0xf]
    %v1637 = vld [vmem:[#allocation11 + $0x4] sm:$0xf]
    %v1638 = vld [vmem:[#allocation11 + $0x8] sm:$0xf]
    %v1639 = vld [vmem:[#allocation11 + $0xc] sm:$0xf]
    %v1640 = vld [vmem:[#allocation11 + $0x10] sm:$0xf]
    %v1641 = vld [vmem:[#allocation11 + $0x14] sm:$0xf]
    %v1642 = vld [vmem:[#allocation11 + $0x18] sm:$0xf]
    %v1643 = vld [vmem:[#allocation11 + $0x1c] sm:$0xf]
    %v1644 = vld [vmem:[#allocation11 + $0x20] sm:$0xf]
    %v1645 = vld [vmem:[#allocation11 + $0x24] sm:$0xf]
    %v1646 = vld [vmem:[#allocation11 + $0x28] sm:$0xf]
    %v1647 = vld [vmem:[#allocation11 + $0x2c] sm:$0xf]
    %v1648 = vld [vmem:[#allocation11 + $0x30] sm:$0xf]
    %v1649 = vld [vmem:[#allocation11 + $0x34] sm:$0xf]
    %v1650 = vld [vmem:[#allocation11 + $0x38] sm:$0xf]
    %v1651 = vld [vmem:[#allocation11 + $0x3c] sm:$0xf]
    %v1652 = vld [vmem:[%s10] sm:$0x1]
    %v1654 = vperm.slane %v1652, 0
    %v1672 = vunpack.c.l.b16 %v1636
    %v1673 = vunpack.c.l.b16 %v1637
    %v1674 = vunpack.c.l.b16 %v1638
    %v1675 = vunpack.c.l.b16 %v1639
    %v1676 = vunpack.c.l.b16 %v1640
    %v1677 = vunpack.c.l.b16 %v1641
    %v1678 = vunpack.c.l.b16 %v1642
    %v1679 = vunpack.c.l.b16 %v1643
    %v1680 = vunpack.c.l.b16 %v1644
    %v1681 = vunpack.c.l.b16 %v1645
    %v1682 = vunpack.c.l.b16 %v1646
    %v1683 = vunpack.c.l.b16 %v1647
    %v1684 = vunpack.c.l.b16 %v1648
    %v1685 = vunpack.c.l.b16 %v1649
    %v1686 = vunpack.c.l.b16 %v1650
    %v1687 = vunpack.c.l.b16 %v1651
    %v1688 = vpack.c.b16 %v1673, %v1672
    %v1689 = vpack.c.b16 %v1675, %v1674
    %v1690 = vpack.c.b16 %v1677, %v1676
    %v1691 = vpack.c.b16 %v1679, %v1678
    %v1692 = vpack.c.b16 %v1681, %v1680
    %v1693 = vpack.c.b16 %v1683, %v1682
    %v1694 = vpack.c.b16 %v1685, %v1684
    %v1695 = vpack.c.b16 %v1687, %v1686
    %1704 = vmatpush.bf16.msra.mxu0 %v1695
    %1705 = vmatpush.bf16.msra.mxu0 %v1694
    %1706 = vmatpush.bf16.msra.mxu0 %v1693
    %1707 = vmatpush.bf16.msra.mxu0 %v1692
    %1708 = vmatpush.bf16.msra.mxu0 %v1691
    %1709 = vmatpush.bf16.msra.mxu0 %v1690
    %1710 = vmatpush.bf16.msra.mxu0 %v1689
    %1711 = vmatpush.bf16.msra.mxu0 %v1688
    %1712 = vmatmul.bf16.gmra.mxu0 %v1620
    %v1713 = vpop.f32.mrf.mxu0
    %v1714 = vadd.f32 %v1654, %v1713
    %v1715 = vpop.f32.mrf.mxu0
    %v1716 = vadd.f32 %v1654, %v1715
    %1717 = vmatmul.bf16.gmra.mxu0 %v1621
    %v1718 = vpop.f32.mrf.mxu0
    %v1719 = vadd.f32 %v1654, %v1718
    %v1720 = vpop.f32.mrf.mxu0
    %v1721 = vadd.f32 %v1654, %v1720
    %1722 = vmatmul.bf16.gmra.mxu0 %v1622
    %v1723 = vpop.f32.mrf.mxu0
    %v1724 = vadd.f32 %v1654, %v1723
    %v1725 = vpop.f32.mrf.mxu0
    %v1726 = vadd.f32 %v1654, %v1725
    %1727 = vmatmul.bf16.gmra.mxu0 %v1623
    %v1728 = vpop.f32.mrf.mxu0
    %v1729 = vadd.f32 %v1654, %v1728
    %v1730 = vpop.f32.mrf.mxu0
    %v1731 = vadd.f32 %v1654, %v1730
    %1732 = vmatmul.bf16.gmra.mxu0 %v1624
    %v1733 = vpop.f32.mrf.mxu0
    %v1734 = vadd.f32 %v1654, %v1733
    %v1735 = vpop.f32.mrf.mxu0
    %v1736 = vadd.f32 %v1654, %v1735
    %1737 = vmatmul.bf16.gmra.mxu0 %v1625
    %v1738 = vpop.f32.mrf.mxu0
    %v1739 = vadd.f32 %v1654, %v1738
    %v1740 = vpop.f32.mrf.mxu0
    %v1741 = vadd.f32 %v1654, %v1740
    %1742 = vmatmul.bf16.gmra.mxu0 %v1626
    %v1743 = vpop.f32.mrf.mxu0
    %v1744 = vadd.f32 %v1654, %v1743
    %v1745 = vpop.f32.mrf.mxu0
    %v1746 = vadd.f32 %v1654, %v1745
    %1747 = vmatmul.bf16.gmra.mxu0 %v1627
    %v1748 = vpop.f32.mrf.mxu0
    %v1749 = vadd.f32 %v1654, %v1748
    %v1750 = vpop.f32.mrf.mxu0
    %v1751 = vadd.f32 %v1654, %v1750
    %1752 = vmatmul.bf16.gmra.mxu0 %v1628
    %v1753 = vpop.f32.mrf.mxu0
    %v1754 = vadd.f32 %v1654, %v1753
    %v1755 = vpop.f32.mrf.mxu0
    %v1756 = vadd.f32 %v1654, %v1755
    %1757 = vmatmul.bf16.gmra.mxu0 %v1629
    %v1758 = vpop.f32.mrf.mxu0
    %v1759 = vadd.f32 %v1654, %v1758
    %v1760 = vpop.f32.mrf.mxu0
    %v1761 = vadd.f32 %v1654, %v1760
    %1762 = vmatmul.bf16.gmra.mxu0 %v1630
    %v1763 = vpop.f32.mrf.mxu0
    %v1764 = vadd.f32 %v1654, %v1763
    %v1765 = vpop.f32.mrf.mxu0
    %v1766 = vadd.f32 %v1654, %v1765
    %1767 = vmatmul.bf16.gmra.mxu0 %v1631
    %v1768 = vpop.f32.mrf.mxu0
    %v1769 = vadd.f32 %v1654, %v1768
    %v1770 = vpop.f32.mrf.mxu0
    %v1771 = vadd.f32 %v1654, %v1770
    %1772 = vmatmul.bf16.gmra.mxu0 %v1632
    %v1773 = vpop.f32.mrf.mxu0
    %v1774 = vadd.f32 %v1654, %v1773
    %v1775 = vpop.f32.mrf.mxu0
    %v1776 = vadd.f32 %v1654, %v1775
    %1777 = vmatmul.bf16.gmra.mxu0 %v1633
    %v1778 = vpop.f32.mrf.mxu0
    %v1779 = vadd.f32 %v1654, %v1778
    %v1780 = vpop.f32.mrf.mxu0
    %v1781 = vadd.f32 %v1654, %v1780
    %1782 = vmatmul.bf16.gmra.mxu0 %v1634
    %v1783 = vpop.f32.mrf.mxu0
    %v1784 = vadd.f32 %v1654, %v1783
    %v1785 = vpop.f32.mrf.mxu0
    %v1786 = vadd.f32 %v1654, %v1785
    %1787 = vmatmul.bf16.gmra.mxu0 %v1635
    %v1788 = vpop.f32.mrf.mxu0
    %v1789 = vadd.f32 %v1654, %v1788
    %v1790 = vpop.f32.mrf.mxu0
    %v1791 = vadd.f32 %v1654, %v1790
    %1792 = vdwg.mxu0
    %v1793 = vmul.f32 %v1714, 0.5
    %v1794 = vmul.f32 %v1716, 0.5
    %v1795 = vmul.f32 %v1719, 0.5
    %v1796 = vmul.f32 %v1721, 0.5
    %v1797 = vmul.f32 %v1724, 0.5
    %v1798 = vmul.f32 %v1726, 0.5
    %v1799 = vmul.f32 %v1729, 0.5
    %v1800 = vmul.f32 %v1731, 0.5
    %v1801 = vmul.f32 %v1734, 0.5
    %v1802 = vmul.f32 %v1736, 0.5
    %v1803 = vmul.f32 %v1739, 0.5
    %v1804 = vmul.f32 %v1741, 0.5
    %v1805 = vmul.f32 %v1744, 0.5
    %v1806 = vmul.f32 %v1746, 0.5
    %v1807 = vmul.f32 %v1749, 0.5
    %v1808 = vmul.f32 %v1751, 0.5
    %v1809 = vmul.f32 %v1754, 0.5
    %v1810 = vmul.f32 %v1756, 0.5
    %v1811 = vmul.f32 %v1759, 0.5
    %v1812 = vmul.f32 %v1761, 0.5
    %v1813 = vmul.f32 %v1764, 0.5
    %v1814 = vmul.f32 %v1766, 0.5
    %v1815 = vmul.f32 %v1769, 0.5
    %v1816 = vmul.f32 %v1771, 0.5
    %v1817 = vmul.f32 %v1774, 0.5
    %v1818 = vmul.f32 %v1776, 0.5
    %v1819 = vmul.f32 %v1779, 0.5
    %v1820 = vmul.f32 %v1781, 0.5
    %v1821 = vmul.f32 %v1784, 0.5
    %v1822 = vmul.f32 %v1786, 0.5
    %v1823 = vmul.f32 %v1789, 0.5
    %v1824 = vmul.f32 %v1791, 0.5
    %v1825 = vtanh.pop %v1793
    %v1826 = vtanh.pop %v1794
    %v1827 = vtanh.pop %v1795
    %v1828 = vtanh.pop %v1796
    %v1829 = vtanh.pop %v1797
    %v1830 = vtanh.pop %v1798
    %v1831 = vtanh.pop %v1799
    %v1832 = vtanh.pop %v1800
    %v1833 = vtanh.pop %v1801
    %v1834 = vtanh.pop %v1802
    %v1835 = vtanh.pop %v1803
    %v1836 = vtanh.pop %v1804
    %v1837 = vtanh.pop %v1805
    %v1838 = vtanh.pop %v1806
    %v1839 = vtanh.pop %v1807
    %v1840 = vtanh.pop %v1808
    %v1841 = vtanh.pop %v1809
    %v1842 = vtanh.pop %v1810
    %v1843 = vtanh.pop %v1811
    %v1844 = vtanh.pop %v1812
    %v1845 = vtanh.pop %v1813
    %v1846 = vtanh.pop %v1814
    %v1847 = vtanh.pop %v1815
    %v1848 = vtanh.pop %v1816
    %v1849 = vtanh.pop %v1817
    %v1850 = vtanh.pop %v1818
    %v1851 = vtanh.pop %v1819
    %v1852 = vtanh.pop %v1820
    %v1853 = vtanh.pop %v1821
    %v1854 = vtanh.pop %v1822
    %v1855 = vtanh.pop %v1823
    %v1856 = vtanh.pop %v1824
    %v1857 = vadd.f32 %v1825, 1.0
    %v1858 = vadd.f32 %v1826, 1.0
    %v1859 = vadd.f32 %v1827, 1.0
    %v1860 = vadd.f32 %v1828, 1.0
    %v1861 = vadd.f32 %v1829, 1.0
    %v1862 = vadd.f32 %v1830, 1.0
    %v1863 = vadd.f32 %v1831, 1.0
    %v1864 = vadd.f32 %v1832, 1.0
    %v1865 = vadd.f32 %v1833, 1.0
    %v1866 = vadd.f32 %v1834, 1.0
    %v1867 = vadd.f32 %v1835, 1.0
    %v1868 = vadd.f32 %v1836, 1.0
    %v1869 = vadd.f32 %v1837, 1.0
    %v1870 = vadd.f32 %v1838, 1.0
    %v1871 = vadd.f32 %v1839, 1.0
    %v1872 = vadd.f32 %v1840, 1.0
    %v1873 = vadd.f32 %v1841, 1.0
    %v1874 = vadd.f32 %v1842, 1.0
    %v1875 = vadd.f32 %v1843, 1.0
    %v1876 = vadd.f32 %v1844, 1.0
    %v1877 = vadd.f32 %v1845, 1.0
    %v1878 = vadd.f32 %v1846, 1.0
    %v1879 = vadd.f32 %v1847, 1.0
    %v1880 = vadd.f32 %v1848, 1.0
    %v1881 = vadd.f32 %v1849, 1.0
    %v1882 = vadd.f32 %v1850, 1.0
    %v1883 = vadd.f32 %v1851, 1.0
    %v1884 = vadd.f32 %v1852, 1.0
    %v1885 = vadd.f32 %v1853, 1.0
    %v1886 = vadd.f32 %v1854, 1.0
    %v1887 = vadd.f32 %v1855, 1.0
    %v1888 = vadd.f32 %v1856, 1.0
    %v1889 = vmul.f32 %v1857, 0.5
    %v1890 = vmul.f32 %v1858, 0.5
    %v1891 = vmul.f32 %v1859, 0.5
    %v1892 = vmul.f32 %v1860, 0.5
    %v1893 = vmul.f32 %v1861, 0.5
    %v1894 = vmul.f32 %v1862, 0.5
    %v1895 = vmul.f32 %v1863, 0.5
    %v1896 = vmul.f32 %v1864, 0.5
    %v1897 = vmul.f32 %v1865, 0.5
    %v1898 = vmul.f32 %v1866, 0.5
    %v1899 = vmul.f32 %v1867, 0.5
    %v1900 = vmul.f32 %v1868, 0.5
    %v1901 = vmul.f32 %v1869, 0.5
    %v1902 = vmul.f32 %v1870, 0.5
    %v1903 = vmul.f32 %v1871, 0.5
    %v1904 = vmul.f32 %v1872, 0.5
    %v1905 = vmul.f32 %v1873, 0.5
    %v1906 = vmul.f32 %v1874, 0.5
    %v1907 = vmul.f32 %v1875, 0.5
    %v1908 = vmul.f32 %v1876, 0.5
    %v1909 = vmul.f32 %v1877, 0.5
    %v1910 = vmul.f32 %v1878, 0.5
    %v1911 = vmul.f32 %v1879, 0.5
    %v1912 = vmul.f32 %v1880, 0.5
    %v1913 = vmul.f32 %v1881, 0.5
    %v1914 = vmul.f32 %v1882, 0.5
    %v1915 = vmul.f32 %v1883, 0.5
    %v1916 = vmul.f32 %v1884, 0.5
    %v1917 = vmul.f32 %v1885, 0.5
    %v1918 = vmul.f32 %v1886, 0.5
    %v1919 = vmul.f32 %v1887, 0.5
    %v1920 = vmul.f32 %v1888, 0.5
    %v1921 = vmul.f32 %v1714, %v1889
    %v1922 = vmul.f32 %v1716, %v1890
    %v1923 = vmul.f32 %v1719, %v1891
    %v1924 = vmul.f32 %v1721, %v1892
    %v1925 = vmul.f32 %v1724, %v1893
    %v1926 = vmul.f32 %v1726, %v1894
    %v1927 = vmul.f32 %v1729, %v1895
    %v1928 = vmul.f32 %v1731, %v1896
    %v1929 = vmul.f32 %v1734, %v1897
    %v1930 = vmul.f32 %v1736, %v1898
    %v1931 = vmul.f32 %v1739, %v1899
    %v1932 = vmul.f32 %v1741, %v1900
    %v1933 = vmul.f32 %v1744, %v1901
    %v1934 = vmul.f32 %v1746, %v1902
    %v1935 = vmul.f32 %v1749, %v1903
    %v1936 = vmul.f32 %v1751, %v1904
    %v1937 = vmul.f32 %v1754, %v1905
    %v1938 = vmul.f32 %v1756, %v1906
    %v1939 = vmul.f32 %v1759, %v1907
    %v1940 = vmul.f32 %v1761, %v1908
    %v1941 = vmul.f32 %v1764, %v1909
    %v1942 = vmul.f32 %v1766, %v1910
    %v1943 = vmul.f32 %v1769, %v1911
    %v1944 = vmul.f32 %v1771, %v1912
    %v1945 = vmul.f32 %v1774, %v1913
    %v1946 = vmul.f32 %v1776, %v1914
    %v1947 = vmul.f32 %v1779, %v1915
    %v1948 = vmul.f32 %v1781, %v1916
    %v1949 = vmul.f32 %v1784, %v1917
    %v1950 = vmul.f32 %v1786, %v1918
    %v1951 = vmul.f32 %v1789, %v1919
    %v1952 = vmul.f32 %v1791, %v1920
    %v1953 = vpack.c.bf16 %v1922, %v1921
    %v1954 = vpack.c.bf16 %v1924, %v1923
    %v1955 = vpack.c.bf16 %v1926, %v1925
    %v1956 = vpack.c.bf16 %v1928, %v1927
    %v1957 = vpack.c.bf16 %v1930, %v1929
    %v1958 = vpack.c.bf16 %v1932, %v1931
    %v1959 = vpack.c.bf16 %v1934, %v1933
    %v1960 = vpack.c.bf16 %v1936, %v1935
    %v1961 = vpack.c.bf16 %v1938, %v1937
    %v1962 = vpack.c.bf16 %v1940, %v1939
    %v1963 = vpack.c.bf16 %v1942, %v1941
    %v1964 = vpack.c.bf16 %v1944, %v1943
    %v1965 = vpack.c.bf16 %v1946, %v1945
    %v1966 = vpack.c.bf16 %v1948, %v1947
    %v1967 = vpack.c.bf16 %v1950, %v1949
    %v1968 = vpack.c.bf16 %v1952, %v1951
    %v1969 = vld [vmem:[#allocation13] sm:$0xf]
    %v1970 = vld [vmem:[#allocation13 + $0x4] sm:$0xf]
    %v1971 = vld [vmem:[#allocation13 + $0x8] sm:$0xf]
    %v1972 = vld [vmem:[#allocation13 + $0xc] sm:$0xf]
    %v1973 = vld [vmem:[#allocation13 + $0x10] sm:$0xf]
    %v1974 = vld [vmem:[#allocation13 + $0x14] sm:$0xf]
    %v1975 = vld [vmem:[#allocation13 + $0x18] sm:$0xf]
    %v1976 = vld [vmem:[#allocation13 + $0x1c] sm:$0xf]
    %v1977 = vld [vmem:[#allocation13 + $0x20] sm:$0xf]
    %v1978 = vld [vmem:[#allocation13 + $0x24] sm:$0xf]
    %v1979 = vld [vmem:[#allocation13 + $0x28] sm:$0xf]
    %v1980 = vld [vmem:[#allocation13 + $0x2c] sm:$0xf]
    %v1981 = vld [vmem:[#allocation13 + $0x30] sm:$0xf]
    %v1982 = vld [vmem:[#allocation13 + $0x34] sm:$0xf]
    %v1983 = vld [vmem:[#allocation13 + $0x38] sm:$0xf]
    %v1984 = vld [vmem:[#allocation13 + $0x3c] sm:$0xf]
    %v1985 = vld [vmem:[%s12] sm:$0x1]
    %v1987 = vperm.slane %v1985, 0
    %v2005 = vunpack.c.l.b16 %v1969
    %v2006 = vunpack.c.l.b16 %v1970
    %v2007 = vunpack.c.l.b16 %v1971
    %v2008 = vunpack.c.l.b16 %v1972
    %v2009 = vunpack.c.l.b16 %v1973
    %v2010 = vunpack.c.l.b16 %v1974
    %v2011 = vunpack.c.l.b16 %v1975
    %v2012 = vunpack.c.l.b16 %v1976
    %v2013 = vunpack.c.l.b16 %v1977
    %v2014 = vunpack.c.l.b16 %v1978
    %v2015 = vunpack.c.l.b16 %v1979
    %v2016 = vunpack.c.l.b16 %v1980
    %v2017 = vunpack.c.l.b16 %v1981
    %v2018 = vunpack.c.l.b16 %v1982
    %v2019 = vunpack.c.l.b16 %v1983
    %v2020 = vunpack.c.l.b16 %v1984
    %v2021 = vpack.c.b16 %v2006, %v2005
    %v2022 = vpack.c.b16 %v2008, %v2007
    %v2023 = vpack.c.b16 %v2010, %v2009
    %v2024 = vpack.c.b16 %v2012, %v2011
    %v2025 = vpack.c.b16 %v2014, %v2013
    %v2026 = vpack.c.b16 %v2016, %v2015
    %v2027 = vpack.c.b16 %v2018, %v2017
    %v2028 = vpack.c.b16 %v2020, %v2019
    %2037 = vmatpush.bf16.msra.mxu0 %v2028
    %2038 = vmatpush.bf16.msra.mxu0 %v2027
    %2039 = vmatpush.bf16.msra.mxu0 %v2026
    %2040 = vmatpush.bf16.msra.mxu0 %v2025
    %2041 = vmatpush.bf16.msra.mxu0 %v2024
    %2042 = vmatpush.bf16.msra.mxu0 %v2023
    %2043 = vmatpush.bf16.msra.mxu0 %v2022
    %2044 = vmatpush.bf16.msra.mxu0 %v2021
    %2045 = vmatmul.bf16.gmra.mxu0 %v1953
    %v2046 = vpop.f32.mrf.mxu0
    %v2047 = vadd.f32 %v1987, %v2046
    %v2048 = vpop.f32.mrf.mxu0
    %v2049 = vadd.f32 %v1987, %v2048
    %2050 = vmatmul.bf16.gmra.mxu0 %v1954
    %v2051 = vpop.f32.mrf.mxu0
    %v2052 = vadd.f32 %v1987, %v2051
    %v2053 = vpop.f32.mrf.mxu0
    %v2054 = vadd.f32 %v1987, %v2053
    %2055 = vmatmul.bf16.gmra.mxu0 %v1955
    %v2056 = vpop.f32.mrf.mxu0
    %v2057 = vadd.f32 %v1987, %v2056
    %v2058 = vpop.f32.mrf.mxu0
    %v2059 = vadd.f32 %v1987, %v2058
    %2060 = vmatmul.bf16.gmra.mxu0 %v1956
    %v2061 = vpop.f32.mrf.mxu0
    %v2062 = vadd.f32 %v1987, %v2061
    %v2063 = vpop.f32.mrf.mxu0
    %v2064 = vadd.f32 %v1987, %v2063
    %2065 = vmatmul.bf16.gmra.mxu0 %v1957
    %v2066 = vpop.f32.mrf.mxu0
    %v2067 = vadd.f32 %v1987, %v2066
    %v2068 = vpop.f32.mrf.mxu0
    %v2069 = vadd.f32 %v1987, %v2068
    %2070 = vmatmul.bf16.gmra.mxu0 %v1958
    %v2071 = vpop.f32.mrf.mxu0
    %v2072 = vadd.f32 %v1987, %v2071
    %v2073 = vpop.f32.mrf.mxu0
    %v2074 = vadd.f32 %v1987, %v2073
    %2075 = vmatmul.bf16.gmra.mxu0 %v1959
    %v2076 = vpop.f32.mrf.mxu0
    %v2077 = vadd.f32 %v1987, %v2076
    %v2078 = vpop.f32.mrf.mxu0
    %v2079 = vadd.f32 %v1987, %v2078
    %2080 = vmatmul.bf16.gmra.mxu0 %v1960
    %v2081 = vpop.f32.mrf.mxu0
    %v2082 = vadd.f32 %v1987, %v2081
    %v2083 = vpop.f32.mrf.mxu0
    %v2084 = vadd.f32 %v1987, %v2083
    %2085 = vmatmul.bf16.gmra.mxu0 %v1961
    %v2086 = vpop.f32.mrf.mxu0
    %v2087 = vadd.f32 %v1987, %v2086
    %v2088 = vpop.f32.mrf.mxu0
    %v2089 = vadd.f32 %v1987, %v2088
    %2090 = vmatmul.bf16.gmra.mxu0 %v1962
    %v2091 = vpop.f32.mrf.mxu0
    %v2092 = vadd.f32 %v1987, %v2091
    %v2093 = vpop.f32.mrf.mxu0
    %v2094 = vadd.f32 %v1987, %v2093
    %2095 = vmatmul.bf16.gmra.mxu0 %v1963
    %v2096 = vpop.f32.mrf.mxu0
    %v2097 = vadd.f32 %v1987, %v2096
    %v2098 = vpop.f32.mrf.mxu0
    %v2099 = vadd.f32 %v1987, %v2098
    %2100 = vmatmul.bf16.gmra.mxu0 %v1964
    %v2101 = vpop.f32.mrf.mxu0
    %v2102 = vadd.f32 %v1987, %v2101
    %v2103 = vpop.f32.mrf.mxu0
    %v2104 = vadd.f32 %v1987, %v2103
    %2105 = vmatmul.bf16.gmra.mxu0 %v1965
    %v2106 = vpop.f32.mrf.mxu0
    %v2107 = vadd.f32 %v1987, %v2106
    %v2108 = vpop.f32.mrf.mxu0
    %v2109 = vadd.f32 %v1987, %v2108
    %2110 = vmatmul.bf16.gmra.mxu0 %v1966
    %v2111 = vpop.f32.mrf.mxu0
    %v2112 = vadd.f32 %v1987, %v2111
    %v2113 = vpop.f32.mrf.mxu0
    %v2114 = vadd.f32 %v1987, %v2113
    %2115 = vmatmul.bf16.gmra.mxu0 %v1967
    %v2116 = vpop.f32.mrf.mxu0
    %v2117 = vadd.f32 %v1987, %v2116
    %v2118 = vpop.f32.mrf.mxu0
    %v2119 = vadd.f32 %v1987, %v2118
    %2120 = vmatmul.bf16.gmra.mxu0 %v1968
    %v2121 = vpop.f32.mrf.mxu0
    %v2122 = vadd.f32 %v1987, %v2121
    %v2123 = vpop.f32.mrf.mxu0
    %v2124 = vadd.f32 %v1987, %v2123
    %2125 = vdwg.mxu0
    %v2126 = vmul.f32 %v2047, 0.5
    %v2127 = vmul.f32 %v2049, 0.5
    %v2128 = vmul.f32 %v2052, 0.5
    %v2129 = vmul.f32 %v2054, 0.5
    %v2130 = vmul.f32 %v2057, 0.5
    %v2131 = vmul.f32 %v2059, 0.5
    %v2132 = vmul.f32 %v2062, 0.5
    %v2133 = vmul.f32 %v2064, 0.5
    %v2134 = vmul.f32 %v2067, 0.5
    %v2135 = vmul.f32 %v2069, 0.5
    %v2136 = vmul.f32 %v2072, 0.5
    %v2137 = vmul.f32 %v2074, 0.5
    %v2138 = vmul.f32 %v2077, 0.5
    %v2139 = vmul.f32 %v2079, 0.5
    %v2140 = vmul.f32 %v2082, 0.5
    %v2141 = vmul.f32 %v2084, 0.5
    %v2142 = vmul.f32 %v2087, 0.5
    %v2143 = vmul.f32 %v2089, 0.5
    %v2144 = vmul.f32 %v2092, 0.5
    %v2145 = vmul.f32 %v2094, 0.5
    %v2146 = vmul.f32 %v2097, 0.5
    %v2147 = vmul.f32 %v2099, 0.5
    %v2148 = vmul.f32 %v2102, 0.5
    %v2149 = vmul.f32 %v2104, 0.5
    %v2150 = vmul.f32 %v2107, 0.5
    %v2151 = vmul.f32 %v2109, 0.5
    %v2152 = vmul.f32 %v2112, 0.5
    %v2153 = vmul.f32 %v2114, 0.5
    %v2154 = vmul.f32 %v2117, 0.5
    %v2155 = vmul.f32 %v2119, 0.5
    %v2156 = vmul.f32 %v2122, 0.5
    %v2157 = vmul.f32 %v2124, 0.5
    %v2158 = vtanh.pop %v2126
    %v2159 = vtanh.pop %v2127
    %v2160 = vtanh.pop %v2128
    %v2161 = vtanh.pop %v2129
    %v2162 = vtanh.pop %v2130
    %v2163 = vtanh.pop %v2131
    %v2164 = vtanh.pop %v2132
    %v2165 = vtanh.pop %v2133
    %v2166 = vtanh.pop %v2134
    %v2167 = vtanh.pop %v2135
    %v2168 = vtanh.pop %v2136
    %v2169 = vtanh.pop %v2137
    %v2170 = vtanh.pop %v2138
    %v2171 = vtanh.pop %v2139
    %v2172 = vtanh.pop %v2140
    %v2173 = vtanh.pop %v2141
    %v2174 = vtanh.pop %v2142
    %v2175 = vtanh.pop %v2143
    %v2176 = vtanh.pop %v2144
    %v2177 = vtanh.pop %v2145
    %v2178 = vtanh.pop %v2146
    %v2179 = vtanh.pop %v2147
    %v2180 = vtanh.pop %v2148
    %v2181 = vtanh.pop %v2149
    %v2182 = vtanh.pop %v2150
    %v2183 = vtanh.pop %v2151
    %v2184 = vtanh.pop %v2152
    %v2185 = vtanh.pop %v2153
    %v2186 = vtanh.pop %v2154
    %v2187 = vtanh.pop %v2155
    %v2188 = vtanh.pop %v2156
    %v2189 = vtanh.pop %v2157
    %v2190 = vadd.f32 %v2158, 1.0
    %v2191 = vadd.f32 %v2159, 1.0
    %v2192 = vadd.f32 %v2160, 1.0
    %v2193 = vadd.f32 %v2161, 1.0
    %v2194 = vadd.f32 %v2162, 1.0
    %v2195 = vadd.f32 %v2163, 1.0
    %v2196 = vadd.f32 %v2164, 1.0
    %v2197 = vadd.f32 %v2165, 1.0
    %v2198 = vadd.f32 %v2166, 1.0
    %v2199 = vadd.f32 %v2167, 1.0
    %v2200 = vadd.f32 %v2168, 1.0
    %v2201 = vadd.f32 %v2169, 1.0
    %v2202 = vadd.f32 %v2170, 1.0
    %v2203 = vadd.f32 %v2171, 1.0
    %v2204 = vadd.f32 %v2172, 1.0
    %v2205 = vadd.f32 %v2173, 1.0
    %v2206 = vadd.f32 %v2174, 1.0
    %v2207 = vadd.f32 %v2175, 1.0
    %v2208 = vadd.f32 %v2176, 1.0
    %v2209 = vadd.f32 %v2177, 1.0
    %v2210 = vadd.f32 %v2178, 1.0
    %v2211 = vadd.f32 %v2179, 1.0
    %v2212 = vadd.f32 %v2180, 1.0
    %v2213 = vadd.f32 %v2181, 1.0
    %v2214 = vadd.f32 %v2182, 1.0
    %v2215 = vadd.f32 %v2183, 1.0
    %v2216 = vadd.f32 %v2184, 1.0
    %v2217 = vadd.f32 %v2185, 1.0
    %v2218 = vadd.f32 %v2186, 1.0
    %v2219 = vadd.f32 %v2187, 1.0
    %v2220 = vadd.f32 %v2188, 1.0
    %v2221 = vadd.f32 %v2189, 1.0
    %v2222 = vmul.f32 %v2190, 0.5
    %v2223 = vmul.f32 %v2191, 0.5
    %v2224 = vmul.f32 %v2192, 0.5
    %v2225 = vmul.f32 %v2193, 0.5
    %v2226 = vmul.f32 %v2194, 0.5
    %v2227 = vmul.f32 %v2195, 0.5
    %v2228 = vmul.f32 %v2196, 0.5
    %v2229 = vmul.f32 %v2197, 0.5
    %v2230 = vmul.f32 %v2198, 0.5
    %v2231 = vmul.f32 %v2199, 0.5
    %v2232 = vmul.f32 %v2200, 0.5
    %v2233 = vmul.f32 %v2201, 0.5
    %v2234 = vmul.f32 %v2202, 0.5
    %v2235 = vmul.f32 %v2203, 0.5
    %v2236 = vmul.f32 %v2204, 0.5
    %v2237 = vmul.f32 %v2205, 0.5
    %v2238 = vmul.f32 %v2206, 0.5
    %v2239 = vmul.f32 %v2207, 0.5
    %v2240 = vmul.f32 %v2208, 0.5
    %v2241 = vmul.f32 %v2209, 0.5
    %v2242 = vmul.f32 %v2210, 0.5
    %v2243 = vmul.f32 %v2211, 0.5
    %v2244 = vmul.f32 %v2212, 0.5
    %v2245 = vmul.f32 %v2213, 0.5
    %v2246 = vmul.f32 %v2214, 0.5
    %v2247 = vmul.f32 %v2215, 0.5
    %v2248 = vmul.f32 %v2216, 0.5
    %v2249 = vmul.f32 %v2217, 0.5
    %v2250 = vmul.f32 %v2218, 0.5
    %v2251 = vmul.f32 %v2219, 0.5
    %v2252 = vmul.f32 %v2220, 0.5
    %v2253 = vmul.f32 %v2221, 0.5
    %v2254 = vmul.f32 %v2047, %v2222
    %v2255 = vmul.f32 %v2049, %v2223
    %v2256 = vmul.f32 %v2052, %v2224
    %v2257 = vmul.f32 %v2054, %v2225
    %v2258 = vmul.f32 %v2057, %v2226
    %v2259 = vmul.f32 %v2059, %v2227
    %v2260 = vmul.f32 %v2062, %v2228
    %v2261 = vmul.f32 %v2064, %v2229
    %v2262 = vmul.f32 %v2067, %v2230
    %v2263 = vmul.f32 %v2069, %v2231
    %v2264 = vmul.f32 %v2072, %v2232
    %v2265 = vmul.f32 %v2074, %v2233
    %v2266 = vmul.f32 %v2077, %v2234
    %v2267 = vmul.f32 %v2079, %v2235
    %v2268 = vmul.f32 %v2082, %v2236
    %v2269 = vmul.f32 %v2084, %v2237
    %v2270 = vmul.f32 %v2087, %v2238
    %v2271 = vmul.f32 %v2089, %v2239
    %v2272 = vmul.f32 %v2092, %v2240
    %v2273 = vmul.f32 %v2094, %v2241
    %v2274 = vmul.f32 %v2097, %v2242
    %v2275 = vmul.f32 %v2099, %v2243
    %v2276 = vmul.f32 %v2102, %v2244
    %v2277 = vmul.f32 %v2104, %v2245
    %v2278 = vmul.f32 %v2107, %v2246
    %v2279 = vmul.f32 %v2109, %v2247
    %v2280 = vmul.f32 %v2112, %v2248
    %v2281 = vmul.f32 %v2114, %v2249
    %v2282 = vmul.f32 %v2117, %v2250
    %v2283 = vmul.f32 %v2119, %v2251
    %v2284 = vmul.f32 %v2122, %v2252
    %v2285 = vmul.f32 %v2124, %v2253
    %v2286 = vpack.c.bf16 %v2255, %v2254
    %v2287 = vpack.c.bf16 %v2257, %v2256
    %v2288 = vpack.c.bf16 %v2259, %v2258
    %v2289 = vpack.c.bf16 %v2261, %v2260
    %v2290 = vpack.c.bf16 %v2263, %v2262
    %v2291 = vpack.c.bf16 %v2265, %v2264
    %v2292 = vpack.c.bf16 %v2267, %v2266
    %v2293 = vpack.c.bf16 %v2269, %v2268
    %v2294 = vpack.c.bf16 %v2271, %v2270
    %v2295 = vpack.c.bf16 %v2273, %v2272
    %v2296 = vpack.c.bf16 %v2275, %v2274
    %v2297 = vpack.c.bf16 %v2277, %v2276
    %v2298 = vpack.c.bf16 %v2279, %v2278
    %v2299 = vpack.c.bf16 %v2281, %v2280
    %v2300 = vpack.c.bf16 %v2283, %v2282
    %v2301 = vpack.c.bf16 %v2285, %v2284
    %v2302 = vld [vmem:[#allocation14] sm:$0xf]
    %v2303 = vld [vmem:[#allocation14 + $0x4] sm:$0xf]
    %v2304 = vld [vmem:[#allocation14 + $0x8] sm:$0xf]
    %v2305 = vld [vmem:[#allocation14 + $0xc] sm:$0xf]
    %v2306 = vld [vmem:[#allocation14 + $0x10] sm:$0xf]
    %v2307 = vld [vmem:[#allocation14 + $0x14] sm:$0xf]
    %v2308 = vld [vmem:[#allocation14 + $0x18] sm:$0xf]
    %v2309 = vld [vmem:[#allocation14 + $0x1c] sm:$0xf]
    %v2310 = vld [vmem:[#allocation14 + $0x20] sm:$0xf]
    %v2311 = vld [vmem:[#allocation14 + $0x24] sm:$0xf]
    %v2312 = vld [vmem:[#allocation14 + $0x28] sm:$0xf]
    %v2313 = vld [vmem:[#allocation14 + $0x2c] sm:$0xf]
    %v2314 = vld [vmem:[#allocation14 + $0x30] sm:$0xf]
    %v2315 = vld [vmem:[#allocation14 + $0x34] sm:$0xf]
    %v2316 = vld [vmem:[#allocation14 + $0x38] sm:$0xf]
    %v2317 = vld [vmem:[#allocation14 + $0x3c] sm:$0xf]
    %v2318 = vld [vmem:[%s14] sm:$0x1]
    %v2320 = vperm.slane %v2318, 0
    %v2338 = vunpack.c.l.b16 %v2302
    %v2339 = vunpack.c.l.b16 %v2303
    %v2340 = vunpack.c.l.b16 %v2304
    %v2341 = vunpack.c.l.b16 %v2305
    %v2342 = vunpack.c.l.b16 %v2306
    %v2343 = vunpack.c.l.b16 %v2307
    %v2344 = vunpack.c.l.b16 %v2308
    %v2345 = vunpack.c.l.b16 %v2309
    %v2346 = vunpack.c.l.b16 %v2310
    %v2347 = vunpack.c.l.b16 %v2311
    %v2348 = vunpack.c.l.b16 %v2312
    %v2349 = vunpack.c.l.b16 %v2313
    %v2350 = vunpack.c.l.b16 %v2314
    %v2351 = vunpack.c.l.b16 %v2315
    %v2352 = vunpack.c.l.b16 %v2316
    %v2353 = vunpack.c.l.b16 %v2317
    %v2354 = vpack.c.b16 %v2339, %v2338
    %v2355 = vpack.c.b16 %v2341, %v2340
    %v2356 = vpack.c.b16 %v2343, %v2342
    %v2357 = vpack.c.b16 %v2345, %v2344
    %v2358 = vpack.c.b16 %v2347, %v2346
    %v2359 = vpack.c.b16 %v2349, %v2348
    %v2360 = vpack.c.b16 %v2351, %v2350
    %v2361 = vpack.c.b16 %v2353, %v2352
    %2370 = vmatpush.bf16.msra.mxu0 %v2361
    %2371 = vmatpush.bf16.msra.mxu0 %v2360
    %2372 = vmatpush.bf16.msra.mxu0 %v2359
    %2373 = vmatpush.bf16.msra.mxu0 %v2358
    %2374 = vmatpush.bf16.msra.mxu0 %v2357
    %2375 = vmatpush.bf16.msra.mxu0 %v2356
    %2376 = vmatpush.bf16.msra.mxu0 %v2355
    %2377 = vmatpush.bf16.msra.mxu0 %v2354
    %2378 = vmatmul.bf16.gmra.mxu0 %v2286
    %v2379 = vpop.f32.mrf.mxu0
    %v2380 = vadd.f32 %v2320, %v2379
    %v2381 = vpop.f32.mrf.mxu0
    %v2382 = vadd.f32 %v2320, %v2381
    %2383 = vmatmul.bf16.gmra.mxu0 %v2287
    %v2384 = vpop.f32.mrf.mxu0
    %v2385 = vadd.f32 %v2320, %v2384
    %v2386 = vpop.f32.mrf.mxu0
    %v2387 = vadd.f32 %v2320, %v2386
    %2388 = vmatmul.bf16.gmra.mxu0 %v2288
    %v2389 = vpop.f32.mrf.mxu0
    %v2390 = vadd.f32 %v2320, %v2389
    %v2391 = vpop.f32.mrf.mxu0
    %v2392 = vadd.f32 %v2320, %v2391
    %2393 = vmatmul.bf16.gmra.mxu0 %v2289
    %v2394 = vpop.f32.mrf.mxu0
    %v2395 = vadd.f32 %v2320, %v2394
    %v2396 = vpop.f32.mrf.mxu0
    %v2397 = vadd.f32 %v2320, %v2396
    %2398 = vmatmul.bf16.gmra.mxu0 %v2290
    %v2399 = vpop.f32.mrf.mxu0
    %v2400 = vadd.f32 %v2320, %v2399
    %v2401 = vpop.f32.mrf.mxu0
    %v2402 = vadd.f32 %v2320, %v2401
    %2403 = vmatmul.bf16.gmra.mxu0 %v2291
    %v2404 = vpop.f32.mrf.mxu0
    %v2405 = vadd.f32 %v2320, %v2404
    %v2406 = vpop.f32.mrf.mxu0
    %v2407 = vadd.f32 %v2320, %v2406
    %2408 = vmatmul.bf16.gmra.mxu0 %v2292
    %v2409 = vpop.f32.mrf.mxu0
    %v2410 = vadd.f32 %v2320, %v2409
    %v2411 = vpop.f32.mrf.mxu0
    %v2412 = vadd.f32 %v2320, %v2411
    %2413 = vmatmul.bf16.gmra.mxu0 %v2293
    %v2414 = vpop.f32.mrf.mxu0
    %v2415 = vadd.f32 %v2320, %v2414
    %v2416 = vpop.f32.mrf.mxu0
    %v2417 = vadd.f32 %v2320, %v2416
    %2418 = vmatmul.bf16.gmra.mxu0 %v2294
    %v2419 = vpop.f32.mrf.mxu0
    %v2420 = vadd.f32 %v2320, %v2419
    %v2421 = vpop.f32.mrf.mxu0
    %v2422 = vadd.f32 %v2320, %v2421
    %2423 = vmatmul.bf16.gmra.mxu0 %v2295
    %v2424 = vpop.f32.mrf.mxu0
    %v2425 = vadd.f32 %v2320, %v2424
    %v2426 = vpop.f32.mrf.mxu0
    %v2427 = vadd.f32 %v2320, %v2426
    %2428 = vmatmul.bf16.gmra.mxu0 %v2296
    %v2429 = vpop.f32.mrf.mxu0
    %v2430 = vadd.f32 %v2320, %v2429
    %v2431 = vpop.f32.mrf.mxu0
    %v2432 = vadd.f32 %v2320, %v2431
    %2433 = vmatmul.bf16.gmra.mxu0 %v2297
    %v2434 = vpop.f32.mrf.mxu0
    %v2435 = vadd.f32 %v2320, %v2434
    %v2436 = vpop.f32.mrf.mxu0
    %v2437 = vadd.f32 %v2320, %v2436
    %2438 = vmatmul.bf16.gmra.mxu0 %v2298
    %v2439 = vpop.f32.mrf.mxu0
    %v2440 = vadd.f32 %v2320, %v2439
    %v2441 = vpop.f32.mrf.mxu0
    %v2442 = vadd.f32 %v2320, %v2441
    %2443 = vmatmul.bf16.gmra.mxu0 %v2299
    %v2444 = vpop.f32.mrf.mxu0
    %v2445 = vadd.f32 %v2320, %v2444
    %v2446 = vpop.f32.mrf.mxu0
    %v2447 = vadd.f32 %v2320, %v2446
    %2448 = vmatmul.bf16.gmra.mxu0 %v2300
    %v2449 = vpop.f32.mrf.mxu0
    %v2450 = vadd.f32 %v2320, %v2449
    %v2451 = vpop.f32.mrf.mxu0
    %v2452 = vadd.f32 %v2320, %v2451
    %2453 = vmatmul.bf16.gmra.mxu0 %v2301
    %v2454 = vpop.f32.mrf.mxu0
    %v2455 = vadd.f32 %v2320, %v2454
    %v2456 = vpop.f32.mrf.mxu0
    %v2457 = vadd.f32 %v2320, %v2456
    %2458 = vdwg.mxu0
    %v2459 = vmul.f32 %v2380, 0.5
    %v2460 = vmul.f32 %v2382, 0.5
    %v2461 = vmul.f32 %v2385, 0.5
    %v2462 = vmul.f32 %v2387, 0.5
    %v2463 = vmul.f32 %v2390, 0.5
    %v2464 = vmul.f32 %v2392, 0.5
    %v2465 = vmul.f32 %v2395, 0.5
    %v2466 = vmul.f32 %v2397, 0.5
    %v2467 = vmul.f32 %v2400, 0.5
    %v2468 = vmul.f32 %v2402, 0.5
    %v2469 = vmul.f32 %v2405, 0.5
    %v2470 = vmul.f32 %v2407, 0.5
    %v2471 = vmul.f32 %v2410, 0.5
    %v2472 = vmul.f32 %v2412, 0.5
    %v2473 = vmul.f32 %v2415, 0.5
    %v2474 = vmul.f32 %v2417, 0.5
    %v2475 = vmul.f32 %v2420, 0.5
    %v2476 = vmul.f32 %v2422, 0.5
    %v2477 = vmul.f32 %v2425, 0.5
    %v2478 = vmul.f32 %v2427, 0.5
    %v2479 = vmul.f32 %v2430, 0.5
    %v2480 = vmul.f32 %v2432, 0.5
    %v2481 = vmul.f32 %v2435, 0.5
    %v2482 = vmul.f32 %v2437, 0.5
    %v2483 = vmul.f32 %v2440, 0.5
    %v2484 = vmul.f32 %v2442, 0.5
    %v2485 = vmul.f32 %v2445, 0.5
    %v2486 = vmul.f32 %v2447, 0.5
    %v2487 = vmul.f32 %v2450, 0.5
    %v2488 = vmul.f32 %v2452, 0.5
    %v2489 = vmul.f32 %v2455, 0.5
    %v2490 = vmul.f32 %v2457, 0.5
    %v2491 = vtanh.pop %v2459
    %v2492 = vtanh.pop %v2460
    %v2493 = vtanh.pop %v2461
    %v2494 = vtanh.pop %v2462
    %v2495 = vtanh.pop %v2463
    %v2496 = vtanh.pop %v2464
    %v2497 = vtanh.pop %v2465
    %v2498 = vtanh.pop %v2466
    %v2499 = vtanh.pop %v2467
    %v2500 = vtanh.pop %v2468
    %v2501 = vtanh.pop %v2469
    %v2502 = vtanh.pop %v2470
    %v2503 = vtanh.pop %v2471
    %v2504 = vtanh.pop %v2472
    %v2505 = vtanh.pop %v2473
    %v2506 = vtanh.pop %v2474
    %v2507 = vtanh.pop %v2475
    %v2508 = vtanh.pop %v2476
    %v2509 = vtanh.pop %v2477
    %v2510 = vtanh.pop %v2478
    %v2511 = vtanh.pop %v2479
    %v2512 = vtanh.pop %v2480
    %v2513 = vtanh.pop %v2481
    %v2514 = vtanh.pop %v2482
    %v2515 = vtanh.pop %v2483
    %v2516 = vtanh.pop %v2484
    %v2517 = vtanh.pop %v2485
    %v2518 = vtanh.pop %v2486
    %v2519 = vtanh.pop %v2487
    %v2520 = vtanh.pop %v2488
    %v2521 = vtanh.pop %v2489
    %v2522 = vtanh.pop %v2490
    %v2523 = vadd.f32 %v2491, 1.0
    %v2524 = vadd.f32 %v2492, 1.0
    %v2525 = vadd.f32 %v2493, 1.0
    %v2526 = vadd.f32 %v2494, 1.0
    %v2527 = vadd.f32 %v2495, 1.0
    %v2528 = vadd.f32 %v2496, 1.0
    %v2529 = vadd.f32 %v2497, 1.0
    %v2530 = vadd.f32 %v2498, 1.0
    %v2531 = vadd.f32 %v2499, 1.0
    %v2532 = vadd.f32 %v2500, 1.0
    %v2533 = vadd.f32 %v2501, 1.0
    %v2534 = vadd.f32 %v2502, 1.0
    %v2535 = vadd.f32 %v2503, 1.0
    %v2536 = vadd.f32 %v2504, 1.0
    %v2537 = vadd.f32 %v2505, 1.0
    %v2538 = vadd.f32 %v2506, 1.0
    %v2539 = vadd.f32 %v2507, 1.0
    %v2540 = vadd.f32 %v2508, 1.0
    %v2541 = vadd.f32 %v2509, 1.0
    %v2542 = vadd.f32 %v2510, 1.0
    %v2543 = vadd.f32 %v2511, 1.0
    %v2544 = vadd.f32 %v2512, 1.0
    %v2545 = vadd.f32 %v2513, 1.0
    %v2546 = vadd.f32 %v2514, 1.0
    %v2547 = vadd.f32 %v2515, 1.0
    %v2548 = vadd.f32 %v2516, 1.0
    %v2549 = vadd.f32 %v2517, 1.0
    %v2550 = vadd.f32 %v2518, 1.0
    %v2551 = vadd.f32 %v2519, 1.0
    %v2552 = vadd.f32 %v2520, 1.0
    %v2553 = vadd.f32 %v2521, 1.0
    %v2554 = vadd.f32 %v2522, 1.0
    %v2555 = vmul.f32 %v2523, 0.5
    %v2556 = vmul.f32 %v2524, 0.5
    %v2557 = vmul.f32 %v2525, 0.5
    %v2558 = vmul.f32 %v2526, 0.5
    %v2559 = vmul.f32 %v2527, 0.5
    %v2560 = vmul.f32 %v2528, 0.5
    %v2561 = vmul.f32 %v2529, 0.5
    %v2562 = vmul.f32 %v2530, 0.5
    %v2563 = vmul.f32 %v2531, 0.5
    %v2564 = vmul.f32 %v2532, 0.5
    %v2565 = vmul.f32 %v2533, 0.5
    %v2566 = vmul.f32 %v2534, 0.5
    %v2567 = vmul.f32 %v2535, 0.5
    %v2568 = vmul.f32 %v2536, 0.5
    %v2569 = vmul.f32 %v2537, 0.5
    %v2570 = vmul.f32 %v2538, 0.5
    %v2571 = vmul.f32 %v2539, 0.5
    %v2572 = vmul.f32 %v2540, 0.5
    %v2573 = vmul.f32 %v2541, 0.5
    %v2574 = vmul.f32 %v2542, 0.5
    %v2575 = vmul.f32 %v2543, 0.5
    %v2576 = vmul.f32 %v2544, 0.5
    %v2577 = vmul.f32 %v2545, 0.5
    %v2578 = vmul.f32 %v2546, 0.5
    %v2579 = vmul.f32 %v2547, 0.5
    %v2580 = vmul.f32 %v2548, 0.5
    %v2581 = vmul.f32 %v2549, 0.5
    %v2582 = vmul.f32 %v2550, 0.5
    %v2583 = vmul.f32 %v2551, 0.5
    %v2584 = vmul.f32 %v2552, 0.5
    %v2585 = vmul.f32 %v2553, 0.5
    %v2586 = vmul.f32 %v2554, 0.5
    %2587 = vst [vmem:[#allocation16] sm:$0xff] %v2555
    %2588 = vst [vmem:[#allocation16 + $0x8] sm:$0xff] %v2556
    %2589 = vst [vmem:[#allocation16 + $0x10] sm:$0xff] %v2557
    %2590 = vst [vmem:[#allocation16 + $0x18] sm:$0xff] %v2558
    %2591 = vst [vmem:[#allocation16 + $0x20] sm:$0xff] %v2559
    %2592 = vst [vmem:[#allocation16 + $0x28] sm:$0xff] %v2560
    %2593 = vst [vmem:[#allocation16 + $0x30] sm:$0xff] %v2561
    %2594 = vst [vmem:[#allocation16 + $0x38] sm:$0xff] %v2562
    %2595 = vst [vmem:[#allocation16 + $0x40] sm:$0xff] %v2563
    %2596 = vst [vmem:[#allocation16 + $0x48] sm:$0xff] %v2564
    %2597 = vst [vmem:[#allocation16 + $0x50] sm:$0xff] %v2565
    %2598 = vst [vmem:[#allocation16 + $0x58] sm:$0xff] %v2566
    %2599 = vst [vmem:[#allocation16 + $0x60] sm:$0xff] %v2567
    %2600 = vst [vmem:[#allocation16 + $0x68] sm:$0xff] %v2568
    %2601 = vst [vmem:[#allocation16 + $0x70] sm:$0xff] %v2569
    %2602 = vst [vmem:[#allocation16 + $0x78] sm:$0xff] %v2570
    %2603 = vst [vmem:[#allocation16 + $0x80] sm:$0xff] %v2571
    %2604 = vst [vmem:[#allocation16 + $0x88] sm:$0xff] %v2572
    %2605 = vst [vmem:[#allocation16 + $0x90] sm:$0xff] %v2573
    %2606 = vst [vmem:[#allocation16 + $0x98] sm:$0xff] %v2574
    %2607 = vst [vmem:[#allocation16 + $0xa0] sm:$0xff] %v2575
    %2608 = vst [vmem:[#allocation16 + $0xa8] sm:$0xff] %v2576
    %2609 = vst [vmem:[#allocation16 + $0xb0] sm:$0xff] %v2577
    %2610 = vst [vmem:[#allocation16 + $0xb8] sm:$0xff] %v2578
    %2611 = vst [vmem:[#allocation16 + $0xc0] sm:$0xff] %v2579
    %2612 = vst [vmem:[#allocation16 + $0xc8] sm:$0xff] %v2580
    %2613 = vst [vmem:[#allocation16 + $0xd0] sm:$0xff] %v2581
    %2614 = vst [vmem:[#allocation16 + $0xd8] sm:$0xff] %v2582
    %2615 = vst [vmem:[#allocation16 + $0xe0] sm:$0xff] %v2583
    %2616 = vst [vmem:[#allocation16 + $0xe8] sm:$0xff] %v2584
    %2617 = vst [vmem:[#allocation16 + $0xf0] sm:$0xff] %v2585
    %2618 = vst [vmem:[#allocation16 + $0xf8] sm:$0xff] %v2586
    // Predicated region
    $region94: #{tpu_custom_call.1} parent=1 // pred_check
      _
    $region95: #{tpu_custom_call.1} parent=1 // pred_check_branch
      %2620 = sbr.rel (0) target = $region97
    $region96: #{tpu_custom_call.1} parent=1 // pred_region
      %2622 = vsyncadd [#allocation4], 0
      %s2623 = sshll.u32 [#allocation16], 4
      %s2624 = int_to_ptr.vmem [resolvable:$true] %s2623
      %s2625 = sshll.u32 %s15, 4
      %s2626 = int_to_ptr.hbm [resolvable:$true] %s2625
      %2631 = dma.vmem_to_hbm [thread:$0]  %s2624, 4096, %s2626, [#allocation4], 128, 128, 8
    $region97: #{tpu_custom_call.1} parent=1 // pred_fallthru
      _
    // Predicated region
    $region98: #{tpu_custom_call.1} parent=1 // pred_check
      _
    $region99: #{tpu_custom_call.1} parent=1 // pred_check_branch
      %2633 = sbr.rel (0) target = $region101
    $region100: #{tpu_custom_call.1} parent=1 // pred_region
      %2635 = dma.done [#allocation4], 4096
    $region101: #{tpu_custom_call.1} parent=1 // pred_fallthru
      _
    %2636 = vsyncpa [#allocation3], 1
    %2637 = vsyncpa [#allocation6], 1
    %2638 = vsyncpa [#allocation9], 1
    %2639 = vsyncpa [#allocation12], 1
    %2640 = vsyncpa [#allocation15], 1
    %2641 = vsyncpa [#allocation4], 1

// kernel: tpu_custom_call.1
$region0: #{tpu_custom_call.1}
  #allocation0 [shape = 'u32[]', space=smem, size = 0x4, offset = 0x4, fixed_abs, tag = 'smem constant byte address 0x4 - core index']
  #allocation1 [shape = 'u32[72,128]{1,0:T(1,128)}', space=vmem, size = 0x9000, scoped, tag = 'internal scratch']
  %s0 = inlined_call_operand.hbm [shape: bf16[256,128], index: 0, kind: input, shape index: {}]
  %s1 = inlined_call_operand.hbm [shape: bf16[128,128], index: 1, kind: input, shape index: {}]
  %s2 = inlined_call_operand.vmem [shape: f32[1,128], index: 2, kind: input, shape index: {}]
  %s3 = inlined_call_operand.hbm [shape: bf16[128,128], index: 3, kind: input, shape index: {}]
  %s4 = inlined_call_operand.vmem [shape: f32[1,128], index: 4, kind: input, shape index: {}]
  %s5 = inlined_call_operand.hbm [shape: bf16[128,128], index: 5, kind: input, shape index: {}]
  %s6 = inlined_call_operand.vmem [shape: f32[1,128], index: 6, kind: input, shape index: {}]
  %s7 = inlined_call_operand.hbm [shape: bf16[128,128], index: 7, kind: input, shape index: {}]
  %s8 = inlined_call_operand.vmem [shape: f32[1,128], index: 8, kind: input, shape index: {}]
  %s9 = inlined_call_operand.hbm [shape: bf16[128,128], index: 9, kind: input, shape index: {}]
  %s10 = inlined_call_operand.vmem [shape: f32[1,128], index: 10, kind: input, shape index: {}]
  %s11 = inlined_call_operand.hbm [shape: bf16[128,128], index: 11, kind: input, shape index: {}]
  %s12 = inlined_call_operand.vmem [shape: f32[1,128], index: 12, kind: input, shape index: {}]
  %s13 = inlined_call_operand.hbm [shape: bf16[128,128], index: 13, kind: input, shape index: {}]
  %s14 = inlined_call_operand.vmem [shape: f32[1,128], index: 14, kind: input, shape index: {}]
  %s15 = inlined_call_operand.hbm [shape: f32[256,128], index: 15, kind: output, shape index: {}]
  %s16 = sld [smem:[#allocation0]]
  $region102: #{tpu_custom_call.1} parent=0
    _
  %s18 = ssub.s32 1, %s16
  %s19 = scalar_select 0, %s18, %s16
  $region1: #{tpu_custom_call.1} parent=0
    #allocation2 [shape = 'u8[65536]{0}', space=vmem, size = 0x10000, scoped, tag = 'input window, operand 0, single buffered']
    #allocation3 [shape = 's32[1]{0}', space=sflag, size = 0x4, scoped, tag = 'scoped memory for tpu_custom_call.1']
    #allocation4 [shape = 's32[1]{0}', space=sflag, size = 0x4, scoped, tag = 'scoped memory for tpu_custom_call.1']
    #allocation5 [shape = 'u8[32768]{0}', space=vmem, size = 0x8000, scoped, tag = 'input window, operand 1, single buffered']
    #allocation6 [shape = 's32[1]{0}', space=sflag, size = 0x4, scoped, tag = 'scoped memory for tpu_custom_call.1']
    #allocation7 [shape = 'u8[32768]{0}', space=vmem, size = 0x8000, scoped, tag = 'input window, operand 3, single buffered']
    #allocation8 [shape = 'u8[32768]{0}', space=vmem, size = 0x8000, scoped, tag = 'input window, operand 5, single buffered']
    #allocation9 [shape = 's32[1]{0}', space=sflag, size = 0x4, scoped, tag = 'scoped memory for tpu_custom_call.1']
    #allocation10 [shape = 'u8[32768]{0}', space=vmem, size = 0x8000, scoped, tag = 'input window, operand 7, single buffered']
    #allocation11 [shape = 'u8[32768]{0}', space=vmem, size = 0x8000, scoped, tag = 'input window, operand 9, single buffered']
    #allocation12 [shape = 's32[1]{0}', space=sflag, size = 0x4, scoped, tag = 'scoped memory for tpu_custom_call.1']
    #allocation13 [shape = 'u8[32768]{0}', space=vmem, size = 0x8000, scoped, tag = 'input window, operand 11, single buffered']
    #allocation14 [shape = 'u8[32768]{0}', space=vmem, size = 0x8000, scoped, tag = 'input window, operand 13, single buffered']
    #allocation15 [shape = 's32[1]{0}', space=sflag, size = 0x4, scoped, tag = 'scoped memory for tpu_custom_call.1']
    #allocation16 [shape = 'u8[131072]{0}', space=vmem, size = 0x20000, scoped, tag = 'output window, operand 0, single buffered']
    %20 = vsyncpa [#allocation3], 0
    %21 = vsyncpa [#allocation6], 0
    %22 = vsyncpa [#allocation9], 0
    %23 = vsyncpa [#allocation12], 0
    %24 = vsyncpa [#allocation15], 0
    %25 = vsyncpa [#allocation4], 0
    // Predicated region
    $region2: #{tpu_custom_call.1} parent=1 // pred_check
      _
    $region3: #{tpu_custom_call.1} parent=1 // pred_check_branch
      %27 = sbr.rel (0) target = $region5
    $region4: #{tpu_custom_call.1} parent=1 // pred_region
      %29 = vsyncadd [#allocation3], 0
      %s30 = sshll.u32 %s0, 4
      %s31 = int_to_ptr.hbm [resolvable:$true] %s30
      %s32 = sshll.u32 [#allocation2], 4
      %s33 = int_to_ptr.vmem [resolvable:$true] %s32
      %38 = dma.hbm_to_vmem [thread:$0]  %s31, 2048, %s33, [#allocation3], 64, 64, 4
    $region5: #{tpu_custom_call.1} parent=1 // pred_fallthru
      _
    // Predicated region
    $region6: #{tpu_custom_call.1} parent=1 // pred_check
      _
    $region7: #{tpu_custom_call.1} parent=1 // pred_check_branch
      %40 = sbr.rel (0) target = $region9
    $region8: #{tpu_custom_call.1} parent=1 // pred_region
      %42 = vsyncadd [#allocation6], 0
      %s43 = sshll.u32 %s1, 4
      %s44 = int_to_ptr.hbm [resolvable:$true] %s43
      %s45 = sshll.u32 [#allocation5], 4
      %s46 = int_to_ptr.vmem [resolvable:$true] %s45
      %51 = dma.hbm_to_vmem [thread:$0]  %s44, 1024, %s46, [#allocation6], 64, 64, 4
    $region9: #{tpu_custom_call.1} parent=1 // pred_fallthru
      _
    // Predicated region
    $region10: #{tpu_custom_call.1} parent=1 // pred_check
      _
    $region11: #{tpu_custom_call.1} parent=1 // pred_check_branch
      %53 = sbr.rel (0) target = $region13
    $region12: #{tpu_custom_call.1} parent=1 // pred_region
      _
    $region13: #{tpu_custom_call.1} parent=1 // pred_fallthru
      _
    // Predicated region
    $region14: #{tpu_custom_call.1} parent=1 // pred_check
      _
    $region15: #{tpu_custom_call.1} parent=1 // pred_check_branch
      %55 = sbr.rel (0) target = $region17
    $region16: #{tpu_custom_call.1} parent=1 // pred_region
      %57 = vsyncadd [#allocation6], 0
      %s58 = sshll.u32 %s3, 4
      %s59 = int_to_ptr.hbm [resolvable:$true] %s58
      %s60 = sshll.u32 [#allocation7], 4
      %s61 = int_to_ptr.vmem [resolvable:$true] %s60
      %66 = dma.hbm_to_vmem [thread:$0]  %s59, 1024, %s61, [#allocation6], 64, 64, 4
    $region17: #{tpu_custom_call.1} parent=1 // pred_fallthru
      _
    // Predicated region
    $region18: #{tpu_custom_call.1} parent=1 // pred_check
      _
    $region19: #{tpu_custom_call.1} parent=1 // pred_check_branch
      %68 = sbr.rel (0) target = $region21
    $region20: #{tpu_custom_call.1} parent=1 // pred_region
      _
    $region21: #{tpu_custom_call.1} parent=1 // pred_fallthru
      _
    // Predicated region
    $region22: #{tpu_custom_call.1} parent=1 // pred_check
      _
    $region23: #{tpu_custom_call.1} parent=1 // pred_check_branch
      %70 = sbr.rel (0) target = $region25
    $region24: #{tpu_custom_call.1} parent=1 // pred_region
      %72 = vsyncadd [#allocation9], 0
      %s73 = sshll.u32 %s5, 4
      %s74 = int_to_ptr.hbm [resolvable:$true] %s73
      %s75 = sshll.u32 [#allocation8], 4
      %s76 = int_to_ptr.vmem [resolvable:$true] %s75
      %81 = dma.hbm_to_vmem [thread:$0]  %s74, 1024, %s76, [#allocation9], 64, 64, 4
    $region25: #{tpu_custom_call.1} parent=1 // pred_fallthru
      _
    // Predicated region
    $region26: #{tpu_custom_call.1} parent=1 // pred_check
      _
    $region27: #{tpu_custom_call.1} parent=1 // pred_check_branch
      %83 = sbr.rel (0) target = $region29
    $region28: #{tpu_custom_call.1} parent=1 // pred_region
      _
    $region29: #{tpu_custom_call.1} parent=1 // pred_fallthru
      _
    // Predicated region
    $region30: #{tpu_custom_call.1} parent=1 // pred_check
      _
    $region31: #{tpu_custom_call.1} parent=1 // pred_check_branch
      %85 = sbr.rel (0) target = $region33
    $region32: #{tpu_custom_call.1} parent=1 // pred_region
      %87 = vsyncadd [#allocation9], 0
      %s88 = sshll.u32 %s7, 4
      %s89 = int_to_ptr.hbm [resolvable:$true] %s88
      %s90 = sshll.u32 [#allocation10], 4
      %s91 = int_to_ptr.vmem [resolvable:$true] %s90
      %96 = dma.hbm_to_vmem [thread:$0]  %s89, 1024, %s91, [#allocation9], 64, 64, 4
    $region33: #{tpu_custom_call.1} parent=1 // pred_fallthru
      _
    // Predicated region
    $region34: #{tpu_custom_call.1} parent=1 // pred_check
      _
    $region35: #{tpu_custom_call.1} parent=1 // pred_check_branch
      %98 = sbr.rel (0) target = $region37
    $region36: #{tpu_custom_call.1} parent=1 // pred_region
      _
    $region37: #{tpu_custom_call.1} parent=1 // pred_fallthru
      _
    // Predicated region
    $region38: #{tpu_custom_call.1} parent=1 // pred_check
      _
    $region39: #{tpu_custom_call.1} parent=1 // pred_check_branch
      %100 = sbr.rel (0) target = $region41
    $region40: #{tpu_custom_call.1} parent=1 // pred_region
      %102 = vsyncadd [#allocation12], 0
      %s103 = sshll.u32 %s9, 4
      %s104 = int_to_ptr.hbm [resolvable:$true] %s103
      %s105 = sshll.u32 [#allocation11], 4
      %s106 = int_to_ptr.vmem [resolvable:$true] %s105
      %111 = dma.hbm_to_vmem [thread:$0]  %s104, 1024, %s106, [#allocation12], 64, 64, 4
    $region41: #{tpu_custom_call.1} parent=1 // pred_fallthru
      _
    // Predicated region
    $region42: #{tpu_custom_call.1} parent=1 // pred_check
      _
    $region43: #{tpu_custom_call.1} parent=1 // pred_check_branch
      %113 = sbr.rel (0) target = $region45
    $region44: #{tpu_custom_call.1} parent=1 // pred_region
      _
    $region45: #{tpu_custom_call.1} parent=1 // pred_fallthru
      _
    // Predicated region
    $region46: #{tpu_custom_call.1} parent=1 // pred_check
      _
    $region47: #{tpu_custom_call.1} parent=1 // pred_check_branch
      %115 = sbr.rel (0) target = $region49
    $region48: #{tpu_custom_call.1} parent=1 // pred_region
      %117 = vsyncadd [#allocation12], 0
      %s118 = sshll.u32 %s11, 4
      %s119 = int_to_ptr.hbm [resolvable:$true] %s118
      %s120 = sshll.u32 [#allocation13], 4
      %s121 = int_to_ptr.vmem [resolvable:$true] %s120
      %126 = dma.hbm_to_vmem [thread:$0]  %s119, 1024, %s121, [#allocation12], 64, 64, 4
    $region49: #{tpu_custom_call.1} parent=1 // pred_fallthru
      _
    // Predicated region
    $region50: #{tpu_custom_call.1} parent=1 // pred_check
      _
    $region51: #{tpu_custom_call.1} parent=1 // pred_check_branch
      %128 = sbr.rel (0) target = $region53
    $region52: #{tpu_custom_call.1} parent=1 // pred_region
      _
    $region53: #{tpu_custom_call.1} parent=1 // pred_fallthru
      _
    // Predicated region
    $region54: #{tpu_custom_call.1} parent=1 // pred_check
      _
    $region55: #{tpu_custom_call.1} parent=1 // pred_check_branch
      %130 = sbr.rel (0) target = $region57
    $region56: #{tpu_custom_call.1} parent=1 // pred_region
      %132 = vsyncadd [#allocation15], 0
      %s133 = sshll.u32 %s13, 4
      %s134 = int_to_ptr.hbm [resolvable:$true] %s133
      %s135 = sshll.u32 [#allocation14], 4
      %s136 = int_to_ptr.vmem [resolvable:$true] %s135
      %141 = dma.hbm_to_vmem [thread:$0]  %s134, 1024, %s136, [#allocation15], 64, 64, 4
    $region57: #{tpu_custom_call.1} parent=1 // pred_fallthru
      _
    // Predicated region
    $region58: #{tpu_custom_call.1} parent=1 // pred_check
      _
    $region59: #{tpu_custom_call.1} parent=1 // pred_check_branch
      %143 = sbr.rel (0) target = $region61
    $region60: #{tpu_custom_call.1} parent=1 // pred_region
      _
    $region61: #{tpu_custom_call.1} parent=1 // pred_fallthru
      _
    // Predicated region
    $region62: #{tpu_custom_call.1} parent=1 // pred_check
      _
    $region63: #{tpu_custom_call.1} parent=1 // pred_check_branch
      %145 = sbr.rel (0) target = $region65
    $region64: #{tpu_custom_call.1} parent=1 // pred_region
      %147 = dma.done [#allocation3], 2048
    $region65: #{tpu_custom_call.1} parent=1 // pred_fallthru
      _
    // Predicated region
    $region66: #{tpu_custom_call.1} parent=1 // pred_check
      _
    $region67: #{tpu_custom_call.1} parent=1 // pred_check_branch
      %149 = sbr.rel (0) target = $region69
    $region68: #{tpu_custom_call.1} parent=1 // pred_region
      %151 = dma.done [#allocation6], 1024
    $region69: #{tpu_custom_call.1} parent=1 // pred_fallthru
      _
    // Predicated region
    $region70: #{tpu_custom_call.1} parent=1 // pred_check
      _
    $region71: #{tpu_custom_call.1} parent=1 // pred_check_branch
      %153 = sbr.rel (0) target = $region73
    $region72: #{tpu_custom_call.1} parent=1 // pred_region
      %155 = dma.done [#allocation6], 1024
    $region73: #{tpu_custom_call.1} parent=1 // pred_fallthru
      _
    // Predicated region
    $region74: #{tpu_custom_call.1} parent=1 // pred_check
      _
    $region75: #{tpu_custom_call.1} parent=1 // pred_check_branch
      %157 = sbr.rel (0) target = $region77
    $region76: #{tpu_custom_call.1} parent=1 // pred_region
      %159 = dma.done [#allocation9], 1024
    $region77: #{tpu_custom_call.1} parent=1 // pred_fallthru
      _
    // Predicated region
    $region78: #{tpu_custom_call.1} parent=1 // pred_check
      _
    $region79: #{tpu_custom_call.1} parent=1 // pred_check_branch
      %161 = sbr.rel (0) target = $region81
    $region80: #{tpu_custom_call.1} parent=1 // pred_region
      %163 = dma.done [#allocation9], 1024
    $region81: #{tpu_custom_call.1} parent=1 // pred_fallthru
      _
    // Predicated region
    $region82: #{tpu_custom_call.1} parent=1 // pred_check
      _
    $region83: #{tpu_custom_call.1} parent=1 // pred_check_branch
      %165 = sbr.rel (0) target = $region85
    $region84: #{tpu_custom_call.1} parent=1 // pred_region
      %167 = dma.done [#allocation12], 1024
    $region85: #{tpu_custom_call.1} parent=1 // pred_fallthru
      _
    // Predicated region
    $region86: #{tpu_custom_call.1} parent=1 // pred_check
      _
    $region87: #{tpu_custom_call.1} parent=1 // pred_check_branch
      %169 = sbr.rel (0) target = $region89
    $region88: #{tpu_custom_call.1} parent=1 // pred_region
      %171 = dma.done [#allocation12], 1024
    $region89: #{tpu_custom_call.1} parent=1 // pred_fallthru
      _
    // Predicated region
    $region90: #{tpu_custom_call.1} parent=1 // pred_check
      _
    $region91: #{tpu_custom_call.1} parent=1 // pred_check_branch
      %173 = sbr.rel (0) target = $region93
    $region92: #{tpu_custom_call.1} parent=1 // pred_region
      %175 = dma.done [#allocation15], 1024
    $region93: #{tpu_custom_call.1} parent=1 // pred_fallthru
      _
    %v176 = vld [vmem:[#allocation2] sm:$0xf]
    %v177 = vld [vmem:[#allocation2 + $0x4] sm:$0xf]
    %v178 = vld [vmem:[#allocation2 + $0x8] sm:$0xf]
    %v179 = vld [vmem:[#allocation2 + $0xc] sm:$0xf]
    %v180 = vld [vmem:[#allocation2 + $0x10] sm:$0xf]
    %v181 = vld [vmem:[#allocation2 + $0x14] sm:$0xf]
    %v182 = vld [vmem:[#allocation2 + $0x18] sm:$0xf]
    %v183 = vld [vmem:[#allocation2 + $0x1c] sm:$0xf]
    %v184 = vld [vmem:[#allocation2 + $0x20] sm:$0xf]
    %v185 = vld [vmem:[#allocation2 + $0x24] sm:$0xf]
    %v186 = vld [vmem:[#allocation2 + $0x28] sm:$0xf]
    %v187 = vld [vmem:[#allocation2 + $0x2c] sm:$0xf]
    %v188 = vld [vmem:[#allocation2 + $0x30] sm:$0xf]
    %v189 = vld [vmem:[#allocation2 + $0x34] sm:$0xf]
    %v190 = vld [vmem:[#allocation2 + $0x38] sm:$0xf]
    %v191 = vld [vmem:[#allocation2 + $0x3c] sm:$0xf]
    %v192 = vld [vmem:[#allocation2 + $0x40] sm:$0xf]
    %v193 = vld [vmem:[#allocation2 + $0x44] sm:$0xf]
    %v194 = vld [vmem:[#allocation2 + $0x48] sm:$0xf]
    %v195 = vld [vmem:[#allocation2 + $0x4c] sm:$0xf]
    %v196 = vld [vmem:[#allocation2 + $0x50] sm:$0xf]
    %v197 = vld [vmem:[#allocation2 + $0x54] sm:$0xf]
    %v198 = vld [vmem:[#allocation2 + $0x58] sm:$0xf]
    %v199 = vld [vmem:[#allocation2 + $0x5c] sm:$0xf]
    %v200 = vld [vmem:[#allocation2 + $0x60] sm:$0xf]
    %v201 = vld [vmem:[#allocation2 + $0x64] sm:$0xf]
    %v202 = vld [vmem:[#allocation2 + $0x68] sm:$0xf]
    %v203 = vld [vmem:[#allocation2 + $0x6c] sm:$0xf]
    %v204 = vld [vmem:[#allocation2 + $0x70] sm:$0xf]
    %v205 = vld [vmem:[#allocation2 + $0x74] sm:$0xf]
    %v206 = vld [vmem:[#allocation2 + $0x78] sm:$0xf]
    %v207 = vld [vmem:[#allocation2 + $0x7c] sm:$0xf]
    %v208 = vld [vmem:[#allocation5] sm:$0xf]
    %v209 = vld [vmem:[#allocation5 + $0x4] sm:$0xf]
    %v210 = vld [vmem:[#allocation5 + $0x8] sm:$0xf]
    %v211 = vld [vmem:[#allocation5 + $0xc] sm:$0xf]
    %v212 = vld [vmem:[#allocation5 + $0x10] sm:$0xf]
    %v213 = vld [vmem:[#allocation5 + $0x14] sm:$0xf]
    %v214 = vld [vmem:[#allocation5 + $0x18] sm:$0xf]
    %v215 = vld [vmem:[#allocation5 + $0x1c] sm:$0xf]
    %v216 = vld [vmem:[#allocation5 + $0x20] sm:$0xf]
    %v217 = vld [vmem:[#allocation5 + $0x24] sm:$0xf]
    %v218 = vld [vmem:[#allocation5 + $0x28] sm:$0xf]
    %v219 = vld [vmem:[#allocation5 + $0x2c] sm:$0xf]
    %v220 = vld [vmem:[#allocation5 + $0x30] sm:$0xf]
    %v221 = vld [vmem:[#allocation5 + $0x34] sm:$0xf]
    %v222 = vld [vmem:[#allocation5 + $0x38] sm:$0xf]
    %v223 = vld [vmem:[#allocation5 + $0x3c] sm:$0xf]
    %v224 = vld [vmem:[%s2] sm:$0x1]
    %v226 = vperm.slane %v224, 0
    %v260 = vunpack.c.l.b16 %v176
    %v261 = vunpack.c.l.b16 %v177
    %v262 = vunpack.c.l.b16 %v178
    %v263 = vunpack.c.l.b16 %v179
    %v264 = vunpack.c.l.b16 %v180
    %v265 = vunpack.c.l.b16 %v181
    %v266 = vunpack.c.l.b16 %v182
    %v267 = vunpack.c.l.b16 %v183
    %v268 = vunpack.c.l.b16 %v184
    %v269 = vunpack.c.l.b16 %v185
    %v270 = vunpack.c.l.b16 %v186
    %v271 = vunpack.c.l.b16 %v187
    %v272 = vunpack.c.l.b16 %v188
    %v273 = vunpack.c.l.b16 %v189
    %v274 = vunpack.c.l.b16 %v190
    %v275 = vunpack.c.l.b16 %v191
    %v276 = vunpack.c.l.b16 %v192
    %v277 = vunpack.c.l.b16 %v193
    %v278 = vunpack.c.l.b16 %v194
    %v279 = vunpack.c.l.b16 %v195
    %v280 = vunpack.c.l.b16 %v196
    %v281 = vunpack.c.l.b16 %v197
    %v282 = vunpack.c.l.b16 %v198
    %v283 = vunpack.c.l.b16 %v199
    %v284 = vunpack.c.l.b16 %v200
    %v285 = vunpack.c.l.b16 %v201
    %v286 = vunpack.c.l.b16 %v202
    %v287 = vunpack.c.l.b16 %v203
    %v288 = vunpack.c.l.b16 %v204
    %v289 = vunpack.c.l.b16 %v205
    %v290 = vunpack.c.l.b16 %v206
    %v291 = vunpack.c.l.b16 %v207
    %v292 = vpack.c.b16 %v261, %v260
    %v293 = vpack.c.b16 %v263, %v262
    %v294 = vpack.c.b16 %v265, %v264
    %v295 = vpack.c.b16 %v267, %v266
    %v296 = vpack.c.b16 %v269, %v268
    %v297 = vpack.c.b16 %v271, %v270
    %v298 = vpack.c.b16 %v273, %v272
    %v299 = vpack.c.b16 %v275, %v274
    %v300 = vpack.c.b16 %v277, %v276
    %v301 = vpack.c.b16 %v279, %v278
    %v302 = vpack.c.b16 %v281, %v280
    %v303 = vpack.c.b16 %v283, %v282
    %v304 = vpack.c.b16 %v285, %v284
    %v305 = vpack.c.b16 %v287, %v286
    %v306 = vpack.c.b16 %v289, %v288
    %v307 = vpack.c.b16 %v291, %v290
    %v340 = vunpack.c.l.b16 %v208
    %v341 = vunpack.c.l.b16 %v209
    %v342 = vunpack.c.l.b16 %v210
    %v343 = vunpack.c.l.b16 %v211
    %v344 = vunpack.c.l.b16 %v212
    %v345 = vunpack.c.l.b16 %v213
    %v346 = vunpack.c.l.b16 %v214
    %v347 = vunpack.c.l.b16 %v215
    %v348 = vunpack.c.l.b16 %v216
    %v349 = vunpack.c.l.b16 %v217
    %v350 = vunpack.c.l.b16 %v218
    %v351 = vunpack.c.l.b16 %v219
    %v352 = vunpack.c.l.b16 %v220
    %v353 = vunpack.c.l.b16 %v221
    %v354 = vunpack.c.l.b16 %v222
    %v355 = vunpack.c.l.b16 %v223
    %v356 = vpack.c.b16 %v341, %v340
    %v357 = vpack.c.b16 %v343, %v342
    %v358 = vpack.c.b16 %v345, %v344
    %v359 = vpack.c.b16 %v347, %v346
    %v360 = vpack.c.b16 %v349, %v348
    %v361 = vpack.c.b16 %v351, %v350
    %v362 = vpack.c.b16 %v353, %v352
    %v363 = vpack.c.b16 %v355, %v354
    %372 = vmatpush.bf16.msra.mxu0 %v363
    %373 = vmatpush.bf16.msra.mxu0 %v362
    %374 = vmatpush.bf16.msra.mxu0 %v361
    %375 = vmatpush.bf16.msra.mxu0 %v360
    %376 = vmatpush.bf16.msra.mxu0 %v359
    %377 = vmatpush.bf16.msra.mxu0 %v358
    %378 = vmatpush.bf16.msra.mxu0 %v357
    %379 = vmatpush.bf16.msra.mxu0 %v356
    %380 = vmatmul.bf16.gmra.mxu0 %v292
    %v381 = vpop.f32.mrf.mxu0
    %v382 = vadd.f32 %v226, %v381
    %v383 = vpop.f32.mrf.mxu0
    %v384 = vadd.f32 %v226, %v383
    %385 = vmatmul.bf16.gmra.mxu0 %v293
    %v386 = vpop.f32.mrf.mxu0
    %v387 = vadd.f32 %v226, %v386
    %v388 = vpop.f32.mrf.mxu0
    %v389 = vadd.f32 %v226, %v388
    %390 = vmatmul.bf16.gmra.mxu0 %v294
    %v391 = vpop.f32.mrf.mxu0
    %v392 = vadd.f32 %v226, %v391
    %v393 = vpop.f32.mrf.mxu0
    %v394 = vadd.f32 %v226, %v393
    %395 = vmatmul.bf16.gmra.mxu0 %v295
    %v396 = vpop.f32.mrf.mxu0
    %v397 = vadd.f32 %v226, %v396
    %v398 = vpop.f32.mrf.mxu0
    %v399 = vadd.f32 %v226, %v398
    %400 = vmatmul.bf16.gmra.mxu0 %v296
    %v401 = vpop.f32.mrf.mxu0
    %v402 = vadd.f32 %v226, %v401
    %v403 = vpop.f32.mrf.mxu0
    %v404 = vadd.f32 %v226, %v403
    %405 = vmatmul.bf16.gmra.mxu0 %v297
    %v406 = vpop.f32.mrf.mxu0
    %v407 = vadd.f32 %v226, %v406
    %v408 = vpop.f32.mrf.mxu0
    %v409 = vadd.f32 %v226, %v408
    %410 = vmatmul.bf16.gmra.mxu0 %v298
    %v411 = vpop.f32.mrf.mxu0
    %v412 = vadd.f32 %v226, %v411
    %v413 = vpop.f32.mrf.mxu0
    %v414 = vadd.f32 %v226, %v413
    %415 = vmatmul.bf16.gmra.mxu0 %v299
    %v416 = vpop.f32.mrf.mxu0
    %v417 = vadd.f32 %v226, %v416
    %v418 = vpop.f32.mrf.mxu0
    %v419 = vadd.f32 %v226, %v418
    %420 = vmatmul.bf16.gmra.mxu0 %v300
    %v421 = vpop.f32.mrf.mxu0
    %v422 = vadd.f32 %v226, %v421
    %v423 = vpop.f32.mrf.mxu0
    %v424 = vadd.f32 %v226, %v423
    %425 = vmatmul.bf16.gmra.mxu0 %v301
    %v426 = vpop.f32.mrf.mxu0
    %v427 = vadd.f32 %v226, %v426
    %v428 = vpop.f32.mrf.mxu0
    %v429 = vadd.f32 %v226, %v428
    %430 = vmatmul.bf16.gmra.mxu0 %v302
    %v431 = vpop.f32.mrf.mxu0
    %v432 = vadd.f32 %v226, %v431
    %v433 = vpop.f32.mrf.mxu0
    %v434 = vadd.f32 %v226, %v433
    %435 = vmatmul.bf16.gmra.mxu0 %v303
    %v436 = vpop.f32.mrf.mxu0
    %v437 = vadd.f32 %v226, %v436
    %v438 = vpop.f32.mrf.mxu0
    %v439 = vadd.f32 %v226, %v438
    %440 = vmatmul.bf16.gmra.mxu0 %v304
    %v441 = vpop.f32.mrf.mxu0
    %v442 = vadd.f32 %v226, %v441
    %v443 = vpop.f32.mrf.mxu0
    %v444 = vadd.f32 %v226, %v443
    %445 = vmatmul.bf16.gmra.mxu0 %v305
    %v446 = vpop.f32.mrf.mxu0
    %v447 = vadd.f32 %v226, %v446
    %v448 = vpop.f32.mrf.mxu0
    %v449 = vadd.f32 %v226, %v448
    %450 = vmatmul.bf16.gmra.mxu0 %v306
    %v451 = vpop.f32.mrf.mxu0
    %v452 = vadd.f32 %v226, %v451
    %v453 = vpop.f32.mrf.mxu0
    %v454 = vadd.f32 %v226, %v453
    %455 = vmatmul.bf16.gmra.mxu0 %v307
    %v456 = vpop.f32.mrf.mxu0
    %v457 = vadd.f32 %v226, %v456
    %v458 = vpop.f32.mrf.mxu0
    %v459 = vadd.f32 %v226, %v458
    %460 = vdwg.mxu0
    %v461 = vmul.f32 %v382, 0.5
    %v462 = vmul.f32 %v384, 0.5
    %v463 = vmul.f32 %v387, 0.5
    %v464 = vmul.f32 %v389, 0.5
    %v465 = vmul.f32 %v392, 0.5
    %v466 = vmul.f32 %v394, 0.5
    %v467 = vmul.f32 %v397, 0.5
    %v468 = vmul.f32 %v399, 0.5
    %v469 = vmul.f32 %v402, 0.5
    %v470 = vmul.f32 %v404, 0.5
    %v471 = vmul.f32 %v407, 0.5
    %v472 = vmul.f32 %v409, 0.5
    %v473 = vmul.f32 %v412, 0.5
    %v474 = vmul.f32 %v414, 0.5
    %v475 = vmul.f32 %v417, 0.5
    %v476 = vmul.f32 %v419, 0.5
    %v477 = vmul.f32 %v422, 0.5
    %v478 = vmul.f32 %v424, 0.5
    %v479 = vmul.f32 %v427, 0.5
    %v480 = vmul.f32 %v429, 0.5
    %v481 = vmul.f32 %v432, 0.5
    %v482 = vmul.f32 %v434, 0.5
    %v483 = vmul.f32 %v437, 0.5
    %v484 = vmul.f32 %v439, 0.5
    %v485 = vmul.f32 %v442, 0.5
    %v486 = vmul.f32 %v444, 0.5
    %v487 = vmul.f32 %v447, 0.5
    %v488 = vmul.f32 %v449, 0.5
    %v489 = vmul.f32 %v452, 0.5
    %v490 = vmul.f32 %v454, 0.5
    %v491 = vmul.f32 %v457, 0.5
    %v492 = vmul.f32 %v459, 0.5
    %v493 = vtanh.pop %v461
    %v494 = vtanh.pop %v462
    %v495 = vtanh.pop %v463
    %v496 = vtanh.pop %v464
    %v497 = vtanh.pop %v465
    %v498 = vtanh.pop %v466
    %v499 = vtanh.pop %v467
    %v500 = vtanh.pop %v468
    %v501 = vtanh.pop %v469
    %v502 = vtanh.pop %v470
    %v503 = vtanh.pop %v471
    %v504 = vtanh.pop %v472
    %v505 = vtanh.pop %v473
    %v506 = vtanh.pop %v474
    %v507 = vtanh.pop %v475
    %v508 = vtanh.pop %v476
    %v509 = vtanh.pop %v477
    %v510 = vtanh.pop %v478
    %v511 = vtanh.pop %v479
    %v512 = vtanh.pop %v480
    %v513 = vtanh.pop %v481
    %v514 = vtanh.pop %v482
    %v515 = vtanh.pop %v483
    %v516 = vtanh.pop %v484
    %v517 = vtanh.pop %v485
    %v518 = vtanh.pop %v486
    %v519 = vtanh.pop %v487
    %v520 = vtanh.pop %v488
    %v521 = vtanh.pop %v489
    %v522 = vtanh.pop %v490
    %v523 = vtanh.pop %v491
    %v524 = vtanh.pop %v492
    %v525 = vadd.f32 %v493, 1.0
    %v526 = vadd.f32 %v494, 1.0
    %v527 = vadd.f32 %v495, 1.0
    %v528 = vadd.f32 %v496, 1.0
    %v529 = vadd.f32 %v497, 1.0
    %v530 = vadd.f32 %v498, 1.0
    %v531 = vadd.f32 %v499, 1.0
    %v532 = vadd.f32 %v500, 1.0
    %v533 = vadd.f32 %v501, 1.0
    %v534 = vadd.f32 %v502, 1.0
    %v535 = vadd.f32 %v503, 1.0
    %v536 = vadd.f32 %v504, 1.0
    %v537 = vadd.f32 %v505, 1.0
    %v538 = vadd.f32 %v506, 1.0
    %v539 = vadd.f32 %v507, 1.0
    %v540 = vadd.f32 %v508, 1.0
    %v541 = vadd.f32 %v509, 1.0
    %v542 = vadd.f32 %v510, 1.0
    %v543 = vadd.f32 %v511, 1.0
    %v544 = vadd.f32 %v512, 1.0
    %v545 = vadd.f32 %v513, 1.0
    %v546 = vadd.f32 %v514, 1.0
    %v547 = vadd.f32 %v515, 1.0
    %v548 = vadd.f32 %v516, 1.0
    %v549 = vadd.f32 %v517, 1.0
    %v550 = vadd.f32 %v518, 1.0
    %v551 = vadd.f32 %v519, 1.0
    %v552 = vadd.f32 %v520, 1.0
    %v553 = vadd.f32 %v521, 1.0
    %v554 = vadd.f32 %v522, 1.0
    %v555 = vadd.f32 %v523, 1.0
    %v556 = vadd.f32 %v524, 1.0
    %v557 = vmul.f32 %v525, 0.5
    %v558 = vmul.f32 %v526, 0.5
    %v559 = vmul.f32 %v527, 0.5
    %v560 = vmul.f32 %v528, 0.5
    %v561 = vmul.f32 %v529, 0.5
    %v562 = vmul.f32 %v530, 0.5
    %v563 = vmul.f32 %v531, 0.5
    %v564 = vmul.f32 %v532, 0.5
    %v565 = vmul.f32 %v533, 0.5
    %v566 = vmul.f32 %v534, 0.5
    %v567 = vmul.f32 %v535, 0.5
    %v568 = vmul.f32 %v536, 0.5
    %v569 = vmul.f32 %v537, 0.5
    %v570 = vmul.f32 %v538, 0.5
    %v571 = vmul.f32 %v539, 0.5
    %v572 = vmul.f32 %v540, 0.5
    %v573 = vmul.f32 %v541, 0.5
    %v574 = vmul.f32 %v542, 0.5
    %v575 = vmul.f32 %v543, 0.5
    %v576 = vmul.f32 %v544, 0.5
    %v577 = vmul.f32 %v545, 0.5
    %v578 = vmul.f32 %v546, 0.5
    %v579 = vmul.f32 %v547, 0.5
    %v580 = vmul.f32 %v548, 0.5
    %v581 = vmul.f32 %v549, 0.5
    %v582 = vmul.f32 %v550, 0.5
    %v583 = vmul.f32 %v551, 0.5
    %v584 = vmul.f32 %v552, 0.5
    %v585 = vmul.f32 %v553, 0.5
    %v586 = vmul.f32 %v554, 0.5
    %v587 = vmul.f32 %v555, 0.5
    %v588 = vmul.f32 %v556, 0.5
    %v589 = vmul.f32 %v382, %v557
    %v590 = vmul.f32 %v384, %v558
    %v591 = vmul.f32 %v387, %v559
    %v592 = vmul.f32 %v389, %v560
    %v593 = vmul.f32 %v392, %v561
    %v594 = vmul.f32 %v394, %v562
    %v595 = vmul.f32 %v397, %v563
    %v596 = vmul.f32 %v399, %v564
    %v597 = vmul.f32 %v402, %v565
    %v598 = vmul.f32 %v404, %v566
    %v599 = vmul.f32 %v407, %v567
    %v600 = vmul.f32 %v409, %v568
    %v601 = vmul.f32 %v412, %v569
    %v602 = vmul.f32 %v414, %v570
    %v603 = vmul.f32 %v417, %v571
    %v604 = vmul.f32 %v419, %v572
    %v605 = vmul.f32 %v422, %v573
    %v606 = vmul.f32 %v424, %v574
    %v607 = vmul.f32 %v427, %v575
    %v608 = vmul.f32 %v429, %v576
    %v609 = vmul.f32 %v432, %v577
    %v610 = vmul.f32 %v434, %v578
    %v611 = vmul.f32 %v437, %v579
    %v612 = vmul.f32 %v439, %v580
    %v613 = vmul.f32 %v442, %v581
    %v614 = vmul.f32 %v444, %v582
    %v615 = vmul.f32 %v447, %v583
    %v616 = vmul.f32 %v449, %v584
    %v617 = vmul.f32 %v452, %v585
    %v618 = vmul.f32 %v454, %v586
    %v619 = vmul.f32 %v457, %v587
    %v620 = vmul.f32 %v459, %v588
    %v621 = vpack.c.bf16 %v590, %v589
    %v622 = vpack.c.bf16 %v592, %v591
    %v623 = vpack.c.bf16 %v594, %v593
    %v624 = vpack.c.bf16 %v596, %v595
    %v625 = vpack.c.bf16 %v598, %v597
    %v626 = vpack.c.bf16 %v600, %v599
    %v627 = vpack.c.bf16 %v602, %v601
    %v628 = vpack.c.bf16 %v604, %v603
    %v629 = vpack.c.bf16 %v606, %v605
    %v630 = vpack.c.bf16 %v608, %v607
    %v631 = vpack.c.bf16 %v610, %v609
    %v632 = vpack.c.bf16 %v612, %v611
    %v633 = vpack.c.bf16 %v614, %v613
    %v634 = vpack.c.bf16 %v616, %v615
    %v635 = vpack.c.bf16 %v618, %v617
    %v636 = vpack.c.bf16 %v620, %v619
    %v637 = vld [vmem:[#allocation7] sm:$0xf]
    %v638 = vld [vmem:[#allocation7 + $0x4] sm:$0xf]
    %v639 = vld [vmem:[#allocation7 + $0x8] sm:$0xf]
    %v640 = vld [vmem:[#allocation7 + $0xc] sm:$0xf]
    %v641 = vld [vmem:[#allocation7 + $0x10] sm:$0xf]
    %v642 = vld [vmem:[#allocation7 + $0x14] sm:$0xf]
    %v643 = vld [vmem:[#allocation7 + $0x18] sm:$0xf]
    %v644 = vld [vmem:[#allocation7 + $0x1c] sm:$0xf]
    %v645 = vld [vmem:[#allocation7 + $0x20] sm:$0xf]
    %v646 = vld [vmem:[#allocation7 + $0x24] sm:$0xf]
    %v647 = vld [vmem:[#allocation7 + $0x28] sm:$0xf]
    %v648 = vld [vmem:[#allocation7 + $0x2c] sm:$0xf]
    %v649 = vld [vmem:[#allocation7 + $0x30] sm:$0xf]
    %v650 = vld [vmem:[#allocation7 + $0x34] sm:$0xf]
    %v651 = vld [vmem:[#allocation7 + $0x38] sm:$0xf]
    %v652 = vld [vmem:[#allocation7 + $0x3c] sm:$0xf]
    %v653 = vld [vmem:[%s4] sm:$0x1]
    %v655 = vperm.slane %v653, 0
    %v673 = vunpack.c.l.b16 %v637
    %v674 = vunpack.c.l.b16 %v638
    %v675 = vunpack.c.l.b16 %v639
    %v676 = vunpack.c.l.b16 %v640
    %v677 = vunpack.c.l.b16 %v641
    %v678 = vunpack.c.l.b16 %v642
    %v679 = vunpack.c.l.b16 %v643
    %v680 = vunpack.c.l.b16 %v644
    %v681 = vunpack.c.l.b16 %v645
    %v682 = vunpack.c.l.b16 %v646
    %v683 = vunpack.c.l.b16 %v647
    %v684 = vunpack.c.l.b16 %v648
    %v685 = vunpack.c.l.b16 %v649
    %v686 = vunpack.c.l.b16 %v650
    %v687 = vunpack.c.l.b16 %v651
    %v688 = vunpack.c.l.b16 %v652
    %v689 = vpack.c.b16 %v674, %v673
    %v690 = vpack.c.b16 %v676, %v675
    %v691 = vpack.c.b16 %v678, %v677
    %v692 = vpack.c.b16 %v680, %v679
    %v693 = vpack.c.b16 %v682, %v681
    %v694 = vpack.c.b16 %v684, %v683
    %v695 = vpack.c.b16 %v686, %v685
    %v696 = vpack.c.b16 %v688, %v687
    %705 = vmatpush.bf16.msra.mxu0 %v696
    %706 = vmatpush.bf16.msra.mxu0 %v695
    %707 = vmatpush.bf16.msra.mxu0 %v694
    %708 = vmatpush.bf16.msra.mxu0 %v693
    %709 = vmatpush.bf16.msra.mxu0 %v692
    %710 = vmatpush.bf16.msra.mxu0 %v691
    %711 = vmatpush.bf16.msra.mxu0 %v690
    %712 = vmatpush.bf16.msra.mxu0 %v689
    %713 = vmatmul.bf16.gmra.mxu0 %v621
    %v714 = vpop.f32.mrf.mxu0
    %v715 = vadd.f32 %v655, %v714
    %v716 = vpop.f32.mrf.mxu0
    %v717 = vadd.f32 %v655, %v716
    %718 = vmatmul.bf16.gmra.mxu0 %v622
    %v719 = vpop.f32.mrf.mxu0
    %v720 = vadd.f32 %v655, %v719
    %v721 = vpop.f32.mrf.mxu0
    %v722 = vadd.f32 %v655, %v721
    %723 = vmatmul.bf16.gmra.mxu0 %v623
    %v724 = vpop.f32.mrf.mxu0
    %v725 = vadd.f32 %v655, %v724
    %v726 = vpop.f32.mrf.mxu0
    %v727 = vadd.f32 %v655, %v726
    %728 = vmatmul.bf16.gmra.mxu0 %v624
    %v729 = vpop.f32.mrf.mxu0
    %v730 = vadd.f32 %v655, %v729
    %v731 = vpop.f32.mrf.mxu0
    %v732 = vadd.f32 %v655, %v731
    %733 = vmatmul.bf16.gmra.mxu0 %v625
    %v734 = vpop.f32.mrf.mxu0
    %v735 = vadd.f32 %v655, %v734
    %v736 = vpop.f32.mrf.mxu0
    %v737 = vadd.f32 %v655, %v736
    %738 = vmatmul.bf16.gmra.mxu0 %v626
    %v739 = vpop.f32.mrf.mxu0
    %v740 = vadd.f32 %v655, %v739
    %v741 = vpop.f32.mrf.mxu0
    %v742 = vadd.f32 %v655, %v741
    %743 = vmatmul.bf16.gmra.mxu0 %v627
    %v744 = vpop.f32.mrf.mxu0
    %v745 = vadd.f32 %v655, %v744
    %v746 = vpop.f32.mrf.mxu0
    %v747 = vadd.f32 %v655, %v746
    %748 = vmatmul.bf16.gmra.mxu0 %v628
    %v749 = vpop.f32.mrf.mxu0
    %v750 = vadd.f32 %v655, %v749
    %v751 = vpop.f32.mrf.mxu0
    %v752 = vadd.f32 %v655, %v751
    %753 = vmatmul.bf16.gmra.mxu0 %v629
    %v754 = vpop.f32.mrf.mxu0
    %v755 = vadd.f32 %v655, %v754
    %v756 = vpop.f32.mrf.mxu0
    %v757 = vadd.f32 %v655, %v756
    %758 = vmatmul.bf16.gmra.mxu0 %v630
    %v759 = vpop.f32.mrf.mxu0
    %v760 = vadd.f32 %v655, %v759
    %v761 = vpop.f32.mrf.mxu0
    %v762 = vadd.f32 %v655, %v761
    %763 = vmatmul.bf16.gmra.mxu0 %v631
    %v764 = vpop.f32.mrf.mxu0
    %v765 = vadd.f32 %v655, %v764
    %v766 = vpop.f32.mrf.mxu0
    %v767 = vadd.f32 %v655, %v766
    %768 = vmatmul.bf16.gmra.mxu0 %v632
    %v769 = vpop.f32.mrf.mxu0
    %v770 = vadd.f32 %v655, %v769
    %v771 = vpop.f32.mrf.mxu0
    %v772 = vadd.f32 %v655, %v771
    %773 = vmatmul.bf16.gmra.mxu0 %v633
    %v774 = vpop.f32.mrf.mxu0
    %v775 = vadd.f32 %v655, %v774
    %v776 = vpop.f32.mrf.mxu0
    %v777 = vadd.f32 %v655, %v776
    %778 = vmatmul.bf16.gmra.mxu0 %v634
    %v779 = vpop.f32.mrf.mxu0
    %v780 = vadd.f32 %v655, %v779
    %v781 = vpop.f32.mrf.mxu0
    %v782 = vadd.f32 %v655, %v781
    %783 = vmatmul.bf16.gmra.mxu0 %v635
    %v784 = vpop.f32.mrf.mxu0
    %v785 = vadd.f32 %v655, %v784
    %v786 = vpop.f32.mrf.mxu0
    %v787 = vadd.f32 %v655, %v786
    %788 = vmatmul.bf16.gmra.mxu0 %v636
    %v789 = vpop.f32.mrf.mxu0
    %v790 = vadd.f32 %v655, %v789
    %v791 = vpop.f32.mrf.mxu0
    %v792 = vadd.f32 %v655, %v791
    %793 = vdwg.mxu0
    %v794 = vmul.f32 %v715, 0.5
    %v795 = vmul.f32 %v717, 0.5
    %v796 = vmul.f32 %v720, 0.5
    %v797 = vmul.f32 %v722, 0.5
    %v798 = vmul.f32 %v725, 0.5
    %v799 = vmul.f32 %v727, 0.5
    %v800 = vmul.f32 %v730, 0.5
    %v801 = vmul.f32 %v732, 0.5
    %v802 = vmul.f32 %v735, 0.5
    %v803 = vmul.f32 %v737, 0.5
    %v804 = vmul.f32 %v740, 0.5
    %v805 = vmul.f32 %v742, 0.5
    %v806 = vmul.f32 %v745, 0.5
    %v807 = vmul.f32 %v747, 0.5
    %v808 = vmul.f32 %v750, 0.5
    %v809 = vmul.f32 %v752, 0.5
    %v810 = vmul.f32 %v755, 0.5
    %v811 = vmul.f32 %v757, 0.5
    %v812 = vmul.f32 %v760, 0.5
    %v813 = vmul.f32 %v762, 0.5
    %v814 = vmul.f32 %v765, 0.5
    %v815 = vmul.f32 %v767, 0.5
    %v816 = vmul.f32 %v770, 0.5
    %v817 = vmul.f32 %v772, 0.5
    %v818 = vmul.f32 %v775, 0.5
    %v819 = vmul.f32 %v777, 0.5
    %v820 = vmul.f32 %v780, 0.5
    %v821 = vmul.f32 %v782, 0.5
    %v822 = vmul.f32 %v785, 0.5
    %v823 = vmul.f32 %v787, 0.5
    %v824 = vmul.f32 %v790, 0.5
    %v825 = vmul.f32 %v792, 0.5
    %v826 = vtanh.pop %v794
    %v827 = vtanh.pop %v795
    %v828 = vtanh.pop %v796
    %v829 = vtanh.pop %v797
    %v830 = vtanh.pop %v798
    %v831 = vtanh.pop %v799
    %v832 = vtanh.pop %v800
    %v833 = vtanh.pop %v801
    %v834 = vtanh.pop %v802
    %v835 = vtanh.pop %v803
    %v836 = vtanh.pop %v804
    %v837 = vtanh.pop %v805
    %v838 = vtanh.pop %v806
    %v839 = vtanh.pop %v807
    %v840 = vtanh.pop %v808
    %v841 = vtanh.pop %v809
    %v842 = vtanh.pop %v810
    %v843 = vtanh.pop %v811
    %v844 = vtanh.pop %v812
    %v845 = vtanh.pop %v813
    %v846 = vtanh.pop %v814
    %v847 = vtanh.pop %v815
    %v848 = vtanh.pop %v816
    %v849 = vtanh.pop %v817
    %v850 = vtanh.pop %v818
    %v851 = vtanh.pop %v819
    %v852 = vtanh.pop %v820
    %v853 = vtanh.pop %v821
    %v854 = vtanh.pop %v822
    %v855 = vtanh.pop %v823
    %v856 = vtanh.pop %v824
    %v857 = vtanh.pop %v825
    %v858 = vadd.f32 %v826, 1.0
    %v859 = vadd.f32 %v827, 1.0
    %v860 = vadd.f32 %v828, 1.0
    %v861 = vadd.f32 %v829, 1.0
    %v862 = vadd.f32 %v830, 1.0
    %v863 = vadd.f32 %v831, 1.0
    %v864 = vadd.f32 %v832, 1.0
    %v865 = vadd.f32 %v833, 1.0
    %v866 = vadd.f32 %v834, 1.0
    %v867 = vadd.f32 %v835, 1.0
    %v868 = vadd.f32 %v836, 1.0
    %v869 = vadd.f32 %v837, 1.0
    %v870 = vadd.f32 %v838, 1.0
    %v871 = vadd.f32 %v839, 1.0
    %v872 = vadd.f32 %v840, 1.0
    %v873 = vadd.f32 %v841, 1.0
    %v874 = vadd.f32 %v842, 1.0
    %v875 = vadd.f32 %v843, 1.0
    %v876 = vadd.f32 %v844, 1.0
    %v877 = vadd.f32 %v845, 1.0
    %v878 = vadd.f32 %v846, 1.0
    %v879 = vadd.f32 %v847, 1.0
    %v880 = vadd.f32 %v848, 1.0
    %v881 = vadd.f32 %v849, 1.0
    %v882 = vadd.f32 %v850, 1.0
    %v883 = vadd.f32 %v851, 1.0
    %v884 = vadd.f32 %v852, 1.0
    %v885 = vadd.f32 %v853, 1.0
    %v886 = vadd.f32 %v854, 1.0
    %v887 = vadd.f32 %v855, 1.0
    %v888 = vadd.f32 %v856, 1.0
    %v889 = vadd.f32 %v857, 1.0
    %v890 = vmul.f32 %v858, 0.5
    %v891 = vmul.f32 %v859, 0.5
    %v892 = vmul.f32 %v860, 0.5
    %v893 = vmul.f32 %v861, 0.5
    %v894 = vmul.f32 %v862, 0.5
    %v895 = vmul.f32 %v863, 0.5
    %v896 = vmul.f32 %v864, 0.5
    %v897 = vmul.f32 %v865, 0.5
    %v898 = vmul.f32 %v866, 0.5
    %v899 = vmul.f32 %v867, 0.5
    %v900 = vmul.f32 %v868, 0.5
    %v901 = vmul.f32 %v869, 0.5
    %v902 = vmul.f32 %v870, 0.5
    %v903 = vmul.f32 %v871, 0.5
    %v904 = vmul.f32 %v872, 0.5
    %v905 = vmul.f32 %v873, 0.5
    %v906 = vmul.f32 %v874, 0.5
    %v907 = vmul.f32 %v875, 0.5
    %v908 = vmul.f32 %v876, 0.5
    %v909 = vmul.f32 %v877, 0.5
    %v910 = vmul.f32 %v878, 0.5
    %v911 = vmul.f32 %v879, 0.5
    %v912 = vmul.f32 %v880, 0.5
    %v913 = vmul.f32 %v881, 0.5
    %v914 = vmul.f32 %v882, 0.5
    %v915 = vmul.f32 %v883, 0.5
    %v916 = vmul.f32 %v884, 0.5
    %v917 = vmul.f32 %v885, 0.5
    %v918 = vmul.f32 %v886, 0.5
    %v919 = vmul.f32 %v887, 0.5
    %v920 = vmul.f32 %v888, 0.5
    %v921 = vmul.f32 %v889, 0.5
    %v922 = vmul.f32 %v715, %v890
    %v923 = vmul.f32 %v717, %v891
    %v924 = vmul.f32 %v720, %v892
    %v925 = vmul.f32 %v722, %v893
    %v926 = vmul.f32 %v725, %v894
    %v927 = vmul.f32 %v727, %v895
    %v928 = vmul.f32 %v730, %v896
    %v929 = vmul.f32 %v732, %v897
    %v930 = vmul.f32 %v735, %v898
    %v931 = vmul.f32 %v737, %v899
    %v932 = vmul.f32 %v740, %v900
    %v933 = vmul.f32 %v742, %v901
    %v934 = vmul.f32 %v745, %v902
    %v935 = vmul.f32 %v747, %v903
    %v936 = vmul.f32 %v750, %v904
    %v937 = vmul.f32 %v752, %v905
    %v938 = vmul.f32 %v755, %v906
    %v939 = vmul.f32 %v757, %v907
    %v940 = vmul.f32 %v760, %v908
    %v941 = vmul.f32 %v762, %v909
    %v942 = vmul.f32 %v765, %v910
    %v943 = vmul.f32 %v767, %v911
    %v944 = vmul.f32 %v770, %v912
    %v945 = vmul.f32 %v772, %v913
    %v946 = vmul.f32 %v775, %v914
    %v947 = vmul.f32 %v777, %v915
    %v948 = vmul.f32 %v780, %v916
    %v949 = vmul.f32 %v782, %v917
    %v950 = vmul.f32 %v785, %v918
    %v951 = vmul.f32 %v787, %v919
    %v952 = vmul.f32 %v790, %v920
    %v953 = vmul.f32 %v792, %v921
    %v954 = vpack.c.bf16 %v923, %v922
    %v955 = vpack.c.bf16 %v925, %v924
    %v956 = vpack.c.bf16 %v927, %v926
    %v957 = vpack.c.bf16 %v929, %v928
    %v958 = vpack.c.bf16 %v931, %v930
    %v959 = vpack.c.bf16 %v933, %v932
    %v960 = vpack.c.bf16 %v935, %v934
    %v961 = vpack.c.bf16 %v937, %v936
    %v962 = vpack.c.bf16 %v939, %v938
    %v963 = vpack.c.bf16 %v941, %v940
    %v964 = vpack.c.bf16 %v943, %v942
    %v965 = vpack.c.bf16 %v945, %v944
    %v966 = vpack.c.bf16 %v947, %v946
    %v967 = vpack.c.bf16 %v949, %v948
    %v968 = vpack.c.bf16 %v951, %v950
    %v969 = vpack.c.bf16 %v953, %v952
    %v970 = vld [vmem:[#allocation8] sm:$0xf]
    %v971 = vld [vmem:[#allocation8 + $0x4] sm:$0xf]
    %v972 = vld [vmem:[#allocation8 + $0x8] sm:$0xf]
    %v973 = vld [vmem:[#allocation8 + $0xc] sm:$0xf]
    %v974 = vld [vmem:[#allocation8 + $0x10] sm:$0xf]
    %v975 = vld [vmem:[#allocation8 + $0x14] sm:$0xf]
    %v976 = vld [vmem:[#allocation8 + $0x18] sm:$0xf]
    %v977 = vld [vmem:[#allocation8 + $0x1c] sm:$0xf]
    %v978 = vld [vmem:[#allocation8 + $0x20] sm:$0xf]
    %v979 = vld [vmem:[#allocation8 + $0x24] sm:$0xf]
    %v980 = vld [vmem:[#allocation8 + $0x28] sm:$0xf]
    %v981 = vld [vmem:[#allocation8 + $0x2c] sm:$0xf]
    %v982 = vld [vmem:[#allocation8 + $0x30] sm:$0xf]
    %v983 = vld [vmem:[#allocation8 + $0x34] sm:$0xf]
    %v984 = vld [vmem:[#allocation8 + $0x38] sm:$0xf]
    %v985 = vld [vmem:[#allocation8 + $0x3c] sm:$0xf]
    %v986 = vld [vmem:[%s6] sm:$0x1]
    %v988 = vperm.slane %v986, 0
    %v1006 = vunpack.c.l.b16 %v970
    %v1007 = vunpack.c.l.b16 %v971
    %v1008 = vunpack.c.l.b16 %v972
    %v1009 = vunpack.c.l.b16 %v973
    %v1010 = vunpack.c.l.b16 %v974
    %v1011 = vunpack.c.l.b16 %v975
    %v1012 = vunpack.c.l.b16 %v976
    %v1013 = vunpack.c.l.b16 %v977
    %v1014 = vunpack.c.l.b16 %v978
    %v1015 = vunpack.c.l.b16 %v979
    %v1016 = vunpack.c.l.b16 %v980
    %v1017 = vunpack.c.l.b16 %v981
    %v1018 = vunpack.c.l.b16 %v982
    %v1019 = vunpack.c.l.b16 %v983
    %v1020 = vunpack.c.l.b16 %v984
    %v1021 = vunpack.c.l.b16 %v985
    %v1022 = vpack.c.b16 %v1007, %v1006
    %v1023 = vpack.c.b16 %v1009, %v1008
    %v1024 = vpack.c.b16 %v1011, %v1010
    %v1025 = vpack.c.b16 %v1013, %v1012
    %v1026 = vpack.c.b16 %v1015, %v1014
    %v1027 = vpack.c.b16 %v1017, %v1016
    %v1028 = vpack.c.b16 %v1019, %v1018
    %v1029 = vpack.c.b16 %v1021, %v1020
    %1038 = vmatpush.bf16.msra.mxu0 %v1029
    %1039 = vmatpush.bf16.msra.mxu0 %v1028
    %1040 = vmatpush.bf16.msra.mxu0 %v1027
    %1041 = vmatpush.bf16.msra.mxu0 %v1026
    %1042 = vmatpush.bf16.msra.mxu0 %v1025
    %1043 = vmatpush.bf16.msra.mxu0 %v1024
    %1044 = vmatpush.bf16.msra.mxu0 %v1023
    %1045 = vmatpush.bf16.msra.mxu0 %v1022
    %1046 = vmatmul.bf16.gmra.mxu0 %v954
    %v1047 = vpop.f32.mrf.mxu0
    %v1048 = vadd.f32 %v988, %v1047
    %v1049 = vpop.f32.mrf.mxu0
    %v1050 = vadd.f32 %v988, %v1049
    %1051 = vmatmul.bf16.gmra.mxu0 %v955
    %v1052 = vpop.f32.mrf.mxu0
    %v1053 = vadd.f32 %v988, %v1052
    %v1054 = vpop.f32.mrf.mxu0
    %v1055 = vadd.f32 %v988, %v1054
    %1056 = vmatmul.bf16.gmra.mxu0 %v956
    %v1057 = vpop.f32.mrf.mxu0
    %v1058 = vadd.f32 %v988, %v1057
    %v1059 = vpop.f32.mrf.mxu0
    %v1060 = vadd.f32 %v988, %v1059
    %1061 = vmatmul.bf16.gmra.mxu0 %v957
    %v1062 = vpop.f32.mrf.mxu0
    %v1063 = vadd.f32 %v988, %v1062
    %v1064 = vpop.f32.mrf.mxu0
    %v1065 = vadd.f32 %v988, %v1064
    %1066 = vmatmul.bf16.gmra.mxu0 %v958
    %v1067 = vpop.f32.mrf.mxu0
    %v1068 = vadd.f32 %v988, %v1067
    %v1069 = vpop.f32.mrf.mxu0
    %v1070 = vadd.f32 %v988, %v1069
    %1071 = vmatmul.bf16.gmra.mxu0 %v959
    %v1072 = vpop.f32.mrf.mxu0
    %v1073 = vadd.f32 %v988, %v1072
    %v1074 = vpop.f32.mrf.mxu0
    %v1075 = vadd.f32 %v988, %v1074
    %1076 = vmatmul.bf16.gmra.mxu0 %v960
    %v1077 = vpop.f32.mrf.mxu0
    %v1078 = vadd.f32 %v988, %v1077
    %v1079 = vpop.f32.mrf.mxu0
    %v1080 = vadd.f32 %v988, %v1079
    %1081 = vmatmul.bf16.gmra.mxu0 %v961
    %v1082 = vpop.f32.mrf.mxu0
    %v1083 = vadd.f32 %v988, %v1082
    %v1084 = vpop.f32.mrf.mxu0
    %v1085 = vadd.f32 %v988, %v1084
    %1086 = vmatmul.bf16.gmra.mxu0 %v962
    %v1087 = vpop.f32.mrf.mxu0
    %v1088 = vadd.f32 %v988, %v1087
    %v1089 = vpop.f32.mrf.mxu0
    %v1090 = vadd.f32 %v988, %v1089
    %1091 = vmatmul.bf16.gmra.mxu0 %v963
    %v1092 = vpop.f32.mrf.mxu0
    %v1093 = vadd.f32 %v988, %v1092
    %v1094 = vpop.f32.mrf.mxu0
    %v1095 = vadd.f32 %v988, %v1094
    %1096 = vmatmul.bf16.gmra.mxu0 %v964
    %v1097 = vpop.f32.mrf.mxu0
    %v1098 = vadd.f32 %v988, %v1097
    %v1099 = vpop.f32.mrf.mxu0
    %v1100 = vadd.f32 %v988, %v1099
    %1101 = vmatmul.bf16.gmra.mxu0 %v965
    %v1102 = vpop.f32.mrf.mxu0
    %v1103 = vadd.f32 %v988, %v1102
    %v1104 = vpop.f32.mrf.mxu0
    %v1105 = vadd.f32 %v988, %v1104
    %1106 = vmatmul.bf16.gmra.mxu0 %v966
    %v1107 = vpop.f32.mrf.mxu0
    %v1108 = vadd.f32 %v988, %v1107
    %v1109 = vpop.f32.mrf.mxu0
    %v1110 = vadd.f32 %v988, %v1109
    %1111 = vmatmul.bf16.gmra.mxu0 %v967
    %v1112 = vpop.f32.mrf.mxu0
    %v1113 = vadd.f32 %v988, %v1112
    %v1114 = vpop.f32.mrf.mxu0
    %v1115 = vadd.f32 %v988, %v1114
    %1116 = vmatmul.bf16.gmra.mxu0 %v968
    %v1117 = vpop.f32.mrf.mxu0
    %v1118 = vadd.f32 %v988, %v1117
    %v1119 = vpop.f32.mrf.mxu0
    %v1120 = vadd.f32 %v988, %v1119
    %1121 = vmatmul.bf16.gmra.mxu0 %v969
    %v1122 = vpop.f32.mrf.mxu0
    %v1123 = vadd.f32 %v988, %v1122
    %v1124 = vpop.f32.mrf.mxu0
    %v1125 = vadd.f32 %v988, %v1124
    %1126 = vdwg.mxu0
    %v1127 = vmul.f32 %v1048, 0.5
    %v1128 = vmul.f32 %v1050, 0.5
    %v1129 = vmul.f32 %v1053, 0.5
    %v1130 = vmul.f32 %v1055, 0.5
    %v1131 = vmul.f32 %v1058, 0.5
    %v1132 = vmul.f32 %v1060, 0.5
    %v1133 = vmul.f32 %v1063, 0.5
    %v1134 = vmul.f32 %v1065, 0.5
    %v1135 = vmul.f32 %v1068, 0.5
    %v1136 = vmul.f32 %v1070, 0.5
    %v1137 = vmul.f32 %v1073, 0.5
    %v1138 = vmul.f32 %v1075, 0.5
    %v1139 = vmul.f32 %v1078, 0.5
    %v1140 = vmul.f32 %v1080, 0.5
    %v1141 = vmul.f32 %v1083, 0.5
    %v1142 = vmul.f32 %v1085, 0.5
    %v1143 = vmul.f32 %v1088, 0.5
    %v1144 = vmul.f32 %v1090, 0.5
    %v1145 = vmul.f32 %v1093, 0.5
    %v1146 = vmul.f32 %v1095, 0.5
    %v1147 = vmul.f32 %v1098, 0.5
    %v1148 = vmul.f32 %v1100, 0.5
    %v1149 = vmul.f32 %v1103, 0.5
    %v1150 = vmul.f32 %v1105, 0.5
    %v1151 = vmul.f32 %v1108, 0.5
    %v1152 = vmul.f32 %v1110, 0.5
    %v1153 = vmul.f32 %v1113, 0.5
    %v1154 = vmul.f32 %v1115, 0.5
    %v1155 = vmul.f32 %v1118, 0.5
    %v1156 = vmul.f32 %v1120, 0.5
    %v1157 = vmul.f32 %v1123, 0.5
    %v1158 = vmul.f32 %v1125, 0.5
    %v1159 = vtanh.pop %v1127
    %v1160 = vtanh.pop %v1128
    %v1161 = vtanh.pop %v1129
    %v1162 = vtanh.pop %v1130
    %v1163 = vtanh.pop %v1131
    %v1164 = vtanh.pop %v1132
    %v1165 = vtanh.pop %v1133
    %v1166 = vtanh.pop %v1134
    %v1167 = vtanh.pop %v1135
    %v1168 = vtanh.pop %v1136
    %v1169 = vtanh.pop %v1137
    %v1170 = vtanh.pop %v1138
    %v1171 = vtanh.pop %v1139
    %v1172 = vtanh.pop %v1140
    %v1173 = vtanh.pop %v1141
    %v1174 = vtanh.pop %v1142
    %v1175 = vtanh.pop %v1143
    %v1176 = vtanh.pop %v1144
    %v1177 = vtanh.pop %v1145
    %v1178 = vtanh.pop %v1146
    %v1179 = vtanh.pop %v1147
    %v1180 = vtanh.pop %v1148
    %v1181 = vtanh.pop %v1149
    %v1182 = vtanh.pop %v1150
    %v1183 = vtanh.pop %v1151
    %v1184 = vtanh.pop %v1152
    %v1185 = vtanh.pop %v1153
    %v1186 = vtanh.pop %v1154
    %v1187 = vtanh.pop %v1155
    %v1188 = vtanh.pop %v1156
    %v1189 = vtanh.pop %v1157
    %v1190 = vtanh.pop %v1158
    %v1191 = vadd.f32 %v1159, 1.0
    %v1192 = vadd.f32 %v1160, 1.0
    %v1193 = vadd.f32 %v1161, 1.0
    %v1194 = vadd.f32 %v1162, 1.0
    %v1195 = vadd.f32 %v1163, 1.0
    %v1196 = vadd.f32 %v1164, 1.0
    %v1197 = vadd.f32 %v1165, 1.0
    %v1198 = vadd.f32 %v1166, 1.0
    %v1199 = vadd.f32 %v1167, 1.0
    %v1200 = vadd.f32 %v1168, 1.0
    %v1201 = vadd.f32 %v1169, 1.0
    %v1202 = vadd.f32 %v1170, 1.0
    %v1203 = vadd.f32 %v1171, 1.0
    %v1204 = vadd.f32 %v1172, 1.0
    %v1205 = vadd.f32 %v1173, 1.0
    %v1206 = vadd.f32 %v1174, 1.0
    %v1207 = vadd.f32 %v1175, 1.0
    %v1208 = vadd.f32 %v1176, 1.0
    %v1209 = vadd.f32 %v1177, 1.0
    %v1210 = vadd.f32 %v1178, 1.0
    %v1211 = vadd.f32 %v1179, 1.0
    %v1212 = vadd.f32 %v1180, 1.0
    %v1213 = vadd.f32 %v1181, 1.0
    %v1214 = vadd.f32 %v1182, 1.0
    %v1215 = vadd.f32 %v1183, 1.0
    %v1216 = vadd.f32 %v1184, 1.0
    %v1217 = vadd.f32 %v1185, 1.0
    %v1218 = vadd.f32 %v1186, 1.0
    %v1219 = vadd.f32 %v1187, 1.0
    %v1220 = vadd.f32 %v1188, 1.0
    %v1221 = vadd.f32 %v1189, 1.0
    %v1222 = vadd.f32 %v1190, 1.0
    %v1223 = vmul.f32 %v1191, 0.5
    %v1224 = vmul.f32 %v1192, 0.5
    %v1225 = vmul.f32 %v1193, 0.5
    %v1226 = vmul.f32 %v1194, 0.5
    %v1227 = vmul.f32 %v1195, 0.5
    %v1228 = vmul.f32 %v1196, 0.5
    %v1229 = vmul.f32 %v1197, 0.5
    %v1230 = vmul.f32 %v1198, 0.5
    %v1231 = vmul.f32 %v1199, 0.5
    %v1232 = vmul.f32 %v1200, 0.5
    %v1233 = vmul.f32 %v1201, 0.5
    %v1234 = vmul.f32 %v1202, 0.5
    %v1235 = vmul.f32 %v1203, 0.5
    %v1236 = vmul.f32 %v1204, 0.5
    %v1237 = vmul.f32 %v1205, 0.5
    %v1238 = vmul.f32 %v1206, 0.5
    %v1239 = vmul.f32 %v1207, 0.5
    %v1240 = vmul.f32 %v1208, 0.5
    %v1241 = vmul.f32 %v1209, 0.5
    %v1242 = vmul.f32 %v1210, 0.5
    %v1243 = vmul.f32 %v1211, 0.5
    %v1244 = vmul.f32 %v1212, 0.5
    %v1245 = vmul.f32 %v1213, 0.5
    %v1246 = vmul.f32 %v1214, 0.5
    %v1247 = vmul.f32 %v1215, 0.5
    %v1248 = vmul.f32 %v1216, 0.5
    %v1249 = vmul.f32 %v1217, 0.5
    %v1250 = vmul.f32 %v1218, 0.5
    %v1251 = vmul.f32 %v1219, 0.5
    %v1252 = vmul.f32 %v1220, 0.5
    %v1253 = vmul.f32 %v1221, 0.5
    %v1254 = vmul.f32 %v1222, 0.5
    %v1255 = vmul.f32 %v1048, %v1223
    %v1256 = vmul.f32 %v1050, %v1224
    %v1257 = vmul.f32 %v1053, %v1225
    %v1258 = vmul.f32 %v1055, %v1226
    %v1259 = vmul.f32 %v1058, %v1227
    %v1260 = vmul.f32 %v1060, %v1228
    %v1261 = vmul.f32 %v1063, %v1229
    %v1262 = vmul.f32 %v1065, %v1230
    %v1263 = vmul.f32 %v1068, %v1231
    %v1264 = vmul.f32 %v1070, %v1232
    %v1265 = vmul.f32 %v1073, %v1233
    %v1266 = vmul.f32 %v1075, %v1234
    %v1267 = vmul.f32 %v1078, %v1235
    %v1268 = vmul.f32 %v1080, %v1236
    %v1269 = vmul.f32 %v1083, %v1237
    %v1270 = vmul.f32 %v1085, %v1238
    %v1271 = vmul.f32 %v1088, %v1239
    %v1272 = vmul.f32 %v1090, %v1240
    %v1273 = vmul.f32 %v1093, %v1241
    %v1274 = vmul.f32 %v1095, %v1242
    %v1275 = vmul.f32 %v1098, %v1243
    %v1276 = vmul.f32 %v1100, %v1244
    %v1277 = vmul.f32 %v1103, %v1245
    %v1278 = vmul.f32 %v1105, %v1246
    %v1279 = vmul.f32 %v1108, %v1247
    %v1280 = vmul.f32 %v1110, %v1248
    %v1281 = vmul.f32 %v1113, %v1249
    %v1282 = vmul.f32 %v1115, %v1250
    %v1283 = vmul.f32 %v1118, %v1251
    %v1284 = vmul.f32 %v1120, %v1252
    %v1285 = vmul.f32 %v1123, %v1253
    %v1286 = vmul.f32 %v1125, %v1254
    %v1287 = vpack.c.bf16 %v1256, %v1255
    %v1288 = vpack.c.bf16 %v1258, %v1257
    %v1289 = vpack.c.bf16 %v1260, %v1259
    %v1290 = vpack.c.bf16 %v1262, %v1261
    %v1291 = vpack.c.bf16 %v1264, %v1263
    %v1292 = vpack.c.bf16 %v1266, %v1265
    %v1293 = vpack.c.bf16 %v1268, %v1267
    %v1294 = vpack.c.bf16 %v1270, %v1269
    %v1295 = vpack.c.bf16 %v1272, %v1271
    %v1296 = vpack.c.bf16 %v1274, %v1273
    %v1297 = vpack.c.bf16 %v1276, %v1275
    %v1298 = vpack.c.bf16 %v1278, %v1277
    %v1299 = vpack.c.bf16 %v1280, %v1279
    %v1300 = vpack.c.bf16 %v1282, %v1281
    %v1301 = vpack.c.bf16 %v1284, %v1283
    %v1302 = vpack.c.bf16 %v1286, %v1285
    %v1303 = vld [vmem:[#allocation10] sm:$0xf]
    %v1304 = vld [vmem:[#allocation10 + $0x4] sm:$0xf]
    %v1305 = vld [vmem:[#allocation10 + $0x8] sm:$0xf]
    %v1306 = vld [vmem:[#allocation10 + $0xc] sm:$0xf]
    %v1307 = vld [vmem:[#allocation10 + $0x10] sm:$0xf]
    %v1308 = vld [vmem:[#allocation10 + $0x14] sm:$0xf]
    %v1309 = vld [vmem:[#allocation10 + $0x18] sm:$0xf]
    %v1310 = vld [vmem:[#allocation10 + $0x1c] sm:$0xf]
    %v1311 = vld [vmem:[#allocation10 + $0x20] sm:$0xf]
    %v1312 = vld [vmem:[#allocation10 + $0x24] sm:$0xf]
    %v1313 = vld [vmem:[#allocation10 + $0x28] sm:$0xf]
    %v1314 = vld [vmem:[#allocation10 + $0x2c] sm:$0xf]
    %v1315 = vld [vmem:[#allocation10 + $0x30] sm:$0xf]
    %v1316 = vld [vmem:[#allocation10 + $0x34] sm:$0xf]
    %v1317 = vld [vmem:[#allocation10 + $0x38] sm:$0xf]
    %v1318 = vld [vmem:[#allocation10 + $0x3c] sm:$0xf]
    %v1319 = vld [vmem:[%s8] sm:$0x1]
    %v1321 = vperm.slane %v1319, 0
    %v1339 = vunpack.c.l.b16 %v1303
    %v1340 = vunpack.c.l.b16 %v1304
    %v1341 = vunpack.c.l.b16 %v1305
    %v1342 = vunpack.c.l.b16 %v1306
    %v1343 = vunpack.c.l.b16 %v1307
    %v1344 = vunpack.c.l.b16 %v1308
    %v1345 = vunpack.c.l.b16 %v1309
    %v1346 = vunpack.c.l.b16 %v1310
    %v1347 = vunpack.c.l.b16 %v1311
    %v1348 = vunpack.c.l.b16 %v1312
    %v1349 = vunpack.c.l.b16 %v1313
    %v1350 = vunpack.c.l.b16 %v1314
    %v1351 = vunpack.c.l.b16 %v1315
    %v1352 = vunpack.c.l.b16 %v1316
    %v1353 = vunpack.c.l.b16 %v1317
    %v1354 = vunpack.c.l.b16 %v1318
    %v1355 = vpack.c.b16 %v1340, %v1339
    %v1356 = vpack.c.b16 %v1342, %v1341
    %v1357 = vpack.c.b16 %v1344, %v1343
    %v1358 = vpack.c.b16 %v1346, %v1345
    %v1359 = vpack.c.b16 %v1348, %v1347
    %v1360 = vpack.c.b16 %v1350, %v1349
    %v1361 = vpack.c.b16 %v1352, %v1351
    %v1362 = vpack.c.b16 %v1354, %v1353
    %1371 = vmatpush.bf16.msra.mxu0 %v1362
    %1372 = vmatpush.bf16.msra.mxu0 %v1361
    %1373 = vmatpush.bf16.msra.mxu0 %v1360
    %1374 = vmatpush.bf16.msra.mxu0 %v1359
    %1375 = vmatpush.bf16.msra.mxu0 %v1358
    %1376 = vmatpush.bf16.msra.mxu0 %v1357
    %1377 = vmatpush.bf16.msra.mxu0 %v1356
    %1378 = vmatpush.bf16.msra.mxu0 %v1355
    %1379 = vmatmul.bf16.gmra.mxu0 %v1287
    %v1380 = vpop.f32.mrf.mxu0
    %v1381 = vadd.f32 %v1321, %v1380
    %v1382 = vpop.f32.mrf.mxu0
    %v1383 = vadd.f32 %v1321, %v1382
    %1384 = vmatmul.bf16.gmra.mxu0 %v1288
    %v1385 = vpop.f32.mrf.mxu0
    %v1386 = vadd.f32 %v1321, %v1385
    %v1387 = vpop.f32.mrf.mxu0
    %v1388 = vadd.f32 %v1321, %v1387
    %1389 = vmatmul.bf16.gmra.mxu0 %v1289
    %v1390 = vpop.f32.mrf.mxu0
    %v1391 = vadd.f32 %v1321, %v1390
    %v1392 = vpop.f32.mrf.mxu0
    %v1393 = vadd.f32 %v1321, %v1392
    %1394 = vmatmul.bf16.gmra.mxu0 %v1290
    %v1395 = vpop.f32.mrf.mxu0
    %v1396 = vadd.f32 %v1321, %v1395
    %v1397 = vpop.f32.mrf.mxu0
    %v1398 = vadd.f32 %v1321, %v1397
    %1399 = vmatmul.bf16.gmra.mxu0 %v1291
    %v1400 = vpop.f32.mrf.mxu0
    %v1401 = vadd.f32 %v1321, %v1400
    %v1402 = vpop.f32.mrf.mxu0
    %v1403 = vadd.f32 %v1321, %v1402
    %1404 = vmatmul.bf16.gmra.mxu0 %v1292
    %v1405 = vpop.f32.mrf.mxu0
    %v1406 = vadd.f32 %v1321, %v1405
    %v1407 = vpop.f32.mrf.mxu0
    %v1408 = vadd.f32 %v1321, %v1407
    %1409 = vmatmul.bf16.gmra.mxu0 %v1293
    %v1410 = vpop.f32.mrf.mxu0
    %v1411 = vadd.f32 %v1321, %v1410
    %v1412 = vpop.f32.mrf.mxu0
    %v1413 = vadd.f32 %v1321, %v1412
    %1414 = vmatmul.bf16.gmra.mxu0 %v1294
    %v1415 = vpop.f32.mrf.mxu0
    %v1416 = vadd.f32 %v1321, %v1415
    %v1417 = vpop.f32.mrf.mxu0
    %v1418 = vadd.f32 %v1321, %v1417
    %1419 = vmatmul.bf16.gmra.mxu0 %v1295
    %v1420 = vpop.f32.mrf.mxu0
    %v1421 = vadd.f32 %v1321, %v1420
    %v1422 = vpop.f32.mrf.mxu0
    %v1423 = vadd.f32 %v1321, %v1422
    %1424 = vmatmul.bf16.gmra.mxu0 %v1296
    %v1425 = vpop.f32.mrf.mxu0
    %v1426 = vadd.f32 %v1321, %v1425
    %v1427 = vpop.f32.mrf.mxu0
    %v1428 = vadd.f32 %v1321, %v1427
    %1429 = vmatmul.bf16.gmra.mxu0 %v1297
    %v1430 = vpop.f32.mrf.mxu0
    %v1431 = vadd.f32 %v1321, %v1430
    %v1432 = vpop.f32.mrf.mxu0
    %v1433 = vadd.f32 %v1321, %v1432
    %1434 = vmatmul.bf16.gmra.mxu0 %v1298
    %v1435 = vpop.f32.mrf.mxu0
    %v1436 = vadd.f32 %v1321, %v1435
    %v1437 = vpop.f32.mrf.mxu0
    %v1438 = vadd.f32 %v1321, %v1437
    %1439 = vmatmul.bf16.gmra.mxu0 %v1299
    %v1440 = vpop.f32.mrf.mxu0
    %v1441 = vadd.f32 %v1321, %v1440
    %v1442 = vpop.f32.mrf.mxu0
    %v1443 = vadd.f32 %v1321, %v1442
    %1444 = vmatmul.bf16.gmra.mxu0 %v1300
    %v1445 = vpop.f32.mrf.mxu0
    %v1446 = vadd.f32 %v1321, %v1445
    %v1447 = vpop.f32.mrf.mxu0
    %v1448 = vadd.f32 %v1321, %v1447
    %1449 = vmatmul.bf16.gmra.mxu0 %v1301
    %v1450 = vpop.f32.mrf.mxu0
    %v1451 = vadd.f32 %v1321, %v1450
    %v1452 = vpop.f32.mrf.mxu0
    %v1453 = vadd.f32 %v1321, %v1452
    %1454 = vmatmul.bf16.gmra.mxu0 %v1302
    %v1455 = vpop.f32.mrf.mxu0
    %v1456 = vadd.f32 %v1321, %v1455
    %v1457 = vpop.f32.mrf.mxu0
    %v1458 = vadd.f32 %v1321, %v1457
    %1459 = vdwg.mxu0
    %v1460 = vmul.f32 %v1381, 0.5
    %v1461 = vmul.f32 %v1383, 0.5
    %v1462 = vmul.f32 %v1386, 0.5
    %v1463 = vmul.f32 %v1388, 0.5
    %v1464 = vmul.f32 %v1391, 0.5
    %v1465 = vmul.f32 %v1393, 0.5
    %v1466 = vmul.f32 %v1396, 0.5
    %v1467 = vmul.f32 %v1398, 0.5
    %v1468 = vmul.f32 %v1401, 0.5
    %v1469 = vmul.f32 %v1403, 0.5
    %v1470 = vmul.f32 %v1406, 0.5
    %v1471 = vmul.f32 %v1408, 0.5
    %v1472 = vmul.f32 %v1411, 0.5
    %v1473 = vmul.f32 %v1413, 0.5
    %v1474 = vmul.f32 %v1416, 0.5
    %v1475 = vmul.f32 %v1418, 0.5
    %v1476 = vmul.f32 %v1421, 0.5
    %v1477 = vmul.f32 %v1423, 0.5
    %v1478 = vmul.f32 %v1426, 0.5
    %v1479 = vmul.f32 %v1428, 0.5
    %v1480 = vmul.f32 %v1431, 0.5
    %v1481 = vmul.f32 %v1433, 0.5
    %v1482 = vmul.f32 %v1436, 0.5
    %v1483 = vmul.f32 %v1438, 0.5
    %v1484 = vmul.f32 %v1441, 0.5
    %v1485 = vmul.f32 %v1443, 0.5
    %v1486 = vmul.f32 %v1446, 0.5
    %v1487 = vmul.f32 %v1448, 0.5
    %v1488 = vmul.f32 %v1451, 0.5
    %v1489 = vmul.f32 %v1453, 0.5
    %v1490 = vmul.f32 %v1456, 0.5
    %v1491 = vmul.f32 %v1458, 0.5
    %v1492 = vtanh.pop %v1460
    %v1493 = vtanh.pop %v1461
    %v1494 = vtanh.pop %v1462
    %v1495 = vtanh.pop %v1463
    %v1496 = vtanh.pop %v1464
    %v1497 = vtanh.pop %v1465
    %v1498 = vtanh.pop %v1466
    %v1499 = vtanh.pop %v1467
    %v1500 = vtanh.pop %v1468
    %v1501 = vtanh.pop %v1469
    %v1502 = vtanh.pop %v1470
    %v1503 = vtanh.pop %v1471
    %v1504 = vtanh.pop %v1472
    %v1505 = vtanh.pop %v1473
    %v1506 = vtanh.pop %v1474
    %v1507 = vtanh.pop %v1475
    %v1508 = vtanh.pop %v1476
    %v1509 = vtanh.pop %v1477
    %v1510 = vtanh.pop %v1478
    %v1511 = vtanh.pop %v1479
    %v1512 = vtanh.pop %v1480
    %v1513 = vtanh.pop %v1481
    %v1514 = vtanh.pop %v1482
    %v1515 = vtanh.pop %v1483
    %v1516 = vtanh.pop %v1484
    %v1517 = vtanh.pop %v1485
    %v1518 = vtanh.pop %v1486
    %v1519 = vtanh.pop %v1487
    %v1520 = vtanh.pop %v1488
    %v1521 = vtanh.pop %v1489
    %v1522 = vtanh.pop %v1490
    %v1523 = vtanh.pop %v1491
    %v1524 = vadd.f32 %v1492, 1.0
    %v1525 = vadd.f32 %v1493, 1.0
    %v1526 = vadd.f32 %v1494, 1.0
    %v1527 = vadd.f32 %v1495, 1.0
    %v1528 = vadd.f32 %v1496, 1.0
    %v1529 = vadd.f32 %v1497, 1.0
    %v1530 = vadd.f32 %v1498, 1.0
    %v1531 = vadd.f32 %v1499, 1.0
    %v1532 = vadd.f32 %v1500, 1.0
    %v1533 = vadd.f32 %v1501, 1.0
    %v1534 = vadd.f32 %v1502, 1.0
    %v1535 = vadd.f32 %v1503, 1.0
    %v1536 = vadd.f32 %v1504, 1.0
    %v1537 = vadd.f32 %v1505, 1.0
    %v1538 = vadd.f32 %v1506, 1.0
    %v1539 = vadd.f32 %v1507, 1.0
    %v1540 = vadd.f32 %v1508, 1.0
    %v1541 = vadd.f32 %v1509, 1.0
    %v1542 = vadd.f32 %v1510, 1.0
    %v1543 = vadd.f32 %v1511, 1.0
    %v1544 = vadd.f32 %v1512, 1.0
    %v1545 = vadd.f32 %v1513, 1.0
    %v1546 = vadd.f32 %v1514, 1.0
    %v1547 = vadd.f32 %v1515, 1.0
    %v1548 = vadd.f32 %v1516, 1.0
    %v1549 = vadd.f32 %v1517, 1.0
    %v1550 = vadd.f32 %v1518, 1.0
    %v1551 = vadd.f32 %v1519, 1.0
    %v1552 = vadd.f32 %v1520, 1.0
    %v1553 = vadd.f32 %v1521, 1.0
    %v1554 = vadd.f32 %v1522, 1.0
    %v1555 = vadd.f32 %v1523, 1.0
    %v1556 = vmul.f32 %v1524, 0.5
    %v1557 = vmul.f32 %v1525, 0.5
    %v1558 = vmul.f32 %v1526, 0.5
    %v1559 = vmul.f32 %v1527, 0.5
    %v1560 = vmul.f32 %v1528, 0.5
    %v1561 = vmul.f32 %v1529, 0.5
    %v1562 = vmul.f32 %v1530, 0.5
    %v1563 = vmul.f32 %v1531, 0.5
    %v1564 = vmul.f32 %v1532, 0.5
    %v1565 = vmul.f32 %v1533, 0.5
    %v1566 = vmul.f32 %v1534, 0.5
    %v1567 = vmul.f32 %v1535, 0.5
    %v1568 = vmul.f32 %v1536, 0.5
    %v1569 = vmul.f32 %v1537, 0.5
    %v1570 = vmul.f32 %v1538, 0.5
    %v1571 = vmul.f32 %v1539, 0.5
    %v1572 = vmul.f32 %v1540, 0.5
    %v1573 = vmul.f32 %v1541, 0.5
    %v1574 = vmul.f32 %v1542, 0.5
    %v1575 = vmul.f32 %v1543, 0.5
    %v1576 = vmul.f32 %v1544, 0.5
    %v1577 = vmul.f32 %v1545, 0.5
    %v1578 = vmul.f32 %v1546, 0.5
    %v1579 = vmul.f32 %v1547, 0.5
    %v1580 = vmul.f32 %v1548, 0.5
    %v1581 = vmul.f32 %v1549, 0.5
    %v1582 = vmul.f32 %v1550, 0.5
    %v1583 = vmul.f32 %v1551, 0.5
    %v1584 = vmul.f32 %v1552, 0.5
    %v1585 = vmul.f32 %v1553, 0.5
    %v1586 = vmul.f32 %v1554, 0.5
    %v1587 = vmul.f32 %v1555, 0.5
    %v1588 = vmul.f32 %v1381, %v1556
    %v1589 = vmul.f32 %v1383, %v1557
    %v1590 = vmul.f32 %v1386, %v1558
    %v1591 = vmul.f32 %v1388, %v1559
    %v1592 = vmul.f32 %v1391, %v1560
    %v1593 = vmul.f32 %v1393, %v1561
    %v1594 = vmul.f32 %v1396, %v1562
    %v1595 = vmul.f32 %v1398, %v1563
    %v1596 = vmul.f32 %v1401, %v1564
    %v1597 = vmul.f32 %v1403, %v1565
    %v1598 = vmul.f32 %v1406, %v1566
    %v1599 = vmul.f32 %v1408, %v1567
    %v1600 = vmul.f32 %v1411, %v1568
    %v1601 = vmul.f32 %v1413, %v1569
    %v1602 = vmul.f32 %v1416, %v1570
    %v1603 = vmul.f32 %v1418, %v1571
    %v1604 = vmul.f32 %v1421, %v1572
    %v1605 = vmul.f32 %v1423, %v1573
    %v1606 = vmul.f32 %v1426, %v1574
    %v1607 = vmul.f32 %v1428, %v1575
    %v1608 = vmul.f32 %v1431, %v1576
    %v1609 = vmul.f32 %v1433, %v1577
    %v1610 = vmul.f32 %v1436, %v1578
    %v1611 = vmul.f32 %v1438, %v1579
    %v1612 = vmul.f32 %v1441, %v1580
    %v1613 = vmul.f32 %v1443, %v1581
    %v1614 = vmul.f32 %v1446, %v1582
    %v1615 = vmul.f32 %v1448, %v1583
    %v1616 = vmul.f32 %v1451, %v1584
    %v1617 = vmul.f32 %v1453, %v1585
    %v1618 = vmul.f32 %v1456, %v1586
    %v1619 = vmul.f32 %v1458, %v1587
    %v1620 = vpack.c.bf16 %v1589, %v1588
    %v1621 = vpack.c.bf16 %v1591, %v1590
    %v1622 = vpack.c.bf16 %v1593, %v1592
    %v1623 = vpack.c.bf16 %v1595, %v1594
    %v1624 = vpack.c.bf16 %v1597, %v1596
    %v1625 = vpack.c.bf16 %v1599, %v1598
    %v1626 = vpack.c.bf16 %v1601, %v1600
    %v1627 = vpack.c.bf16 %v1603, %v1602
    %v1628 = vpack.c.bf16 %v1605, %v1604
    %v1629 = vpack.c.bf16 %v1607, %v1606
    %v1630 = vpack.c.bf16 %v1609, %v1608
    %v1631 = vpack.c.bf16 %v1611, %v1610
    %v1632 = vpack.c.bf16 %v1613, %v1612
    %v1633 = vpack.c.bf16 %v1615, %v1614
    %v1634 = vpack.c.bf16 %v1617, %v1616
    %v1635 = vpack.c.bf16 %v1619, %v1618
    %v1636 = vld [vmem:[#allocation11] sm:$0xf]
    %v1637 = vld [vmem:[#allocation11 + $0x4] sm:$0xf]
    %v1638 = vld [vmem:[#allocation11 + $0x8] sm:$0xf]
    %v1639 = vld [vmem:[#allocation11 + $0xc] sm:$0xf]
    %v1640 = vld [vmem:[#allocation11 + $0x10] sm:$0xf]
    %v1641 = vld [vmem:[#allocation11 + $0x14] sm:$0xf]
    %v1642 = vld [vmem:[#allocation11 + $0x18] sm:$0xf]
    %v1643 = vld [vmem:[#allocation11 + $0x1c] sm:$0xf]
    %v1644 = vld [vmem:[#allocation11 + $0x20] sm:$0xf]
    %v1645 = vld [vmem:[#allocation11 + $0x24] sm:$0xf]
    %v1646 = vld [vmem:[#allocation11 + $0x28] sm:$0xf]
    %v1647 = vld [vmem:[#allocation11 + $0x2c] sm:$0xf]
    %v1648 = vld [vmem:[#allocation11 + $0x30] sm:$0xf]
    %v1649 = vld [vmem:[#allocation11 + $0x34] sm:$0xf]
    %v1650 = vld [vmem:[#allocation11 + $0x38] sm:$0xf]
    %v1651 = vld [vmem:[#allocation11 + $0x3c] sm:$0xf]
    %v1652 = vld [vmem:[%s10] sm:$0x1]
    %v1654 = vperm.slane %v1652, 0
    %v1672 = vunpack.c.l.b16 %v1636
    %v1673 = vunpack.c.l.b16 %v1637
    %v1674 = vunpack.c.l.b16 %v1638
    %v1675 = vunpack.c.l.b16 %v1639
    %v1676 = vunpack.c.l.b16 %v1640
    %v1677 = vunpack.c.l.b16 %v1641
    %v1678 = vunpack.c.l.b16 %v1642
    %v1679 = vunpack.c.l.b16 %v1643
    %v1680 = vunpack.c.l.b16 %v1644
    %v1681 = vunpack.c.l.b16 %v1645
    %v1682 = vunpack.c.l.b16 %v1646
    %v1683 = vunpack.c.l.b16 %v1647
    %v1684 = vunpack.c.l.b16 %v1648
    %v1685 = vunpack.c.l.b16 %v1649
    %v1686 = vunpack.c.l.b16 %v1650
    %v1687 = vunpack.c.l.b16 %v1651
    %v1688 = vpack.c.b16 %v1673, %v1672
    %v1689 = vpack.c.b16 %v1675, %v1674
    %v1690 = vpack.c.b16 %v1677, %v1676
    %v1691 = vpack.c.b16 %v1679, %v1678
    %v1692 = vpack.c.b16 %v1681, %v1680
    %v1693 = vpack.c.b16 %v1683, %v1682
    %v1694 = vpack.c.b16 %v1685, %v1684
    %v1695 = vpack.c.b16 %v1687, %v1686
    %1704 = vmatpush.bf16.msra.mxu0 %v1695
    %1705 = vmatpush.bf16.msra.mxu0 %v1694
    %1706 = vmatpush.bf16.msra.mxu0 %v1693
    %1707 = vmatpush.bf16.msra.mxu0 %v1692
    %1708 = vmatpush.bf16.msra.mxu0 %v1691
    %1709 = vmatpush.bf16.msra.mxu0 %v1690
    %1710 = vmatpush.bf16.msra.mxu0 %v1689
    %1711 = vmatpush.bf16.msra.mxu0 %v1688
    %1712 = vmatmul.bf16.gmra.mxu0 %v1620
    %v1713 = vpop.f32.mrf.mxu0
    %v1714 = vadd.f32 %v1654, %v1713
    %v1715 = vpop.f32.mrf.mxu0
    %v1716 = vadd.f32 %v1654, %v1715
    %1717 = vmatmul.bf16.gmra.mxu0 %v1621
    %v1718 = vpop.f32.mrf.mxu0
    %v1719 = vadd.f32 %v1654, %v1718
    %v1720 = vpop.f32.mrf.mxu0
    %v1721 = vadd.f32 %v1654, %v1720
    %1722 = vmatmul.bf16.gmra.mxu0 %v1622
    %v1723 = vpop.f32.mrf.mxu0
    %v1724 = vadd.f32 %v1654, %v1723
    %v1725 = vpop.f32.mrf.mxu0
    %v1726 = vadd.f32 %v1654, %v1725
    %1727 = vmatmul.bf16.gmra.mxu0 %v1623
    %v1728 = vpop.f32.mrf.mxu0
    %v1729 = vadd.f32 %v1654, %v1728
    %v1730 = vpop.f32.mrf.mxu0
    %v1731 = vadd.f32 %v1654, %v1730
    %1732 = vmatmul.bf16.gmra.mxu0 %v1624
    %v1733 = vpop.f32.mrf.mxu0
    %v1734 = vadd.f32 %v1654, %v1733
    %v1735 = vpop.f32.mrf.mxu0
    %v1736 = vadd.f32 %v1654, %v1735
    %1737 = vmatmul.bf16.gmra.mxu0 %v1625
    %v1738 = vpop.f32.mrf.mxu0
    %v1739 = vadd.f32 %v1654, %v1738
    %v1740 = vpop.f32.mrf.mxu0
    %v1741 = vadd.f32 %v1654, %v1740
    %1742 = vmatmul.bf16.gmra.mxu0 %v1626
    %v1743 = vpop.f32.mrf.mxu0
    %v1744 = vadd.f32 %v1654, %v1743
    %v1745 = vpop.f32.mrf.mxu0
    %v1746 = vadd.f32 %v1654, %v1745
    %1747 = vmatmul.bf16.gmra.mxu0 %v1627
    %v1748 = vpop.f32.mrf.mxu0
    %v1749 = vadd.f32 %v1654, %v1748
    %v1750 = vpop.f32.mrf.mxu0
    %v1751 = vadd.f32 %v1654, %v1750
    %1752 = vmatmul.bf16.gmra.mxu0 %v1628
    %v1753 = vpop.f32.mrf.mxu0
    %v1754 = vadd.f32 %v1654, %v1753
    %v1755 = vpop.f32.mrf.mxu0
    %v1756 = vadd.f32 %v1654, %v1755
    %1757 = vmatmul.bf16.gmra.mxu0 %v1629
    %v1758 = vpop.f32.mrf.mxu0
    %v1759 = vadd.f32 %v1654, %v1758
    %v1760 = vpop.f32.mrf.mxu0
    %v1761 = vadd.f32 %v1654, %v1760
    %1762 = vmatmul.bf16.gmra.mxu0 %v1630
    %v1763 = vpop.f32.mrf.mxu0
    %v1764 = vadd.f32 %v1654, %v1763
    %v1765 = vpop.f32.mrf.mxu0
    %v1766 = vadd.f32 %v1654, %v1765
    %1767 = vmatmul.bf16.gmra.mxu0 %v1631
    %v1768 = vpop.f32.mrf.mxu0
    %v1769 = vadd.f32 %v1654, %v1768
    %v1770 = vpop.f32.mrf.mxu0
    %v1771 = vadd.f32 %v1654, %v1770
    %1772 = vmatmul.bf16.gmra.mxu0 %v1632
    %v1773 = vpop.f32.mrf.mxu0
    %v1774 = vadd.f32 %v1654, %v1773
    %v1775 = vpop.f32.mrf.mxu0
    %v1776 = vadd.f32 %v1654, %v1775
    %1777 = vmatmul.bf16.gmra.mxu0 %v1633
    %v1778 = vpop.f32.mrf.mxu0
    %v1779 = vadd.f32 %v1654, %v1778
    %v1780 = vpop.f32.mrf.mxu0
    %v1781 = vadd.f32 %v1654, %v1780
    %1782 = vmatmul.bf16.gmra.mxu0 %v1634
    %v1783 = vpop.f32.mrf.mxu0
    %v1784 = vadd.f32 %v1654, %v1783
    %v1785 = vpop.f32.mrf.mxu0
    %v1786 = vadd.f32 %v1654, %v1785
    %1787 = vmatmul.bf16.gmra.mxu0 %v1635
    %v1788 = vpop.f32.mrf.mxu0
    %v1789 = vadd.f32 %v1654, %v1788
    %v1790 = vpop.f32.mrf.mxu0
    %v1791 = vadd.f32 %v1654, %v1790
    %1792 = vdwg.mxu0
    %v1793 = vmul.f32 %v1714, 0.5
    %v1794 = vmul.f32 %v1716, 0.5
    %v1795 = vmul.f32 %v1719, 0.5
    %v1796 = vmul.f32 %v1721, 0.5
    %v1797 = vmul.f32 %v1724, 0.5
    %v1798 = vmul.f32 %v1726, 0.5
    %v1799 = vmul.f32 %v1729, 0.5
    %v1800 = vmul.f32 %v1731, 0.5
    %v1801 = vmul.f32 %v1734, 0.5
    %v1802 = vmul.f32 %v1736, 0.5
    %v1803 = vmul.f32 %v1739, 0.5
    %v1804 = vmul.f32 %v1741, 0.5
    %v1805 = vmul.f32 %v1744, 0.5
    %v1806 = vmul.f32 %v1746, 0.5
    %v1807 = vmul.f32 %v1749, 0.5
    %v1808 = vmul.f32 %v1751, 0.5
    %v1809 = vmul.f32 %v1754, 0.5
    %v1810 = vmul.f32 %v1756, 0.5
    %v1811 = vmul.f32 %v1759, 0.5
    %v1812 = vmul.f32 %v1761, 0.5
    %v1813 = vmul.f32 %v1764, 0.5
    %v1814 = vmul.f32 %v1766, 0.5
    %v1815 = vmul.f32 %v1769, 0.5
    %v1816 = vmul.f32 %v1771, 0.5
    %v1817 = vmul.f32 %v1774, 0.5
    %v1818 = vmul.f32 %v1776, 0.5
    %v1819 = vmul.f32 %v1779, 0.5
    %v1820 = vmul.f32 %v1781, 0.5
    %v1821 = vmul.f32 %v1784, 0.5
    %v1822 = vmul.f32 %v1786, 0.5
    %v1823 = vmul.f32 %v1789, 0.5
    %v1824 = vmul.f32 %v1791, 0.5
    %v1825 = vtanh.pop %v1793
    %v1826 = vtanh.pop %v1794
    %v1827 = vtanh.pop %v1795
    %v1828 = vtanh.pop %v1796
    %v1829 = vtanh.pop %v1797
    %v1830 = vtanh.pop %v1798
    %v1831 = vtanh.pop %v1799
    %v1832 = vtanh.pop %v1800
    %v1833 = vtanh.pop %v1801
    %v1834 = vtanh.pop %v1802
    %v1835 = vtanh.pop %v1803
    %v1836 = vtanh.pop %v1804
    %v1837 = vtanh.pop %v1805
    %v1838 = vtanh.pop %v1806
    %v1839 = vtanh.pop %v1807
    %v1840 = vtanh.pop %v1808
    %v1841 = vtanh.pop %v1809
    %v1842 = vtanh.pop %v1810
    %v1843 = vtanh.pop %v1811
    %v1844 = vtanh.pop %v1812
    %v1845 = vtanh.pop %v1813
    %v1846 = vtanh.pop %v1814
    %v1847 = vtanh.pop %v1815
    %v1848 = vtanh.pop %v1816
    %v1849 = vtanh.pop %v1817
    %v1850 = vtanh.pop %v1818
    %v1851 = vtanh.pop %v1819
    %v1852 = vtanh.pop %v1820
    %v1853 = vtanh.pop %v1821
    %v1854 = vtanh.pop %v1822
    %v1855 = vtanh.pop %v1823
    %v1856 = vtanh.pop %v1824
    %v1857 = vadd.f32 %v1825, 1.0
    %v1858 = vadd.f32 %v1826, 1.0
    %v1859 = vadd.f32 %v1827, 1.0
    %v1860 = vadd.f32 %v1828, 1.0
    %v1861 = vadd.f32 %v1829, 1.0
    %v1862 = vadd.f32 %v1830, 1.0
    %v1863 = vadd.f32 %v1831, 1.0
    %v1864 = vadd.f32 %v1832, 1.0
    %v1865 = vadd.f32 %v1833, 1.0
    %v1866 = vadd.f32 %v1834, 1.0
    %v1867 = vadd.f32 %v1835, 1.0
    %v1868 = vadd.f32 %v1836, 1.0
    %v1869 = vadd.f32 %v1837, 1.0
    %v1870 = vadd.f32 %v1838, 1.0
    %v1871 = vadd.f32 %v1839, 1.0
    %v1872 = vadd.f32 %v1840, 1.0
    %v1873 = vadd.f32 %v1841, 1.0
    %v1874 = vadd.f32 %v1842, 1.0
    %v1875 = vadd.f32 %v1843, 1.0
    %v1876 = vadd.f32 %v1844, 1.0
    %v1877 = vadd.f32 %v1845, 1.0
    %v1878 = vadd.f32 %v1846, 1.0
    %v1879 = vadd.f32 %v1847, 1.0
    %v1880 = vadd.f32 %v1848, 1.0
    %v1881 = vadd.f32 %v1849, 1.0
    %v1882 = vadd.f32 %v1850, 1.0
    %v1883 = vadd.f32 %v1851, 1.0
    %v1884 = vadd.f32 %v1852, 1.0
    %v1885 = vadd.f32 %v1853, 1.0
    %v1886 = vadd.f32 %v1854, 1.0
    %v1887 = vadd.f32 %v1855, 1.0
    %v1888 = vadd.f32 %v1856, 1.0
    %v1889 = vmul.f32 %v1857, 0.5
    %v1890 = vmul.f32 %v1858, 0.5
    %v1891 = vmul.f32 %v1859, 0.5
    %v1892 = vmul.f32 %v1860, 0.5
    %v1893 = vmul.f32 %v1861, 0.5
    %v1894 = vmul.f32 %v1862, 0.5
    %v1895 = vmul.f32 %v1863, 0.5
    %v1896 = vmul.f32 %v1864, 0.5
    %v1897 = vmul.f32 %v1865, 0.5
    %v1898 = vmul.f32 %v1866, 0.5
    %v1899 = vmul.f32 %v1867, 0.5
    %v1900 = vmul.f32 %v1868, 0.5
    %v1901 = vmul.f32 %v1869, 0.5
    %v1902 = vmul.f32 %v1870, 0.5
    %v1903 = vmul.f32 %v1871, 0.5
    %v1904 = vmul.f32 %v1872, 0.5
    %v1905 = vmul.f32 %v1873, 0.5
    %v1906 = vmul.f32 %v1874, 0.5
    %v1907 = vmul.f32 %v1875, 0.5
    %v1908 = vmul.f32 %v1876, 0.5
    %v1909 = vmul.f32 %v1877, 0.5
    %v1910 = vmul.f32 %v1878, 0.5
    %v1911 = vmul.f32 %v1879, 0.5
    %v1912 = vmul.f32 %v1880, 0.5
    %v1913 = vmul.f32 %v1881, 0.5
    %v1914 = vmul.f32 %v1882, 0.5
    %v1915 = vmul.f32 %v1883, 0.5
    %v1916 = vmul.f32 %v1884, 0.5
    %v1917 = vmul.f32 %v1885, 0.5
    %v1918 = vmul.f32 %v1886, 0.5
    %v1919 = vmul.f32 %v1887, 0.5
    %v1920 = vmul.f32 %v1888, 0.5
    %v1921 = vmul.f32 %v1714, %v1889
    %v1922 = vmul.f32 %v1716, %v1890
    %v1923 = vmul.f32 %v1719, %v1891
    %v1924 = vmul.f32 %v1721, %v1892
    %v1925 = vmul.f32 %v1724, %v1893
    %v1926 = vmul.f32 %v1726, %v1894
    %v1927 = vmul.f32 %v1729, %v1895
    %v1928 = vmul.f32 %v1731, %v1896
    %v1929 = vmul.f32 %v1734, %v1897
    %v1930 = vmul.f32 %v1736, %v1898
    %v1931 = vmul.f32 %v1739, %v1899
    %v1932 = vmul.f32 %v1741, %v1900
    %v1933 = vmul.f32 %v1744, %v1901
    %v1934 = vmul.f32 %v1746, %v1902
    %v1935 = vmul.f32 %v1749, %v1903
    %v1936 = vmul.f32 %v1751, %v1904
    %v1937 = vmul.f32 %v1754, %v1905
    %v1938 = vmul.f32 %v1756, %v1906
    %v1939 = vmul.f32 %v1759, %v1907
    %v1940 = vmul.f32 %v1761, %v1908
    %v1941 = vmul.f32 %v1764, %v1909
    %v1942 = vmul.f32 %v1766, %v1910
    %v1943 = vmul.f32 %v1769, %v1911
    %v1944 = vmul.f32 %v1771, %v1912
    %v1945 = vmul.f32 %v1774, %v1913
    %v1946 = vmul.f32 %v1776, %v1914
    %v1947 = vmul.f32 %v1779, %v1915
    %v1948 = vmul.f32 %v1781, %v1916
    %v1949 = vmul.f32 %v1784, %v1917
    %v1950 = vmul.f32 %v1786, %v1918
    %v1951 = vmul.f32 %v1789, %v1919
    %v1952 = vmul.f32 %v1791, %v1920
    %v1953 = vpack.c.bf16 %v1922, %v1921
    %v1954 = vpack.c.bf16 %v1924, %v1923
    %v1955 = vpack.c.bf16 %v1926, %v1925
    %v1956 = vpack.c.bf16 %v1928, %v1927
    %v1957 = vpack.c.bf16 %v1930, %v1929
    %v1958 = vpack.c.bf16 %v1932, %v1931
    %v1959 = vpack.c.bf16 %v1934, %v1933
    %v1960 = vpack.c.bf16 %v1936, %v1935
    %v1961 = vpack.c.bf16 %v1938, %v1937
    %v1962 = vpack.c.bf16 %v1940, %v1939
    %v1963 = vpack.c.bf16 %v1942, %v1941
    %v1964 = vpack.c.bf16 %v1944, %v1943
    %v1965 = vpack.c.bf16 %v1946, %v1945
    %v1966 = vpack.c.bf16 %v1948, %v1947
    %v1967 = vpack.c.bf16 %v1950, %v1949
    %v1968 = vpack.c.bf16 %v1952, %v1951
    %v1969 = vld [vmem:[#allocation13] sm:$0xf]
    %v1970 = vld [vmem:[#allocation13 + $0x4] sm:$0xf]
    %v1971 = vld [vmem:[#allocation13 + $0x8] sm:$0xf]
    %v1972 = vld [vmem:[#allocation13 + $0xc] sm:$0xf]
    %v1973 = vld [vmem:[#allocation13 + $0x10] sm:$0xf]
    %v1974 = vld [vmem:[#allocation13 + $0x14] sm:$0xf]
    %v1975 = vld [vmem:[#allocation13 + $0x18] sm:$0xf]
    %v1976 = vld [vmem:[#allocation13 + $0x1c] sm:$0xf]
    %v1977 = vld [vmem:[#allocation13 + $0x20] sm:$0xf]
    %v1978 = vld [vmem:[#allocation13 + $0x24] sm:$0xf]
    %v1979 = vld [vmem:[#allocation13 + $0x28] sm:$0xf]
    %v1980 = vld [vmem:[#allocation13 + $0x2c] sm:$0xf]
    %v1981 = vld [vmem:[#allocation13 + $0x30] sm:$0xf]
    %v1982 = vld [vmem:[#allocation13 + $0x34] sm:$0xf]
    %v1983 = vld [vmem:[#allocation13 + $0x38] sm:$0xf]
    %v1984 = vld [vmem:[#allocation13 + $0x3c] sm:$0xf]
    %v1985 = vld [vmem:[%s12] sm:$0x1]
    %v1987 = vperm.slane %v1985, 0
    %v2005 = vunpack.c.l.b16 %v1969
    %v2006 = vunpack.c.l.b16 %v1970
    %v2007 = vunpack.c.l.b16 %v1971
    %v2008 = vunpack.c.l.b16 %v1972
    %v2009 = vunpack.c.l.b16 %v1973
    %v2010 = vunpack.c.l.b16 %v1974
    %v2011 = vunpack.c.l.b16 %v1975
    %v2012 = vunpack.c.l.b16 %v1976
    %v2013 = vunpack.c.l.b16 %v1977
    %v2014 = vunpack.c.l.b16 %v1978
    %v2015 = vunpack.c.l.b16 %v1979
    %v2016 = vunpack.c.l.b16 %v1980
    %v2017 = vunpack.c.l.b16 %v1981
    %v2018 = vunpack.c.l.b16 %v1982
    %v2019 = vunpack.c.l.b16 %v1983
    %v2020 = vunpack.c.l.b16 %v1984
    %v2021 = vpack.c.b16 %v2006, %v2005
    %v2022 = vpack.c.b16 %v2008, %v2007
    %v2023 = vpack.c.b16 %v2010, %v2009
    %v2024 = vpack.c.b16 %v2012, %v2011
    %v2025 = vpack.c.b16 %v2014, %v2013
    %v2026 = vpack.c.b16 %v2016, %v2015
    %v2027 = vpack.c.b16 %v2018, %v2017
    %v2028 = vpack.c.b16 %v2020, %v2019
    %2037 = vmatpush.bf16.msra.mxu0 %v2028
    %2038 = vmatpush.bf16.msra.mxu0 %v2027
    %2039 = vmatpush.bf16.msra.mxu0 %v2026
    %2040 = vmatpush.bf16.msra.mxu0 %v2025
    %2041 = vmatpush.bf16.msra.mxu0 %v2024
    %2042 = vmatpush.bf16.msra.mxu0 %v2023
    %2043 = vmatpush.bf16.msra.mxu0 %v2022
    %2044 = vmatpush.bf16.msra.mxu0 %v2021
    %2045 = vmatmul.bf16.gmra.mxu0 %v1953
    %v2046 = vpop.f32.mrf.mxu0
    %v2047 = vadd.f32 %v1987, %v2046
    %v2048 = vpop.f32.mrf.mxu0
    %v2049 = vadd.f32 %v1987, %v2048
    %2050 = vmatmul.bf16.gmra.mxu0 %v1954
    %v2051 = vpop.f32.mrf.mxu0
    %v2052 = vadd.f32 %v1987, %v2051
    %v2053 = vpop.f32.mrf.mxu0
    %v2054 = vadd.f32 %v1987, %v2053
    %2055 = vmatmul.bf16.gmra.mxu0 %v1955
    %v2056 = vpop.f32.mrf.mxu0
    %v2057 = vadd.f32 %v1987, %v2056
    %v2058 = vpop.f32.mrf.mxu0
    %v2059 = vadd.f32 %v1987, %v2058
    %2060 = vmatmul.bf16.gmra.mxu0 %v1956
    %v2061 = vpop.f32.mrf.mxu0
    %v2062 = vadd.f32 %v1987, %v2061
    %v2063 = vpop.f32.mrf.mxu0
    %v2064 = vadd.f32 %v1987, %v2063
    %2065 = vmatmul.bf16.gmra.mxu0 %v1957
    %v2066 = vpop.f32.mrf.mxu0
    %v2067 = vadd.f32 %v1987, %v2066
    %v2068 = vpop.f32.mrf.mxu0
    %v2069 = vadd.f32 %v1987, %v2068
    %2070 = vmatmul.bf16.gmra.mxu0 %v1958
    %v2071 = vpop.f32.mrf.mxu0
    %v2072 = vadd.f32 %v1987, %v2071
    %v2073 = vpop.f32.mrf.mxu0
    %v2074 = vadd.f32 %v1987, %v2073
    %2075 = vmatmul.bf16.gmra.mxu0 %v1959
    %v2076 = vpop.f32.mrf.mxu0
    %v2077 = vadd.f32 %v1987, %v2076
    %v2078 = vpop.f32.mrf.mxu0
    %v2079 = vadd.f32 %v1987, %v2078
    %2080 = vmatmul.bf16.gmra.mxu0 %v1960
    %v2081 = vpop.f32.mrf.mxu0
    %v2082 = vadd.f32 %v1987, %v2081
    %v2083 = vpop.f32.mrf.mxu0
    %v2084 = vadd.f32 %v1987, %v2083
    %2085 = vmatmul.bf16.gmra.mxu0 %v1961
    %v2086 = vpop.f32.mrf.mxu0
    %v2087 = vadd.f32 %v1987, %v2086
    %v2088 = vpop.f32.mrf.mxu0
    %v2089 = vadd.f32 %v1987, %v2088
    %2090 = vmatmul.bf16.gmra.mxu0 %v1962
    %v2091 = vpop.f32.mrf.mxu0
    %v2092 = vadd.f32 %v1987, %v2091
    %v2093 = vpop.f32.mrf.mxu0
    %v2094 = vadd.f32 %v1987, %v2093
    %2095 = vmatmul.bf16.gmra.mxu0 %v1963
    %v2096 = vpop.f32.mrf.mxu0
    %v2097 = vadd.f32 %v1987, %v2096
    %v2098 = vpop.f32.mrf.mxu0
    %v2099 = vadd.f32 %v1987, %v2098
    %2100 = vmatmul.bf16.gmra.mxu0 %v1964
    %v2101 = vpop.f32.mrf.mxu0
    %v2102 = vadd.f32 %v1987, %v2101
    %v2103 = vpop.f32.mrf.mxu0
    %v2104 = vadd.f32 %v1987, %v2103
    %2105 = vmatmul.bf16.gmra.mxu0 %v1965
    %v2106 = vpop.f32.mrf.mxu0
    %v2107 = vadd.f32 %v1987, %v2106
    %v2108 = vpop.f32.mrf.mxu0
    %v2109 = vadd.f32 %v1987, %v2108
    %2110 = vmatmul.bf16.gmra.mxu0 %v1966
    %v2111 = vpop.f32.mrf.mxu0
    %v2112 = vadd.f32 %v1987, %v2111
    %v2113 = vpop.f32.mrf.mxu0
    %v2114 = vadd.f32 %v1987, %v2113
    %2115 = vmatmul.bf16.gmra.mxu0 %v1967
    %v2116 = vpop.f32.mrf.mxu0
    %v2117 = vadd.f32 %v1987, %v2116
    %v2118 = vpop.f32.mrf.mxu0
    %v2119 = vadd.f32 %v1987, %v2118
    %2120 = vmatmul.bf16.gmra.mxu0 %v1968
    %v2121 = vpop.f32.mrf.mxu0
    %v2122 = vadd.f32 %v1987, %v2121
    %v2123 = vpop.f32.mrf.mxu0
    %v2124 = vadd.f32 %v1987, %v2123
    %2125 = vdwg.mxu0
    %v2126 = vmul.f32 %v2047, 0.5
    %v2127 = vmul.f32 %v2049, 0.5
    %v2128 = vmul.f32 %v2052, 0.5
    %v2129 = vmul.f32 %v2054, 0.5
    %v2130 = vmul.f32 %v2057, 0.5
    %v2131 = vmul.f32 %v2059, 0.5
    %v2132 = vmul.f32 %v2062, 0.5
    %v2133 = vmul.f32 %v2064, 0.5
    %v2134 = vmul.f32 %v2067, 0.5
    %v2135 = vmul.f32 %v2069, 0.5
    %v2136 = vmul.f32 %v2072, 0.5
    %v2137 = vmul.f32 %v2074, 0.5
    %v2138 = vmul.f32 %v2077, 0.5
    %v2139 = vmul.f32 %v2079, 0.5
    %v2140 = vmul.f32 %v2082, 0.5
    %v2141 = vmul.f32 %v2084, 0.5
    %v2142 = vmul.f32 %v2087, 0.5
    %v2143 = vmul.f32 %v2089, 0.5
    %v2144 = vmul.f32 %v2092, 0.5
    %v2145 = vmul.f32 %v2094, 0.5
    %v2146 = vmul.f32 %v2097, 0.5
    %v2147 = vmul.f32 %v2099, 0.5
    %v2148 = vmul.f32 %v2102, 0.5
    %v2149 = vmul.f32 %v2104, 0.5
    %v2150 = vmul.f32 %v2107, 0.5
    %v2151 = vmul.f32 %v2109, 0.5
    %v2152 = vmul.f32 %v2112, 0.5
    %v2153 = vmul.f32 %v2114, 0.5
    %v2154 = vmul.f32 %v2117, 0.5
    %v2155 = vmul.f32 %v2119, 0.5
    %v2156 = vmul.f32 %v2122, 0.5
    %v2157 = vmul.f32 %v2124, 0.5
    %v2158 = vtanh.pop %v2126
    %v2159 = vtanh.pop %v2127
    %v2160 = vtanh.pop %v2128
    %v2161 = vtanh.pop %v2129
    %v2162 = vtanh.pop %v2130
    %v2163 = vtanh.pop %v2131
    %v2164 = vtanh.pop %v2132
    %v2165 = vtanh.pop %v2133
    %v2166 = vtanh.pop %v2134
    %v2167 = vtanh.pop %v2135
    %v2168 = vtanh.pop %v2136
    %v2169 = vtanh.pop %v2137
    %v2170 = vtanh.pop %v2138
    %v2171 = vtanh.pop %v2139
    %v2172 = vtanh.pop %v2140
    %v2173 = vtanh.pop %v2141
    %v2174 = vtanh.pop %v2142
    %v2175 = vtanh.pop %v2143
    %v2176 = vtanh.pop %v2144
    %v2177 = vtanh.pop %v2145
    %v2178 = vtanh.pop %v2146
    %v2179 = vtanh.pop %v2147
    %v2180 = vtanh.pop %v2148
    %v2181 = vtanh.pop %v2149
    %v2182 = vtanh.pop %v2150
    %v2183 = vtanh.pop %v2151
    %v2184 = vtanh.pop %v2152
    %v2185 = vtanh.pop %v2153
    %v2186 = vtanh.pop %v2154
    %v2187 = vtanh.pop %v2155
    %v2188 = vtanh.pop %v2156
    %v2189 = vtanh.pop %v2157
    %v2190 = vadd.f32 %v2158, 1.0
    %v2191 = vadd.f32 %v2159, 1.0
    %v2192 = vadd.f32 %v2160, 1.0
    %v2193 = vadd.f32 %v2161, 1.0
    %v2194 = vadd.f32 %v2162, 1.0
    %v2195 = vadd.f32 %v2163, 1.0
    %v2196 = vadd.f32 %v2164, 1.0
    %v2197 = vadd.f32 %v2165, 1.0
    %v2198 = vadd.f32 %v2166, 1.0
    %v2199 = vadd.f32 %v2167, 1.0
    %v2200 = vadd.f32 %v2168, 1.0
    %v2201 = vadd.f32 %v2169, 1.0
    %v2202 = vadd.f32 %v2170, 1.0
    %v2203 = vadd.f32 %v2171, 1.0
    %v2204 = vadd.f32 %v2172, 1.0
    %v2205 = vadd.f32 %v2173, 1.0
    %v2206 = vadd.f32 %v2174, 1.0
    %v2207 = vadd.f32 %v2175, 1.0
    %v2208 = vadd.f32 %v2176, 1.0
    %v2209 = vadd.f32 %v2177, 1.0
    %v2210 = vadd.f32 %v2178, 1.0
    %v2211 = vadd.f32 %v2179, 1.0
    %v2212 = vadd.f32 %v2180, 1.0
    %v2213 = vadd.f32 %v2181, 1.0
    %v2214 = vadd.f32 %v2182, 1.0
    %v2215 = vadd.f32 %v2183, 1.0
    %v2216 = vadd.f32 %v2184, 1.0
    %v2217 = vadd.f32 %v2185, 1.0
    %v2218 = vadd.f32 %v2186, 1.0
    %v2219 = vadd.f32 %v2187, 1.0
    %v2220 = vadd.f32 %v2188, 1.0
    %v2221 = vadd.f32 %v2189, 1.0
    %v2222 = vmul.f32 %v2190, 0.5
    %v2223 = vmul.f32 %v2191, 0.5
    %v2224 = vmul.f32 %v2192, 0.5
    %v2225 = vmul.f32 %v2193, 0.5
    %v2226 = vmul.f32 %v2194, 0.5
    %v2227 = vmul.f32 %v2195, 0.5
    %v2228 = vmul.f32 %v2196, 0.5
    %v2229 = vmul.f32 %v2197, 0.5
    %v2230 = vmul.f32 %v2198, 0.5
    %v2231 = vmul.f32 %v2199, 0.5
    %v2232 = vmul.f32 %v2200, 0.5
    %v2233 = vmul.f32 %v2201, 0.5
    %v2234 = vmul.f32 %v2202, 0.5
    %v2235 = vmul.f32 %v2203, 0.5
    %v2236 = vmul.f32 %v2204, 0.5
    %v2237 = vmul.f32 %v2205, 0.5
    %v2238 = vmul.f32 %v2206, 0.5
    %v2239 = vmul.f32 %v2207, 0.5
    %v2240 = vmul.f32 %v2208, 0.5
    %v2241 = vmul.f32 %v2209, 0.5
    %v2242 = vmul.f32 %v2210, 0.5
    %v2243 = vmul.f32 %v2211, 0.5
    %v2244 = vmul.f32 %v2212, 0.5
    %v2245 = vmul.f32 %v2213, 0.5
    %v2246 = vmul.f32 %v2214, 0.5
    %v2247 = vmul.f32 %v2215, 0.5
    %v2248 = vmul.f32 %v2216, 0.5
    %v2249 = vmul.f32 %v2217, 0.5
    %v2250 = vmul.f32 %v2218, 0.5
    %v2251 = vmul.f32 %v2219, 0.5
    %v2252 = vmul.f32 %v2220, 0.5
    %v2253 = vmul.f32 %v2221, 0.5
    %v2254 = vmul.f32 %v2047, %v2222
    %v2255 = vmul.f32 %v2049, %v2223
    %v2256 = vmul.f32 %v2052, %v2224
    %v2257 = vmul.f32 %v2054, %v2225
    %v2258 = vmul.f32 %v2057, %v2226
    %v2259 = vmul.f32 %v2059, %v2227
    %v2260 = vmul.f32 %v2062, %v2228
    %v2261 = vmul.f32 %v2064, %v2229
    %v2262 = vmul.f32 %v2067, %v2230
    %v2263 = vmul.f32 %v2069, %v2231
    %v2264 = vmul.f32 %v2072, %v2232
    %v2265 = vmul.f32 %v2074, %v2233
    %v2266 = vmul.f32 %v2077, %v2234
    %v2267 = vmul.f32 %v2079, %v2235
    %v2268 = vmul.f32 %v2082, %v2236
    %v2269 = vmul.f32 %v2084, %v2237
    %v2270 = vmul.f32 %v2087, %v2238
    %v2271 = vmul.f32 %v2089, %v2239
    %v2272 = vmul.f32 %v2092, %v2240
    %v2273 = vmul.f32 %v2094, %v2241
    %v2274 = vmul.f32 %v2097, %v2242
    %v2275 = vmul.f32 %v2099, %v2243
    %v2276 = vmul.f32 %v2102, %v2244
    %v2277 = vmul.f32 %v2104, %v2245
    %v2278 = vmul.f32 %v2107, %v2246
    %v2279 = vmul.f32 %v2109, %v2247
    %v2280 = vmul.f32 %v2112, %v2248
    %v2281 = vmul.f32 %v2114, %v2249
    %v2282 = vmul.f32 %v2117, %v2250
    %v2283 = vmul.f32 %v2119, %v2251
    %v2284 = vmul.f32 %v2122, %v2252
    %v2285 = vmul.f32 %v2124, %v2253
    %v2286 = vpack.c.bf16 %v2255, %v2254
    %v2287 = vpack.c.bf16 %v2257, %v2256
    %v2288 = vpack.c.bf16 %v2259, %v2258
    %v2289 = vpack.c.bf16 %v2261, %v2260
    %v2290 = vpack.c.bf16 %v2263, %v2262
    %v2291 = vpack.c.bf16 %v2265, %v2264
    %v2292 = vpack.c.bf16 %v2267, %v2266
    %v2293 = vpack.c.bf16 %v2269, %v2268
    %v2294 = vpack.c.bf16 %v2271, %v2270
    %v2295 = vpack.c.bf16 %v2273, %v2272
    %v2296 = vpack.c.bf16 %v2275, %v2274
    %v2297 = vpack.c.bf16 %v2277, %v2276
    %v2298 = vpack.c.bf16 %v2279, %v2278
    %v2299 = vpack.c.bf16 %v2281, %v2280
    %v2300 = vpack.c.bf16 %v2283, %v2282
    %v2301 = vpack.c.bf16 %v2285, %v2284
    %v2302 = vld [vmem:[#allocation14] sm:$0xf]
    %v2303 = vld [vmem:[#allocation14 + $0x4] sm:$0xf]
    %v2304 = vld [vmem:[#allocation14 + $0x8] sm:$0xf]
    %v2305 = vld [vmem:[#allocation14 + $0xc] sm:$0xf]
    %v2306 = vld [vmem:[#allocation14 + $0x10] sm:$0xf]
    %v2307 = vld [vmem:[#allocation14 + $0x14] sm:$0xf]
    %v2308 = vld [vmem:[#allocation14 + $0x18] sm:$0xf]
    %v2309 = vld [vmem:[#allocation14 + $0x1c] sm:$0xf]
    %v2310 = vld [vmem:[#allocation14 + $0x20] sm:$0xf]
    %v2311 = vld [vmem:[#allocation14 + $0x24] sm:$0xf]
    %v2312 = vld [vmem:[#allocation14 + $0x28] sm:$0xf]
    %v2313 = vld [vmem:[#allocation14 + $0x2c] sm:$0xf]
    %v2314 = vld [vmem:[#allocation14 + $0x30] sm:$0xf]
    %v2315 = vld [vmem:[#allocation14 + $0x34] sm:$0xf]
    %v2316 = vld [vmem:[#allocation14 + $0x38] sm:$0xf]
    %v2317 = vld [vmem:[#allocation14 + $0x3c] sm:$0xf]
    %v2318 = vld [vmem:[%s14] sm:$0x1]
    %v2320 = vperm.slane %v2318, 0
    %v2338 = vunpack.c.l.b16 %v2302
    %v2339 = vunpack.c.l.b16 %v2303
    %v2340 = vunpack.c.l.b16 %v2304
    %v2341 = vunpack.c.l.b16 %v2305
    %v2342 = vunpack.c.l.b16 %v2306
    %v2343 = vunpack.c.l.b16 %v2307
    %v2344 = vunpack.c.l.b16 %v2308
    %v2345 = vunpack.c.l.b16 %v2309
    %v2346 = vunpack.c.l.b16 %v2310
    %v2347 = vunpack.c.l.b16 %v2311
    %v2348 = vunpack.c.l.b16 %v2312
    %v2349 = vunpack.c.l.b16 %v2313
    %v2350 = vunpack.c.l.b16 %v2314
    %v2351 = vunpack.c.l.b16 %v2315
    %v2352 = vunpack.c.l.b16 %v2316
    %v2353 = vunpack.c.l.b16 %v2317
    %v2354 = vpack.c.b16 %v2339, %v2338
    %v2355 = vpack.c.b16 %v2341, %v2340
    %v2356 = vpack.c.b16 %v2343, %v2342
    %v2357 = vpack.c.b16 %v2345, %v2344
    %v2358 = vpack.c.b16 %v2347, %v2346
    %v2359 = vpack.c.b16 %v2349, %v2348
    %v2360 = vpack.c.b16 %v2351, %v2350
    %v2361 = vpack.c.b16 %v2353, %v2352
    %2370 = vmatpush.bf16.msra.mxu0 %v2361
    %2371 = vmatpush.bf16.msra.mxu0 %v2360
    %2372 = vmatpush.bf16.msra.mxu0 %v2359
    %2373 = vmatpush.bf16.msra.mxu0 %v2358
    %2374 = vmatpush.bf16.msra.mxu0 %v2357
    %2375 = vmatpush.bf16.msra.mxu0 %v2356
    %2376 = vmatpush.bf16.msra.mxu0 %v2355
    %2377 = vmatpush.bf16.msra.mxu0 %v2354
    %2378 = vmatmul.bf16.gmra.mxu0 %v2286
    %v2379 = vpop.f32.mrf.mxu0
    %v2380 = vadd.f32 %v2320, %v2379
    %v2381 = vpop.f32.mrf.mxu0
    %v2382 = vadd.f32 %v2320, %v2381
    %2383 = vmatmul.bf16.gmra.mxu0 %v2287
    %v2384 = vpop.f32.mrf.mxu0
    %v2385 = vadd.f32 %v2320, %v2384
    %v2386 = vpop.f32.mrf.mxu0
    %v2387 = vadd.f32 %v2320, %v2386
    %2388 = vmatmul.bf16.gmra.mxu0 %v2288
    %v2389 = vpop.f32.mrf.mxu0
    %v2390 = vadd.f32 %v2320, %v2389
    %v2391 = vpop.f32.mrf.mxu0
    %v2392 = vadd.f32 %v2320, %v2391
    %2393 = vmatmul.bf16.gmra.mxu0 %v2289
    %v2394 = vpop.f32.mrf.mxu0
    %v2395 = vadd.f32 %v2320, %v2394
    %v2396 = vpop.f32.mrf.mxu0
    %v2397 = vadd.f32 %v2320, %v2396
    %2398 = vmatmul.bf16.gmra.mxu0 %v2290
    %v2399 = vpop.f32.mrf.mxu0
    %v2400 = vadd.f32 %v2320, %v2399
    %v2401 = vpop.f32.mrf.mxu0
    %v2402 = vadd.f32 %v2320, %v2401
    %2403 = vmatmul.bf16.gmra.mxu0 %v2291
    %v2404 = vpop.f32.mrf.mxu0
    %v2405 = vadd.f32 %v2320, %v2404
    %v2406 = vpop.f32.mrf.mxu0
    %v2407 = vadd.f32 %v2320, %v2406
    %2408 = vmatmul.bf16.gmra.mxu0 %v2292
    %v2409 = vpop.f32.mrf.mxu0
    %v2410 = vadd.f32 %v2320, %v2409
    %v2411 = vpop.f32.mrf.mxu0
    %v2412 = vadd.f32 %v2320, %v2411
    %2413 = vmatmul.bf16.gmra.mxu0 %v2293
    %v2414 = vpop.f32.mrf.mxu0
    %v2415 = vadd.f32 %v2320, %v2414
    %v2416 = vpop.f32.mrf.mxu0
    %v2417 = vadd.f32 %v2320, %v2416
    %2418 = vmatmul.bf16.gmra.mxu0 %v2294
    %v2419 = vpop.f32.mrf.mxu0
    %v2420 = vadd.f32 %v2320, %v2419
    %v2421 = vpop.f32.mrf.mxu0
    %v2422 = vadd.f32 %v2320, %v2421
    %2423 = vmatmul.bf16.gmra.mxu0 %v2295
    %v2424 = vpop.f32.mrf.mxu0
    %v2425 = vadd.f32 %v2320, %v2424
    %v2426 = vpop.f32.mrf.mxu0
    %v2427 = vadd.f32 %v2320, %v2426
    %2428 = vmatmul.bf16.gmra.mxu0 %v2296
    %v2429 = vpop.f32.mrf.mxu0
    %v2430 = vadd.f32 %v2320, %v2429
    %v2431 = vpop.f32.mrf.mxu0
    %v2432 = vadd.f32 %v2320, %v2431
    %2433 = vmatmul.bf16.gmra.mxu0 %v2297
    %v2434 = vpop.f32.mrf.mxu0
    %v2435 = vadd.f32 %v2320, %v2434
    %v2436 = vpop.f32.mrf.mxu0
    %v2437 = vadd.f32 %v2320, %v2436
    %2438 = vmatmul.bf16.gmra.mxu0 %v2298
    %v2439 = vpop.f32.mrf.mxu0
    %v2440 = vadd.f32 %v2320, %v2439
    %v2441 = vpop.f32.mrf.mxu0
    %v2442 = vadd.f32 %v2320, %v2441
    %2443 = vmatmul.bf16.gmra.mxu0 %v2299
    %v2444 = vpop.f32.mrf.mxu0
    %v2445 = vadd.f32 %v2320, %v2444
    %v2446 = vpop.f32.mrf.mxu0
    %v2447 = vadd.f32 %v2320, %v2446
    %2448 = vmatmul.bf16.gmra.mxu0 %v2300
    %v2449 = vpop.f32.mrf.mxu0
    %v2450 = vadd.f32 %v2320, %v2449
    %v2451 = vpop.f32.mrf.mxu0
    %v2452 = vadd.f32 %v2320, %v2451
    %2453 = vmatmul.bf16.gmra.mxu0 %v2301
    %v2454 = vpop.f32.mrf.mxu0
    %v2455 = vadd.f32 %v2320, %v2454
    %v2456 = vpop.f32.mrf.mxu0
    %v2457 = vadd.f32 %v2320, %v2456
    %2458 = vdwg.mxu0
    %v2459 = vmul.f32 %v2380, 0.5
    %v2460 = vmul.f32 %v2382, 0.5
    %v2461 = vmul.f32 %v2385, 0.5
    %v2462 = vmul.f32 %v2387, 0.5
    %v2463 = vmul.f32 %v2390, 0.5
    %v2464 = vmul.f32 %v2392, 0.5
    %v2465 = vmul.f32 %v2395, 0.5
    %v2466 = vmul.f32 %v2397, 0.5
    %v2467 = vmul.f32 %v2400, 0.5
    %v2468 = vmul.f32 %v2402, 0.5
    %v2469 = vmul.f32 %v2405, 0.5
    %v2470 = vmul.f32 %v2407, 0.5
    %v2471 = vmul.f32 %v2410, 0.5
    %v2472 = vmul.f32 %v2412, 0.5
    %v2473 = vmul.f32 %v2415, 0.5
    %v2474 = vmul.f32 %v2417, 0.5
    %v2475 = vmul.f32 %v2420, 0.5
    %v2476 = vmul.f32 %v2422, 0.5
    %v2477 = vmul.f32 %v2425, 0.5
    %v2478 = vmul.f32 %v2427, 0.5
    %v2479 = vmul.f32 %v2430, 0.5
    %v2480 = vmul.f32 %v2432, 0.5
    %v2481 = vmul.f32 %v2435, 0.5
    %v2482 = vmul.f32 %v2437, 0.5
    %v2483 = vmul.f32 %v2440, 0.5
    %v2484 = vmul.f32 %v2442, 0.5
    %v2485 = vmul.f32 %v2445, 0.5
    %v2486 = vmul.f32 %v2447, 0.5
    %v2487 = vmul.f32 %v2450, 0.5
    %v2488 = vmul.f32 %v2452, 0.5
    %v2489 = vmul.f32 %v2455, 0.5
    %v2490 = vmul.f32 %v2457, 0.5
    %v2491 = vtanh.pop %v2459
    %v2492 = vtanh.pop %v2460
    %v2493 = vtanh.pop %v2461
    %v2494 = vtanh.pop %v2462
    %v2495 = vtanh.pop %v2463
    %v2496 = vtanh.pop %v2464
    %v2497 = vtanh.pop %v2465
    %v2498 = vtanh.pop %v2466
    %v2499 = vtanh.pop %v2467
    %v2500 = vtanh.pop %v2468
    %v2501 = vtanh.pop %v2469
    %v2502 = vtanh.pop %v2470
    %v2503 = vtanh.pop %v2471
    %v2504 = vtanh.pop %v2472
    %v2505 = vtanh.pop %v2473
    %v2506 = vtanh.pop %v2474
    %v2507 = vtanh.pop %v2475
    %v2508 = vtanh.pop %v2476
    %v2509 = vtanh.pop %v2477
    %v2510 = vtanh.pop %v2478
    %v2511 = vtanh.pop %v2479
    %v2512 = vtanh.pop %v2480
    %v2513 = vtanh.pop %v2481
    %v2514 = vtanh.pop %v2482
    %v2515 = vtanh.pop %v2483
    %v2516 = vtanh.pop %v2484
    %v2517 = vtanh.pop %v2485
    %v2518 = vtanh.pop %v2486
    %v2519 = vtanh.pop %v2487
    %v2520 = vtanh.pop %v2488
    %v2521 = vtanh.pop %v2489
    %v2522 = vtanh.pop %v2490
    %v2523 = vadd.f32 %v2491, 1.0
    %v2524 = vadd.f32 %v2492, 1.0
    %v2525 = vadd.f32 %v2493, 1.0
    %v2526 = vadd.f32 %v2494, 1.0
    %v2527 = vadd.f32 %v2495, 1.0
    %v2528 = vadd.f32 %v2496, 1.0
    %v2529 = vadd.f32 %v2497, 1.0
    %v2530 = vadd.f32 %v2498, 1.0
    %v2531 = vadd.f32 %v2499, 1.0
    %v2532 = vadd.f32 %v2500, 1.0
    %v2533 = vadd.f32 %v2501, 1.0
    %v2534 = vadd.f32 %v2502, 1.0
    %v2535 = vadd.f32 %v2503, 1.0
    %v2536 = vadd.f32 %v2504, 1.0
    %v2537 = vadd.f32 %v2505, 1.0
    %v2538 = vadd.f32 %v2506, 1.0
    %v2539 = vadd.f32 %v2507, 1.0
    %v2540 = vadd.f32 %v2508, 1.0
    %v2541 = vadd.f32 %v2509, 1.0
    %v2542 = vadd.f32 %v2510, 1.0
    %v2543 = vadd.f32 %v2511, 1.0
    %v2544 = vadd.f32 %v2512, 1.0
    %v2545 = vadd.f32 %v2513, 1.0
    %v2546 = vadd.f32 %v2514, 1.0
    %v2547 = vadd.f32 %v2515, 1.0
    %v2548 = vadd.f32 %v2516, 1.0
    %v2549 = vadd.f32 %v2517, 1.0
    %v2550 = vadd.f32 %v2518, 1.0
    %v2551 = vadd.f32 %v2519, 1.0
    %v2552 = vadd.f32 %v2520, 1.0
    %v2553 = vadd.f32 %v2521, 1.0
    %v2554 = vadd.f32 %v2522, 1.0
    %v2555 = vmul.f32 %v2523, 0.5
    %v2556 = vmul.f32 %v2524, 0.5
    %v2557 = vmul.f32 %v2525, 0.5
    %v2558 = vmul.f32 %v2526, 0.5
    %v2559 = vmul.f32 %v2527, 0.5
    %v2560 = vmul.f32 %v2528, 0.5
    %v2561 = vmul.f32 %v2529, 0.5
    %v2562 = vmul.f32 %v2530, 0.5
    %v2563 = vmul.f32 %v2531, 0.5
    %v2564 = vmul.f32 %v2532, 0.5
    %v2565 = vmul.f32 %v2533, 0.5
    %v2566 = vmul.f32 %v2534, 0.5
    %v2567 = vmul.f32 %v2535, 0.5
    %v2568 = vmul.f32 %v2536, 0.5
    %v2569 = vmul.f32 %v2537, 0.5
    %v2570 = vmul.f32 %v2538, 0.5
    %v2571 = vmul.f32 %v2539, 0.5
    %v2572 = vmul.f32 %v2540, 0.5
    %v2573 = vmul.f32 %v2541, 0.5
    %v2574 = vmul.f32 %v2542, 0.5
    %v2575 = vmul.f32 %v2543, 0.5
    %v2576 = vmul.f32 %v2544, 0.5
    %v2577 = vmul.f32 %v2545, 0.5
    %v2578 = vmul.f32 %v2546, 0.5
    %v2579 = vmul.f32 %v2547, 0.5
    %v2580 = vmul.f32 %v2548, 0.5
    %v2581 = vmul.f32 %v2549, 0.5
    %v2582 = vmul.f32 %v2550, 0.5
    %v2583 = vmul.f32 %v2551, 0.5
    %v2584 = vmul.f32 %v2552, 0.5
    %v2585 = vmul.f32 %v2553, 0.5
    %v2586 = vmul.f32 %v2554, 0.5
    %2587 = vst [vmem:[#allocation16] sm:$0xff] %v2555
    %2588 = vst [vmem:[#allocation16 + $0x8] sm:$0xff] %v2556
    %2589 = vst [vmem:[#allocation16 + $0x10] sm:$0xff] %v2557
    %2590 = vst [vmem:[#allocation16 + $0x18] sm:$0xff] %v2558
    %2591 = vst [vmem:[#allocation16 + $0x20] sm:$0xff] %v2559
    %2592 = vst [vmem:[#allocation16 + $0x28] sm:$0xff] %v2560
    %2593 = vst [vmem:[#allocation16 + $0x30] sm:$0xff] %v2561
    %2594 = vst [vmem:[#allocation16 + $0x38] sm:$0xff] %v2562
    %2595 = vst [vmem:[#allocation16 + $0x40] sm:$0xff] %v2563
    %2596 = vst [vmem:[#allocation16 + $0x48] sm:$0xff] %v2564
    %2597 = vst [vmem:[#allocation16 + $0x50] sm:$0xff] %v2565
    %2598 = vst [vmem:[#allocation16 + $0x58] sm:$0xff] %v2566
    %2599 = vst [vmem:[#allocation16 + $0x60] sm:$0xff] %v2567
    %2600 = vst [vmem:[#allocation16 + $0x68] sm:$0xff] %v2568
    %2601 = vst [vmem:[#allocation16 + $0x70] sm:$0xff] %v2569
    %2602 = vst [vmem:[#allocation16 + $0x78] sm:$0xff] %v2570
    %2603 = vst [vmem:[#allocation16 + $0x80] sm:$0xff] %v2571
    %2604 = vst [vmem:[#allocation16 + $0x88] sm:$0xff] %v2572
    %2605 = vst [vmem:[#allocation16 + $0x90] sm:$0xff] %v2573
    %2606 = vst [vmem:[#allocation16 + $0x98] sm:$0xff] %v2574
    %2607 = vst [vmem:[#allocation16 + $0xa0] sm:$0xff] %v2575
    %2608 = vst [vmem:[#allocation16 + $0xa8] sm:$0xff] %v2576
    %2609 = vst [vmem:[#allocation16 + $0xb0] sm:$0xff] %v2577
    %2610 = vst [vmem:[#allocation16 + $0xb8] sm:$0xff] %v2578
    %2611 = vst [vmem:[#allocation16 + $0xc0] sm:$0xff] %v2579
    %2612 = vst [vmem:[#allocation16 + $0xc8] sm:$0xff] %v2580
    %2613 = vst [vmem:[#allocation16 + $0xd0] sm:$0xff] %v2581
    %2614 = vst [vmem:[#allocation16 + $0xd8] sm:$0xff] %v2582
    %2615 = vst [vmem:[#allocation16 + $0xe0] sm:$0xff] %v2583
    %2616 = vst [vmem:[#allocation16 + $0xe8] sm:$0xff] %v2584
    %2617 = vst [vmem:[#allocation16 + $0xf0] sm:$0xff] %v2585
    %2618 = vst [vmem:[#allocation16 + $0xf8] sm:$0xff] %v2586
    // Predicated region
    $region94: #{tpu_custom_call.1} parent=1 // pred_check
      _
    $region95: #{tpu_custom_call.1} parent=1 // pred_check_branch
      %2620 = sbr.rel (0) target = $region97
    $region96: #{tpu_custom_call.1} parent=1 // pred_region
      %2622 = vsyncadd [#allocation4], 0
      %s2623 = sshll.u32 [#allocation16], 4
      %s2624 = int_to_ptr.vmem [resolvable:$true] %s2623
      %s2625 = sshll.u32 %s15, 4
      %s2626 = int_to_ptr.hbm [resolvable:$true] %s2625
      %2631 = dma.vmem_to_hbm [thread:$0]  %s2624, 4096, %s2626, [#allocation4], 128, 128, 8
    $region97: #{tpu_custom_call.1} parent=1 // pred_fallthru
      _
    // Predicated region
    $region98: #{tpu_custom_call.1} parent=1 // pred_check
      _
    $region99: #{tpu_custom_call.1} parent=1 // pred_check_branch
      %2633 = sbr.rel (0) target = $region101
    $region100: #{tpu_custom_call.1} parent=1 // pred_region
      %2635 = dma.done [#allocation4], 4096
    $region101: #{tpu_custom_call.1} parent=1 // pred_fallthru
      _
    %2636 = vsyncpa [#allocation3], 1
    %2637 = vsyncpa [#allocation6], 1
    %2638 = vsyncpa [#allocation9], 1
    %2639 = vsyncpa [#allocation12], 1
    %2640 = vsyncpa [#allocation15], 1
    %2641 = vsyncpa [#allocation4], 1

</llo_original>
